<compile_context>
chip_gen: v7x
topology: tpu7x:2x2x1
jax: 0.10.0
libtpu: 0.0.40
codegen_flags: <defaults>
</compile_context>

<pallas_src>
import functools

import jax
import jax.numpy as jnp
from jax.experimental import pallas as pl
from jax.experimental.pallas import tpu as pltpu


def _attn_block_kernel(xq_ref, xkv_ref, wq_ref, wkv_ref, wo_ref, bias_ref,
                       o_ref, q_s, m_s, l_s, acc_s, *, n_heads, d_head):
    kv_idx = pl.program_id(2)
    d_attn = n_heads * d_head

    @pl.when(kv_idx == 0)
    def _init():
        # Q projection (scale already folded into Wq): one MXU pass per q-tile.
        q_s[...] = jnp.dot(xq_ref[0], wq_ref[...],
                           preferred_element_type=jnp.float32
                           ).astype(jnp.bfloat16)
        m_s[...] = jnp.full(m_s.shape, -jnp.inf, dtype=m_s.dtype)
        l_s[...] = jnp.zeros(l_s.shape, dtype=l_s.dtype)
        acc_s[...] = jnp.zeros(acc_s.shape, dtype=acc_s.dtype)

    # Fused K/V projection for this kv tile: one MXU pass over x_kv.
    kv_slab = jnp.dot(xkv_ref[0], wkv_ref[...],
                      preferred_element_type=jnp.float32).astype(jnp.bfloat16)
    q_all = q_s[...]                                           # (tq, d_attn) bf16

    # Static (unrolled) loop over heads; slices are static.
    for h in range(n_heads):
        lo = h * d_head
        q_h = q_all[:, lo:lo + d_head]                         # (tq, d) bf16
        k_h = kv_slab[:, lo:lo + d_head]                       # (tk, d) bf16
        v_h = kv_slab[:, d_attn + lo:d_attn + lo + d_head]     # (tk, d) bf16

        # q @ k^T without materializing a transpose.
        s = jax.lax.dot_general(
            q_h, k_h, dimension_numbers=(((1,), (1,)), ((), ())),
            preferred_element_type=jnp.float32)                # (tq, tk) f32

        m_prev = m_s[h]                                        # (tq, 1)
        m_new = jnp.maximum(m_prev, jnp.max(s, axis=-1, keepdims=True))
        alpha = jnp.exp(m_prev - m_new)
        p = jnp.exp(s - m_new)                                 # f32
        l_s[h] = alpha * l_s[h] + jnp.sum(p, axis=-1, keepdims=True)
        acc_s[h] = alpha * acc_s[h] + jnp.dot(
            p.astype(jnp.bfloat16), v_h, preferred_element_type=jnp.float32)
        m_s[h] = m_new

    @pl.when(kv_idx == pl.num_programs(2) - 1)
    def _finalize():
        out = jnp.zeros(o_ref.shape[1:], jnp.float32)          # (tq, C)
        for h in range(n_heads):
            inv_l = pl.reciprocal(l_s[h], approx=True)         # (tq, 1)
            head_out = (acc_s[h] * inv_l).astype(jnp.bfloat16)
            out = out + jnp.dot(head_out, wo_ref[h],
                                preferred_element_type=jnp.float32)
        o_ref[0] = (out + bias_ref[...]).astype(o_ref.dtype)


def _pick_tile(n, preferred):
    for t in (preferred, 512, 256, 128):
        if 0 < t <= n and n % t == 0:
            return t
    return n


def attn_block(x_nchw, w_qkv, w_out, b_out, n_heads, d_head,
               block_q=128, block_kv=128):
    """Pallas implementation of AttnBlock.forward.

    x_nchw : (B, C, H, W) float32
    w_qkv  : (3 * n_heads * d_head, C)   -- to_qkv 1x1 conv weight (no bias)
    w_out  : (C, n_heads * d_head)       -- to_out 1x1 conv weight
    b_out  : (C,)                        -- to_out bias
    """
    B, C, H, W = x_nchw.shape
    N = H * W
    d_attn = n_heads * d_head
    scale = float(d_head) ** (-0.5)

    tq = _pick_tile(N, block_q)
    tk = _pick_tile(N, block_kv)

    # NCHW -> (B, N, C); bf16 activations for the MXU (f32 accumulation inside).
    x = jnp.transpose(x_nchw, (0, 2, 3, 1)).reshape(B, N, C).astype(jnp.bfloat16)

    # Weight prep: scale folded into Wq, K/V fused into one slab, Wo per head.
    wq = (jnp.transpose(w_qkv[:d_attn], (1, 0)) * scale).astype(jnp.bfloat16)
    wk = jnp.transpose(w_qkv[d_attn:2 * d_attn], (1, 0))
    wv = jnp.transpose(w_qkv[2 * d_attn:], (1, 0))
    wkv = jnp.concatenate([wk, wv], axis=1).astype(jnp.bfloat16)   # (C, 2*d_attn)
    wo = jnp.transpose(w_out, (1, 0)).reshape(n_heads, d_head, C).astype(jnp.bfloat16)
    bias = b_out.reshape(1, C).astype(jnp.float32)

    kernel = functools.partial(_attn_block_kernel, n_heads=n_heads, d_head=d_head)

    flops = int(2 * B * N * C * 3 * d_attn            # qkv projections
                + 4 * B * n_heads * N * N * d_head    # scores + P@V
                + 2 * B * N * d_attn * C)             # output projection
    cost = pl.CostEstimate(
        flops=flops,
        transcendentals=int(B * n_heads * N * N),
        bytes_accessed=int(2 * B * N * C * 2 + B * N * C * 4
                           + (wq.size + wkv.size + wo.size) * 2 + bias.size * 4))

    out = pl.pallas_call(
        kernel,
        out_shape=jax.ShapeDtypeStruct((B, N, C), jnp.float32),
        grid_spec=pltpu.PrefetchScalarGridSpec(
            num_scalar_prefetch=0,
            grid=(B, N // tq, N // tk),
            in_specs=[
                pl.BlockSpec((1, tq, C), lambda b, i, j: (b, i, 0)),          # x (q rows)
                pl.BlockSpec((1, tk, C), lambda b, i, j: (b, j, 0)),          # x (kv rows)
                pl.BlockSpec((C, d_attn), lambda b, i, j: (0, 0)),            # Wq (scaled)
                pl.BlockSpec((C, 2 * d_attn), lambda b, i, j: (0, 0)),        # [Wk | Wv]
                pl.BlockSpec((n_heads, d_head, C), lambda b, i, j: (0, 0, 0)),  # Wo
                pl.BlockSpec((1, C), lambda b, i, j: (0, 0)),                 # bias
            ],
            out_specs=pl.BlockSpec((1, tq, C), lambda b, i, j: (b, i, 0)),
            scratch_shapes=[
                pltpu.VMEM((tq, d_attn), jnp.bfloat16),            # Q tile
                pltpu.VMEM((n_heads, tq, 1), jnp.float32),         # running max
                pltpu.VMEM((n_heads, tq, 1), jnp.float32),         # running sum
                pltpu.VMEM((n_heads, tq, d_head), jnp.float32),    # running acc
            ]),
        compiler_params=pltpu.CompilerParams(
            dimension_semantics=("parallel", "parallel", "arbitrary")),
        cost_estimate=cost,
    )(x, x, wq, wkv, wo, bias)

    # (B, N, C) -> NCHW
    return jnp.transpose(out.reshape(B, H, W, C), (0, 3, 1, 2))


def attn_block_ref(x, w_qkv, w_out, b_out, n_heads, d_head):
    """Plain-JAX f32 reference mirroring the PyTorch forward exactly."""
    B, C, H, W = x.shape
    scale = float(d_head) ** (-0.5)
    qkv = jnp.einsum('bchw,oc->bohw', x, w_qkv)
    q, k, v = jnp.split(qkv, 3, axis=1)
    rearr = lambda t: t.reshape(B, n_heads, d_head, H * W)   # b (h c) x y -> b h c (xy)
    q, k, v = rearr(q), rearr(k), rearr(v)
    q = q * scale
    sim = jnp.einsum('bhdi,bhdj->bhij', q, k)
    attn = jax.nn.softmax(sim, axis=-1)
    out = jnp.einsum('bhij,bhdj->bhid', attn, v)
    out = jnp.transpose(out, (0, 1, 3, 2)).reshape(B, n_heads * d_head, H, W)
    out = jnp.einsum('bchw,oc->bohw', out, w_out) + b_out[None, :, None, None]
    return out


if __name__ == "__main__":
    B, C, H, W = 2, 4, 16, 16
    n_heads, d_head = 2, 4
    d_attn = n_heads * d_head

    key = jax.random.PRNGKey(0)
    kx, kw1, kw2, kb = jax.random.split(key, 4)
    x = jax.random.normal(kx, (B, C, H, W), dtype=jnp.float32)
    # Deterministic synthetic parameters (shapes from nn.Conv2d 1x1 kernels).
    w_qkv = 0.3 * jax.random.normal(kw1, (3 * d_attn, C), dtype=jnp.float32)
    w_out = 0.5 * jax.random.normal(kw2, (C, d_attn), dtype=jnp.float32)
    b_out = 0.5 * jax.random.normal(kb, (C,), dtype=jnp.float32)

    out = attn_block(x, w_qkv, w_out, b_out, n_heads, d_head)
    out = jax.block_until_ready(out)

    ref = attn_block_ref(x, w_qkv, w_out, b_out, n_heads, d_head)
    assert out.shape == (B, C, H, W)
    # bf16 MXU operands (f32 accumulation) vs f32 reference -> loose tolerance.
    assert jnp.allclose(out, ref, atol=5e-2, rtol=5e-2), "Pallas/reference mismatch"
    print("KERNEL_OK")
</pallas_src>

<mosaic_0001>
module attributes {stable_mosaic.version = 11 : i64} {
  func.func @_attn_block_kernel(%arg0: i32, %arg1: i32, %arg2: i32, %arg3: memref<1x128x4xbf16, #tpu.memory_space<vmem>>, %arg4: memref<1x128x4xbf16, #tpu.memory_space<vmem>>, %arg5: memref<4x8xbf16, #tpu.memory_space<vmem>>, %arg6: memref<4x16xbf16, #tpu.memory_space<vmem>>, %arg7: memref<2x4x4xbf16, #tpu.memory_space<vmem>>, %arg8: memref<1x4xf32, #tpu.memory_space<vmem>>, %arg9: memref<1x128x4xf32, #tpu.memory_space<vmem>>, %arg10: memref<128x8xbf16, #tpu.memory_space<vmem>>, %arg11: memref<2x128x1xf32, #tpu.memory_space<vmem>>, %arg12: memref<2x128x1xf32, #tpu.memory_space<vmem>>, %arg13: memref<2x128x4xf32, #tpu.memory_space<vmem>>) attributes {dimension_semantics = [#tpu.dimension_semantics<parallel>, #tpu.dimension_semantics<parallel>, #tpu.dimension_semantics<arbitrary>], iteration_bounds = array<i64: 2, 2, 2>, scalar_prefetch = 0 : i64, scratch_operands = 4 : i64, tpu.core_type = #tpu.core_type<tc>, window_params = [{transform_indices = @transform_0, window_bounds = array<i64: 1, 128, 4>}, {transform_indices = @transform_1, window_bounds = array<i64: 1, 128, 4>}, {pipeline_mode = #tpu.pipeline_mode<synchronous>, transform_indices = @transform_2, window_bounds = array<i64: 4, 8>}, {pipeline_mode = #tpu.pipeline_mode<synchronous>, transform_indices = @transform_3, window_bounds = array<i64: 4, 16>}, {pipeline_mode = #tpu.pipeline_mode<synchronous>, transform_indices = @transform_4, window_bounds = array<i64: 2, 4, 4>}, {pipeline_mode = #tpu.pipeline_mode<synchronous>, transform_indices = @transform_5, window_bounds = array<i64: 1, 4>}, {transform_indices = @transform_6, window_bounds = array<i64: 1, 128, 4>}]} {
    %c0_i32 = arith.constant 0 : i32
    %0 = arith.cmpi eq, %arg2, %c0_i32 : i32
    %1 = arith.extui %0 : i1 to i32
    %c0_i32_0 = arith.constant 0 : i32
    %2 = arith.cmpi ne, %1, %c0_i32_0 : i32
    scf.if %2 {
      %c0_51 = arith.constant 0 : index
      %c0_52 = arith.constant 0 : index
      %c0_53 = arith.constant 0 : index
      %84 = vector.load %arg3[%c0_51, %c0_52, %c0_53] : memref<1x128x4xbf16, #tpu.memory_space<vmem>>, vector<1x128x4xbf16>
      %85 = vector.shape_cast %84 : vector<1x128x4xbf16> to vector<128x4xbf16>
      %c0_54 = arith.constant 0 : index
      %c0_55 = arith.constant 0 : index
      %86 = vector.load %arg5[%c0_54, %c0_55] : memref<4x8xbf16, #tpu.memory_space<vmem>>, vector<4x8xbf16>
      %cst_56 = arith.constant dense<0.000000e+00> : vector<128x8xf32>
      %87 = tpu.matmul %85, %86, %cst_56 {dimension_numbers = #tpu.dot_dimension_numbers<[1], [0], [0], [1], [0, 0, 1, 1], [], []>} : vector<128x4xbf16>, vector<4x8xbf16>, vector<128x8xf32> -> vector<128x8xf32>
      %88 = arith.truncf %87 : vector<128x8xf32> to vector<128x8xbf16>
      %c0_57 = arith.constant 0 : index
      %c0_58 = arith.constant 0 : index
      %89 = vector.load %arg10[%c0_57, %c0_58] : memref<128x8xbf16, #tpu.memory_space<vmem>>, vector<128x8xbf16>
      tpu.vector_store %arg10[%c0_57, %c0_58], %88 {strides = array<i32>} : memref<128x8xbf16, #tpu.memory_space<vmem>>, vector<128x8xbf16>,
      %cst_59 = arith.constant 0xFF800000 : f32
      %90 = vector.broadcast %cst_59 : f32 to vector<2x128x1xf32>
      %c0_60 = arith.constant 0 : index
      %c0_61 = arith.constant 0 : index
      %c0_62 = arith.constant 0 : index
      %91 = vector.load %arg11[%c0_60, %c0_61, %c0_62] : memref<2x128x1xf32, #tpu.memory_space<vmem>>, vector<2x128x1xf32>
      tpu.vector_store %arg11[%c0_60, %c0_61, %c0_62], %90 {strides = array<i32>} : memref<2x128x1xf32, #tpu.memory_space<vmem>>, vector<2x128x1xf32>,
      %cst_63 = arith.constant 0.000000e+00 : f32
      %92 = vector.broadcast %cst_63 : f32 to vector<2x128x1xf32>
      %c0_64 = arith.constant 0 : index
      %c0_65 = arith.constant 0 : index
      %c0_66 = arith.constant 0 : index
      %93 = vector.load %arg12[%c0_64, %c0_65, %c0_66] : memref<2x128x1xf32, #tpu.memory_space<vmem>>, vector<2x128x1xf32>
      tpu.vector_store %arg12[%c0_64, %c0_65, %c0_66], %92 {strides = array<i32>} : memref<2x128x1xf32, #tpu.memory_space<vmem>>, vector<2x128x1xf32>,
      %cst_67 = arith.constant 0.000000e+00 : f32
      %94 = vector.broadcast %cst_67 : f32 to vector<2x128x4xf32>
      %c0_68 = arith.constant 0 : index
      %c0_69 = arith.constant 0 : index
      %c0_70 = arith.constant 0 : index
      %95 = vector.load %arg13[%c0_68, %c0_69, %c0_70] : memref<2x128x4xf32, #tpu.memory_space<vmem>>, vector<2x128x4xf32>
      tpu.vector_store %arg13[%c0_68, %c0_69, %c0_70], %94 {strides = array<i32>} : memref<2x128x4xf32, #tpu.memory_space<vmem>>, vector<2x128x4xf32>,
    } else {
    }
    %c0 = arith.constant 0 : index
    %c0_1 = arith.constant 0 : index
    %c0_2 = arith.constant 0 : index
    %3 = vector.load %arg4[%c0, %c0_1, %c0_2] : memref<1x128x4xbf16, #tpu.memory_space<vmem>>, vector<1x128x4xbf16>
    %4 = vector.shape_cast %3 : vector<1x128x4xbf16> to vector<128x4xbf16>
    %c0_3 = arith.constant 0 : index
    %c0_4 = arith.constant 0 : index
    %5 = vector.load %arg6[%c0_3, %c0_4] : memref<4x16xbf16, #tpu.memory_space<vmem>>, vector<4x16xbf16>
    %cst = arith.constant dense<0.000000e+00> : vector<128x16xf32>
    %6 = tpu.matmul %4, %5, %cst {dimension_numbers = #tpu.dot_dimension_numbers<[1], [0], [0], [1], [0, 0, 1, 1], [], []>} : vector<128x4xbf16>, vector<4x16xbf16>, vector<128x16xf32> -> vector<128x16xf32>
    %7 = arith.truncf %6 : vector<128x16xf32> to vector<128x16xbf16>
    %c0_5 = arith.constant 0 : index
    %c0_6 = arith.constant 0 : index
    %8 = vector.load %arg10[%c0_5, %c0_6] : memref<128x8xbf16, #tpu.memory_space<vmem>>, vector<128x8xbf16>
    %9 = vector.extract_strided_slice %8 {offsets = [0, 0], sizes = [128, 4], strides = [1, 1]} : vector<128x8xbf16> to vector<128x4xbf16>
    %10 = vector.extract_strided_slice %7 {offsets = [0, 0], sizes = [128, 4], strides = [1, 1]} : vector<128x16xbf16> to vector<128x4xbf16>
    %11 = vector.extract_strided_slice %7 {offsets = [0, 8], sizes = [128, 4], strides = [1, 1]} : vector<128x16xbf16> to vector<128x4xbf16>
    %cst_7 = arith.constant dense<0.000000e+00> : vector<128x128xf32>
    %12 = tpu.matmul %9, %10, %cst_7 {dimension_numbers = #tpu.dot_dimension_numbers<[1], [1], [0], [0], [0, 0, 1, 0], [], []>} : vector<128x4xbf16>, vector<128x4xbf16>, vector<128x128xf32> -> vector<128x128xf32>
    %c0_8 = arith.constant 0 : index
    %c0_9 = arith.constant 0 : index
    %c0_10 = arith.constant 0 : index
    %13 = vector.load %arg11[%c0_8, %c0_9, %c0_10] : memref<2x128x1xf32, #tpu.memory_space<vmem>>, vector<1x128x1xf32>
    %14 = vector.shape_cast %13 : vector<1x128x1xf32> to vector<128x1xf32>
    %cst_11 = arith.constant dense<0xFF800000> : vector<128xf32>
    %15 = vector.multi_reduction <maximumf>, %12, %cst_11 [1] : vector<128x128xf32> to vector<128xf32>
    %16 = vector.shape_cast %15 : vector<128xf32> to vector<128x1xf32>
    %17 = arith.maximumf %14, %16 : vector<128x1xf32>
    %18 = arith.subf %14, %17 : vector<128x1xf32>
    %19 = math.exp %18 : vector<128x1xf32>
    %20 = vector.broadcast %17 : vector<128x1xf32> to vector<128x128xf32>
    %21 = arith.subf %12, %20 : vector<128x128xf32>
    %22 = math.exp %21 : vector<128x128xf32>
    %c0_12 = arith.constant 0 : index
    %c0_13 = arith.constant 0 : index
    %c0_14 = arith.constant 0 : index
    %23 = vector.load %arg12[%c0_12, %c0_13, %c0_14] : memref<2x128x1xf32, #tpu.memory_space<vmem>>, vector<1x128x1xf32>
    %24 = vector.shape_cast %23 : vector<1x128x1xf32> to vector<128x1xf32>
    %25 = arith.mulf %19, %24 : vector<128x1xf32>
    %cst_15 = arith.constant dense<0.000000e+00> : vector<128xf32>
    %26 = vector.multi_reduction <add>, %22, %cst_15 [1] : vector<128x128xf32> to vector<128xf32>
    %27 = vector.shape_cast %26 : vector<128xf32> to vector<128x1xf32>
    %28 = arith.addf %25, %27 : vector<128x1xf32>
    %c0_16 = arith.constant 0 : index
    %c0_17 = arith.constant 0 : index
    %c0_18 = arith.constant 0 : index
    %29 = vector.load %arg12[%c0_16, %c0_17, %c0_18] : memref<2x128x1xf32, #tpu.memory_space<vmem>>, vector<1x128x1xf32>
    %30 = vector.shape_cast %29 : vector<1x128x1xf32> to vector<128x1xf32>
    %31 = vector.shape_cast %28 : vector<128x1xf32> to vector<1x128x1xf32>
    tpu.vector_store %arg12[%c0_16, %c0_17, %c0_18], %31 {strides = array<i32>} : memref<2x128x1xf32, #tpu.memory_space<vmem>>, vector<1x128x1xf32>,
    %c0_19 = arith.constant 0 : index
    %c0_20 = arith.constant 0 : index
    %c0_21 = arith.constant 0 : index
    %32 = vector.load %arg13[%c0_19, %c0_20, %c0_21] : memref<2x128x4xf32, #tpu.memory_space<vmem>>, vector<1x128x4xf32>
    %33 = vector.shape_cast %32 : vector<1x128x4xf32> to vector<128x4xf32>
    %34 = vector.broadcast %19 : vector<128x1xf32> to vector<128x4xf32>
    %35 = arith.mulf %34, %33 : vector<128x4xf32>
    %36 = arith.truncf %22 : vector<128x128xf32> to vector<128x128xbf16>
    %cst_22 = arith.constant dense<0.000000e+00> : vector<128x4xf32>
    %37 = tpu.matmul %36, %11, %cst_22 {dimension_numbers = #tpu.dot_dimension_numbers<[1], [0], [0], [1], [0, 0, 1, 1], [], []>} : vector<128x128xbf16>, vector<128x4xbf16>, vector<128x4xf32> -> vector<128x4xf32>
    %38 = arith.addf %35, %37 : vector<128x4xf32>
    %c0_23 = arith.constant 0 : index
    %c0_24 = arith.constant 0 : index
    %c0_25 = arith.constant 0 : index
    %39 = vector.load %arg13[%c0_23, %c0_24, %c0_25] : memref<2x128x4xf32, #tpu.memory_space<vmem>>, vector<1x128x4xf32>
    %40 = vector.shape_cast %39 : vector<1x128x4xf32> to vector<128x4xf32>
    %41 = vector.shape_cast %38 : vector<128x4xf32> to vector<1x128x4xf32>
    tpu.vector_store %arg13[%c0_23, %c0_24, %c0_25], %41 {strides = array<i32>} : memref<2x128x4xf32, #tpu.memory_space<vmem>>, vector<1x128x4xf32>,
    %c0_26 = arith.constant 0 : index
    %c0_27 = arith.constant 0 : index
    %c0_28 = arith.constant 0 : index
    %42 = vector.load %arg11[%c0_26, %c0_27, %c0_28] : memref<2x128x1xf32, #tpu.memory_space<vmem>>, vector<1x128x1xf32>
    %43 = vector.shape_cast %42 : vector<1x128x1xf32> to vector<128x1xf32>
    %44 = vector.shape_cast %17 : vector<128x1xf32> to vector<1x128x1xf32>
    tpu.vector_store %arg11[%c0_26, %c0_27, %c0_28], %44 {strides = array<i32>} : memref<2x128x1xf32, #tpu.memory_space<vmem>>, vector<1x128x1xf32>,
    %45 = vector.extract_strided_slice %8 {offsets = [0, 4], sizes = [128, 4], strides = [1, 1]} : vector<128x8xbf16> to vector<128x4xbf16>
    %46 = vector.extract_strided_slice %7 {offsets = [0, 4], sizes = [128, 4], strides = [1, 1]} : vector<128x16xbf16> to vector<128x4xbf16>
    %47 = vector.extract_strided_slice %7 {offsets = [0, 12], sizes = [128, 4], strides = [1, 1]} : vector<128x16xbf16> to vector<128x4xbf16>
    %cst_29 = arith.constant dense<0.000000e+00> : vector<128x128xf32>
    %48 = tpu.matmul %45, %46, %cst_29 {dimension_numbers = #tpu.dot_dimension_numbers<[1], [1], [0], [0], [0, 0, 1, 0], [], []>} : vector<128x4xbf16>, vector<128x4xbf16>, vector<128x128xf32> -> vector<128x128xf32>
    %c1 = arith.constant 1 : index
    %c0_30 = arith.constant 0 : index
    %c0_31 = arith.constant 0 : index
    %49 = vector.load %arg11[%c1, %c0_30, %c0_31] : memref<2x128x1xf32, #tpu.memory_space<vmem>>, vector<1x128x1xf32>
    %50 = vector.shape_cast %49 : vector<1x128x1xf32> to vector<128x1xf32>
    %cst_32 = arith.constant dense<0xFF800000> : vector<128xf32>
    %51 = vector.multi_reduction <maximumf>, %48, %cst_32 [1] : vector<128x128xf32> to vector<128xf32>
    %52 = vector.shape_cast %51 : vector<128xf32> to vector<128x1xf32>
    %53 = arith.maximumf %50, %52 : vector<128x1xf32>
    %54 = arith.subf %50, %53 : vector<128x1xf32>
    %55 = math.exp %54 : vector<128x1xf32>
    %56 = vector.broadcast %53 : vector<128x1xf32> to vector<128x128xf32>
    %57 = arith.subf %48, %56 : vector<128x128xf32>
    %58 = math.exp %57 : vector<128x128xf32>
    %c1_33 = arith.constant 1 : index
    %c0_34 = arith.constant 0 : index
    %c0_35 = arith.constant 0 : index
    %59 = vector.load %arg12[%c1_33, %c0_34, %c0_35] : memref<2x128x1xf32, #tpu.memory_space<vmem>>, vector<1x128x1xf32>
    %60 = vector.shape_cast %59 : vector<1x128x1xf32> to vector<128x1xf32>
    %61 = arith.mulf %55, %60 : vector<128x1xf32>
    %cst_36 = arith.constant dense<0.000000e+00> : vector<128xf32>
    %62 = vector.multi_reduction <add>, %58, %cst_36 [1] : vector<128x128xf32> to vector<128xf32>
    %63 = vector.shape_cast %62 : vector<128xf32> to vector<128x1xf32>
    %64 = arith.addf %61, %63 : vector<128x1xf32>
    %c1_37 = arith.constant 1 : index
    %c0_38 = arith.constant 0 : index
    %c0_39 = arith.constant 0 : index
    %65 = vector.load %arg12[%c1_37, %c0_38, %c0_39] : memref<2x128x1xf32, #tpu.memory_space<vmem>>, vector<1x128x1xf32>
    %66 = vector.shape_cast %65 : vector<1x128x1xf32> to vector<128x1xf32>
    %67 = vector.shape_cast %64 : vector<128x1xf32> to vector<1x128x1xf32>
    tpu.vector_store %arg12[%c1_37, %c0_38, %c0_39], %67 {strides = array<i32>} : memref<2x128x1xf32, #tpu.memory_space<vmem>>, vector<1x128x1xf32>,
    %c1_40 = arith.constant 1 : index
    %c0_41 = arith.constant 0 : index
    %c0_42 = arith.constant 0 : index
    %68 = vector.load %arg13[%c1_40, %c0_41, %c0_42] : memref<2x128x4xf32, #tpu.memory_space<vmem>>, vector<1x128x4xf32>
    %69 = vector.shape_cast %68 : vector<1x128x4xf32> to vector<128x4xf32>
    %70 = vector.broadcast %55 : vector<128x1xf32> to vector<128x4xf32>
    %71 = arith.mulf %70, %69 : vector<128x4xf32>
    %72 = arith.truncf %58 : vector<128x128xf32> to vector<128x128xbf16>
    %cst_43 = arith.constant dense<0.000000e+00> : vector<128x4xf32>
    %73 = tpu.matmul %72, %47, %cst_43 {dimension_numbers = #tpu.dot_dimension_numbers<[1], [0], [0], [1], [0, 0, 1, 1], [], []>} : vector<128x128xbf16>, vector<128x4xbf16>, vector<128x4xf32> -> vector<128x4xf32>
    %74 = arith.addf %71, %73 : vector<128x4xf32>
    %c1_44 = arith.constant 1 : index
    %c0_45 = arith.constant 0 : index
    %c0_46 = arith.constant 0 : index
    %75 = vector.load %arg13[%c1_44, %c0_45, %c0_46] : memref<2x128x4xf32, #tpu.memory_space<vmem>>, vector<1x128x4xf32>
    %76 = vector.shape_cast %75 : vector<1x128x4xf32> to vector<128x4xf32>
    %77 = vector.shape_cast %74 : vector<128x4xf32> to vector<1x128x4xf32>
    tpu.vector_store %arg13[%c1_44, %c0_45, %c0_46], %77 {strides = array<i32>} : memref<2x128x4xf32, #tpu.memory_space<vmem>>, vector<1x128x4xf32>,
    %c1_47 = arith.constant 1 : index
    %c0_48 = arith.constant 0 : index
    %c0_49 = arith.constant 0 : index
    %78 = vector.load %arg11[%c1_47, %c0_48, %c0_49] : memref<2x128x1xf32, #tpu.memory_space<vmem>>, vector<1x128x1xf32>
    %79 = vector.shape_cast %78 : vector<1x128x1xf32> to vector<128x1xf32>
    %80 = vector.shape_cast %53 : vector<128x1xf32> to vector<1x128x1xf32>
    tpu.vector_store %arg11[%c1_47, %c0_48, %c0_49], %80 {strides = array<i32>} : memref<2x128x1xf32, #tpu.memory_space<vmem>>, vector<1x128x1xf32>,
    %c1_i32 = arith.constant 1 : i32
    %81 = arith.cmpi eq, %arg2, %c1_i32 : i32
    %82 = arith.extui %81 : i1 to i32
    %c0_i32_50 = arith.constant 0 : i32
    %83 = arith.cmpi ne, %82, %c0_i32_50 : i32
    scf.if %83 {
      %cst_51 = arith.constant 0.000000e+00 : f32
      %84 = vector.broadcast %cst_51 : f32 to vector<128x4xf32>
      %c0_52 = arith.constant 0 : index
      %c0_53 = arith.constant 0 : index
      %c0_54 = arith.constant 0 : index
      %85 = vector.load %arg12[%c0_52, %c0_53, %c0_54] : memref<2x128x1xf32, #tpu.memory_space<vmem>>, vector<1x128x1xf32>
      %86 = vector.shape_cast %85 : vector<1x128x1xf32> to vector<128x1xf32>
      %87 = tpu.reciprocal %86 {approx = true} : vector<128x1xf32> -> vector<128x1xf32>
      %c0_55 = arith.constant 0 : index
      %c0_56 = arith.constant 0 : index
      %c0_57 = arith.constant 0 : index
      %88 = vector.load %arg13[%c0_55, %c0_56, %c0_57] : memref<2x128x4xf32, #tpu.memory_space<vmem>>, vector<1x128x4xf32>
      %89 = vector.shape_cast %88 : vector<1x128x4xf32> to vector<128x4xf32>
      %90 = vector.broadcast %87 : vector<128x1xf32> to vector<128x4xf32>
      %91 = arith.mulf %89, %90 : vector<128x4xf32>
      %92 = arith.truncf %91 : vector<128x4xf32> to vector<128x4xbf16>
      %c0_58 = arith.constant 0 : index
      %c0_59 = arith.constant 0 : index
      %c0_60 = arith.constant 0 : index
      %93 = vector.load %arg7[%c0_58, %c0_59, %c0_60] : memref<2x4x4xbf16, #tpu.memory_space<vmem>>, vector<1x4x4xbf16>
      %94 = vector.shape_cast %93 : vector<1x4x4xbf16> to vector<4x4xbf16>
      %cst_61 = arith.constant dense<0.000000e+00> : vector<128x4xf32>
      %95 = tpu.matmul %92, %94, %cst_61 {dimension_numbers = #tpu.dot_dimension_numbers<[1], [0], [0], [1], [0, 0, 1, 1], [], []>} : vector<128x4xbf16>, vector<4x4xbf16>, vector<128x4xf32> -> vector<128x4xf32>
      %96 = arith.addf %84, %95 : vector<128x4xf32>
      %c1_62 = arith.constant 1 : index
      %c0_63 = arith.constant 0 : index
      %c0_64 = arith.constant 0 : index
      %97 = vector.load %arg12[%c1_62, %c0_63, %c0_64] : memref<2x128x1xf32, #tpu.memory_space<vmem>>, vector<1x128x1xf32>
      %98 = vector.shape_cast %97 : vector<1x128x1xf32> to vector<128x1xf32>
      %99 = tpu.reciprocal %98 {approx = true} : vector<128x1xf32> -> vector<128x1xf32>
      %c1_65 = arith.constant 1 : index
      %c0_66 = arith.constant 0 : index
      %c0_67 = arith.constant 0 : index
      %100 = vector.load %arg13[%c1_65, %c0_66, %c0_67] : memref<2x128x4xf32, #tpu.memory_space<vmem>>, vector<1x128x4xf32>
      %101 = vector.shape_cast %100 : vector<1x128x4xf32> to vector<128x4xf32>
      %102 = vector.broadcast %99 : vector<128x1xf32> to vector<128x4xf32>
      %103 = arith.mulf %101, %102 : vector<128x4xf32>
      %104 = arith.truncf %103 : vector<128x4xf32> to vector<128x4xbf16>
      %c1_68 = arith.constant 1 : index
      %c0_69 = arith.constant 0 : index
      %c0_70 = arith.constant 0 : index
      %105 = vector.load %arg7[%c1_68, %c0_69, %c0_70] : memref<2x4x4xbf16, #tpu.memory_space<vmem>>, vector<1x4x4xbf16>
      %106 = vector.shape_cast %105 : vector<1x4x4xbf16> to vector<4x4xbf16>
      %cst_71 = arith.constant dense<0.000000e+00> : vector<128x4xf32>
      %107 = tpu.matmul %104, %106, %cst_71 {dimension_numbers = #tpu.dot_dimension_numbers<[1], [0], [0], [1], [0, 0, 1, 1], [], []>} : vector<128x4xbf16>, vector<4x4xbf16>, vector<128x4xf32> -> vector<128x4xf32>
      %108 = arith.addf %96, %107 : vector<128x4xf32>
      %c0_72 = arith.constant 0 : index
      %c0_73 = arith.constant 0 : index
      %109 = vector.load %arg8[%c0_72, %c0_73] : memref<1x4xf32, #tpu.memory_space<vmem>>, vector<1x4xf32>
      %110 = vector.broadcast %109 : vector<1x4xf32> to vector<128x4xf32>
      %111 = arith.addf %108, %110 : vector<128x4xf32>
      %c0_74 = arith.constant 0 : index
      %c0_75 = arith.constant 0 : index
      %c0_76 = arith.constant 0 : index
      %112 = vector.load %arg9[%c0_74, %c0_75, %c0_76] : memref<1x128x4xf32, #tpu.memory_space<vmem>>, vector<1x128x4xf32>
      %113 = vector.shape_cast %112 : vector<1x128x4xf32> to vector<128x4xf32>
      %114 = vector.shape_cast %111 : vector<128x4xf32> to vector<1x128x4xf32>
      tpu.vector_store %arg9[%c0_74, %c0_75, %c0_76], %114 {strides = array<i32>} : memref<1x128x4xf32, #tpu.memory_space<vmem>>, vector<1x128x4xf32>,
    } else {
    }
    return
  }
  func.func @transform_0(%arg0: i32, %arg1: i32, %arg2: i32) -> (i32, i32, i32) {
    %c0_i32 = arith.constant 0 : i32
    %c0_i32_0 = arith.constant 0 : i32
    return %arg0, %arg1, %c0_i32 : i32, i32, i32
  }
  func.func @transform_1(%arg0: i32, %arg1: i32, %arg2: i32) -> (i32, i32, i32) {
    %c0_i32 = arith.constant 0 : i32
    %c0_i32_0 = arith.constant 0 : i32
    return %arg0, %arg2, %c0_i32 : i32, i32, i32
  }
  func.func @transform_2(%arg0: i32, %arg1: i32, %arg2: i32) -> (i32, i32) {
    %c0_i32 = arith.constant 0 : i32
    %c0_i32_0 = arith.constant 0 : i32
    %c0_i32_1 = arith.constant 0 : i32
    return %c0_i32, %c0_i32_0 : i32, i32
  }
  func.func @transform_3(%arg0: i32, %arg1: i32, %arg2: i32) -> (i32, i32) {
    %c0_i32 = arith.constant 0 : i32
    %c0_i32_0 = arith.constant 0 : i32
    %c0_i32_1 = arith.constant 0 : i32
    return %c0_i32, %c0_i32_0 : i32, i32
  }
  func.func @transform_4(%arg0: i32, %arg1: i32, %arg2: i32) -> (i32, i32, i32) {
    %c0_i32 = arith.constant 0 : i32
    %c0_i32_0 = arith.constant 0 : i32
    %c0_i32_1 = arith.constant 0 : i32
    %c0_i32_2 = arith.constant 0 : i32
    return %c0_i32, %c0_i32_0, %c0_i32_1 : i32, i32, i32
  }
  func.func @transform_5(%arg0: i32, %arg1: i32, %arg2: i32) -> (i32, i32) {
    %c0_i32 = arith.constant 0 : i32
    %c0_i32_0 = arith.constant 0 : i32
    %c0_i32_1 = arith.constant 0 : i32
    return %c0_i32, %c0_i32_0 : i32, i32
  }
  func.func @transform_6(%arg0: i32, %arg1: i32, %arg2: i32) -> (i32, i32, i32) {
    %c0_i32 = arith.constant 0 : i32
    %c0_i32_0 = arith.constant 0 : i32
    return %arg0, %arg1, %c0_i32 : i32, i32, i32
  }
}

</mosaic_0001>

<llo_original>
// kernel: tpu_custom_call.1
$region0: #{tpu_custom_call.1}
  #allocation0 [shape = 'u32[]', space=smem, size = 0x4, offset = 0x4, fixed_abs, tag = 'smem constant byte address 0x4 - core index']
  #allocation1 [shape = 'u32[144,128]{1,0:T(1,128)}', space=vmem, size = 0x12000, scoped, tag = 'internal scratch']
  #allocation2 [shape = 'bf16[128,8]{1,0:T(16,128)(2,1)}', space=vmem, size = 0x8000, scoped, tag = 'scratch operand']
  #allocation3 [shape = 'f32[2,128,1]{2,1,0:T(8,128)}', space=vmem, size = 0x20000, scoped, tag = 'scratch operand']
  #allocation4 [shape = 'f32[2,128,1]{2,1,0:T(8,128)}', space=vmem, size = 0x20000, scoped, tag = 'scratch operand']
  #allocation5 [shape = 'f32[2,128,4]{2,1,0:T(8,128)}', space=vmem, size = 0x20000, scoped, tag = 'scratch operand']
  %s0 = inlined_call_operand.vmem [shape: bf16[2,256,4], index: 0, kind: input, shape index: {}]
  %s1 = inlined_call_operand.vmem [shape: bf16[2,256,4], index: 1, kind: input, shape index: {}]
  %s2 = inlined_call_operand.vmem [shape: bf16[4,8], index: 2, kind: input, shape index: {}]
  %s3 = inlined_call_operand.vmem [shape: bf16[4,16], index: 3, kind: input, shape index: {}]
  %s4 = inlined_call_operand.vmem [shape: bf16[2,4,4], index: 4, kind: input, shape index: {}]
  %s5 = inlined_call_operand.vmem [shape: f32[1,4], index: 5, kind: input, shape index: {}]
  %s6 = inlined_call_operand.vmem [shape: f32[2,256,4], index: 6, kind: output, shape index: {}]
  %s7 = sld [smem:[#allocation0]]
  $region65: #{tpu_custom_call.1} parent=0
    _
  %s9 = ssub.s32 1, %s7
  %s10 = scalar_select 0, %s9, %s7
  loop: start=0, step=1, limit=10
  $region2: #{tpu_custom_call.1} parent=0 // loop_pre_header
    _
  $region3: #{tpu_custom_call.1} parent=0 // loop_header
    %s12 = sphi 0, %s16
    %p13 = scmp.ge.s32.totalorder %s12, 10
    %s19 = sphi 0, %s38
    %s20 = sphi 0, %s34
    %s21 = sphi 0, %s30
    %s22 = sphi 0, %s19
    %s23 = sphi 0, %s20
    %s24 = sphi 0, %s21
    %s25 = sphi 0, %s22
    %s26 = sphi 0, %s23
    %s27 = sphi 0, %s24
    %s43 = sphi 0, %s45
    %s46 = sphi 0, %s43
    %s47 = sphi 0, %s46
    %s63 = sphi 0, %s47
    %s71 = sphi 0, %s73
    %s74 = sphi 0, %s71
    %s75 = sphi 0, %s74
    %s91 = sphi 0, %s75
    %s95 = sphi 0, %s95
    %s97 = sphi 0, %s95
    %s98 = sphi 0, %s97
    %s112 = sphi 0, %s98
    %s116 = sphi 0, %s116
    %s118 = sphi 0, %s116
    %s119 = sphi 0, %s118
    %s133 = sphi 0, %s119
    %s137 = sphi 0, %s137
    %s139 = sphi 0, %s137
    %s140 = sphi 0, %s139
    %s154 = sphi 0, %s140
    %s158 = sphi 0, %s158
    %s160 = sphi 0, %s158
    %s161 = sphi 0, %s160
    %s175 = sphi 0, %s161
    %s183 = sphi 0, %s185
    %s186 = sphi 0, %s183
    %s187 = sphi 0, %s186
    %s203 = sphi 0, %s187
  $region4: #{tpu_custom_call.1} parent=0 // loop_header_branch
    %15 = sbr.rel (%p13) target = $region8
  $region5: #{tpu_custom_call.1} parent=0 // loop_body
    %s17 = ssub.s32 %s12, 1
    %s18 = ssub.s32 %s12, 2
    %s28 = sadd.s32 1, %s21
    %p29 = scmp.ge.s32.totalorder %s28, 2
    %s30 = scalar_select %p29, 0, %s28
    %s31 = sadd.s32 1, %s20
    %s32 = scalar_select %p29, %s31, %s20
    %p33 = scmp.ge.s32.totalorder %s32, 2
    %s34 = scalar_select %p33, 0, %s32
    %s35 = sadd.s32 1, %s19
    %s36 = scalar_select %p33, %s35, %s19
    %p37 = scmp.ge.s32.totalorder %s36, 2
    %s38 = scalar_select %p37, 0, %s36
    %s39 = ssub.s32 %s19, %s38
    %s40 = ssub.s32 %s20, %s34
    %s41 = sor.u32 %s39, %s40
    %p42 = scmp.eq.s32.totalorder %s41, 0
    %s44 = sadd.s32 %s43, 1
    %s45 = scalar_select %p42, %s43, %s44
    %p48 = pneg %p42
    %p49 = scmp.eq.s32.totalorder %s12, 7
    %p50 = por %p48, %p49
    %p51 = scmp.ne.s32.totalorder %s43, %s46
    %p52 = scmp.eq.s32.totalorder %s12, 0
    %p53 = por %p51, %p52
    %p54 = scmp.ne.s32.totalorder %s43, %s46
    %p55 = scmp.eq.s32.totalorder %s17, 7
    %p56 = por %p54, %p55
    %p57 = scmp.ne.s32.totalorder %s46, %s47
    %p58 = scmp.eq.s32.totalorder %s17, 0
    %p59 = por %p57, %p58
    %p60 = scmp.ne.s32.totalorder %s46, %s47
    %p61 = scmp.eq.s32.totalorder %s18, 7
    %p62 = por %p60, %p61
    %p64 = scmp.ne.s32.totalorder %s47, %s63
    %p65 = scmp.eq.s32.totalorder %s18, 0
    %p66 = por %p64, %p65
    %s67 = ssub.s32 %s19, %s38
    %s68 = ssub.s32 %s21, %s30
    %s69 = sor.u32 %s67, %s68
    %p70 = scmp.eq.s32.totalorder %s69, 0
    %s72 = sadd.s32 %s71, 1
    %s73 = scalar_select %p70, %s71, %s72
    %p76 = pneg %p70
    %p77 = scmp.eq.s32.totalorder %s12, 7
    %p78 = por %p76, %p77
    %p79 = scmp.ne.s32.totalorder %s71, %s74
    %p80 = scmp.eq.s32.totalorder %s12, 0
    %p81 = por %p79, %p80
    %p82 = scmp.ne.s32.totalorder %s71, %s74
    %p83 = scmp.eq.s32.totalorder %s17, 7
    %p84 = por %p82, %p83
    %p85 = scmp.ne.s32.totalorder %s74, %s75
    %p86 = scmp.eq.s32.totalorder %s17, 0
    %p87 = por %p85, %p86
    %p88 = scmp.ne.s32.totalorder %s74, %s75
    %p89 = scmp.eq.s32.totalorder %s18, 7
    %p90 = por %p88, %p89
    %p92 = scmp.ne.s32.totalorder %s75, %s91
    %p93 = scmp.eq.s32.totalorder %s18, 0
    %p94 = por %p92, %p93
    %s96 = sadd.s32 %s95, 1
    %p99 = scmp.eq.s32.totalorder %s12, 7
    %p100 = scmp.ne.s32.totalorder %s95, %s97
    %p101 = scmp.eq.s32.totalorder %s12, 0
    %p102 = por %p100, %p101
    %p103 = scmp.ne.s32.totalorder %s95, %s97
    %p104 = scmp.eq.s32.totalorder %s17, 7
    %p105 = por %p103, %p104
    %p106 = scmp.ne.s32.totalorder %s97, %s98
    %p107 = scmp.eq.s32.totalorder %s17, 0
    %p108 = por %p106, %p107
    %p109 = scmp.ne.s32.totalorder %s97, %s98
    %p110 = scmp.eq.s32.totalorder %s18, 7
    %p111 = por %p109, %p110
    %p113 = scmp.ne.s32.totalorder %s98, %s112
    %p114 = scmp.eq.s32.totalorder %s18, 0
    %p115 = por %p113, %p114
    %s117 = sadd.s32 %s116, 1
    %p120 = scmp.eq.s32.totalorder %s12, 7
    %p121 = scmp.ne.s32.totalorder %s116, %s118
    %p122 = scmp.eq.s32.totalorder %s12, 0
    %p123 = por %p121, %p122
    %p124 = scmp.ne.s32.totalorder %s116, %s118
    %p125 = scmp.eq.s32.totalorder %s17, 7
    %p126 = por %p124, %p125
    %p127 = scmp.ne.s32.totalorder %s118, %s119
    %p128 = scmp.eq.s32.totalorder %s17, 0
    %p129 = por %p127, %p128
    %p130 = scmp.ne.s32.totalorder %s118, %s119
    %p131 = scmp.eq.s32.totalorder %s18, 7
    %p132 = por %p130, %p131
    %p134 = scmp.ne.s32.totalorder %s119, %s133
    %p135 = scmp.eq.s32.totalorder %s18, 0
    %p136 = por %p134, %p135
    %s138 = sadd.s32 %s137, 1
    %p141 = scmp.eq.s32.totalorder %s12, 7
    %p142 = scmp.ne.s32.totalorder %s137, %s139
    %p143 = scmp.eq.s32.totalorder %s12, 0
    %p144 = por %p142, %p143
    %p145 = scmp.ne.s32.totalorder %s137, %s139
    %p146 = scmp.eq.s32.totalorder %s17, 7
    %p147 = por %p145, %p146
    %p148 = scmp.ne.s32.totalorder %s139, %s140
    %p149 = scmp.eq.s32.totalorder %s17, 0
    %p150 = por %p148, %p149
    %p151 = scmp.ne.s32.totalorder %s139, %s140
    %p152 = scmp.eq.s32.totalorder %s18, 7
    %p153 = por %p151, %p152
    %p155 = scmp.ne.s32.totalorder %s140, %s154
    %p156 = scmp.eq.s32.totalorder %s18, 0
    %p157 = por %p155, %p156
    %s159 = sadd.s32 %s158, 1
    %p162 = scmp.eq.s32.totalorder %s12, 7
    %p163 = scmp.ne.s32.totalorder %s158, %s160
    %p164 = scmp.eq.s32.totalorder %s12, 0
    %p165 = por %p163, %p164
    %p166 = scmp.ne.s32.totalorder %s158, %s160
    %p167 = scmp.eq.s32.totalorder %s17, 7
    %p168 = por %p166, %p167
    %p169 = scmp.ne.s32.totalorder %s160, %s161
    %p170 = scmp.eq.s32.totalorder %s17, 0
    %p171 = por %p169, %p170
    %p172 = scmp.ne.s32.totalorder %s160, %s161
    %p173 = scmp.eq.s32.totalorder %s18, 7
    %p174 = por %p172, %p173
    %p176 = scmp.ne.s32.totalorder %s161, %s175
    %p177 = scmp.eq.s32.totalorder %s18, 0
    %p178 = por %p176, %p177
    %s179 = ssub.s32 %s19, %s38
    %s180 = ssub.s32 %s20, %s34
    %s181 = sor.u32 %s179, %s180
    %p182 = scmp.eq.s32.totalorder %s181, 0
    %s184 = sadd.s32 %s183, 1
    %s185 = scalar_select %p182, %s183, %s184
    %p188 = pneg %p182
    %p189 = scmp.eq.s32.totalorder %s12, 7
    %p190 = por %p188, %p189
    %p191 = scmp.ne.s32.totalorder %s183, %s186
    %p192 = scmp.eq.s32.totalorder %s12, 0
    %p193 = por %p191, %p192
    %p194 = scmp.ne.s32.totalorder %s183, %s186
    %p195 = scmp.eq.s32.totalorder %s17, 7
    %p196 = por %p194, %p195
    %p197 = scmp.ne.s32.totalorder %s186, %s187
    %p198 = scmp.eq.s32.totalorder %s17, 0
    %p199 = por %p197, %p198
    %p200 = scmp.ne.s32.totalorder %s186, %s187
    %p201 = scmp.eq.s32.totalorder %s18, 7
    %p202 = por %p200, %p201
    %p204 = scmp.ne.s32.totalorder %s187, %s203
    %p205 = scmp.eq.s32.totalorder %s18, 0
    %p206 = por %p204, %p205
    %p207 = scmp.le.s32.totalorder 1, %s12
    %p208 = scmp.lt.s32.totalorder %s12, 9
    %p209 = pnand %p207, %p208
    %p210 = pneg %p209
    // Predicated region
    $region9: #{tpu_custom_call.1} parent=5 // pred_check
      _
    $region10: #{tpu_custom_call.1} parent=5 // pred_check_branch
      %212 = sbr.rel (%p209) target = $region12
    $region11: #{tpu_custom_call.1} parent=5 // pred_region
      %s213 = ssub.s32 %s12, 1
      // Predicated region
      $region13: #{tpu_custom_call.1} parent=11 // pred_check
        %p214 = pneg %p108
      $region14: #{tpu_custom_call.1} parent=11 // pred_check_branch
        %216 = sbr.rel (%p214) target = $region16
      $region15: #{tpu_custom_call.1} parent=11 // pred_region
        _
      $region16: #{tpu_custom_call.1} parent=11 // pred_fallthru
        _
      // Predicated region
      $region17: #{tpu_custom_call.1} parent=11 // pred_check
        %p217 = pneg %p129
      $region18: #{tpu_custom_call.1} parent=11 // pred_check_branch
        %219 = sbr.rel (%p217) target = $region20
      $region19: #{tpu_custom_call.1} parent=11 // pred_region
        _
      $region20: #{tpu_custom_call.1} parent=11 // pred_fallthru
        _
      // Predicated region
      $region21: #{tpu_custom_call.1} parent=11 // pred_check
        %p220 = pneg %p150
      $region22: #{tpu_custom_call.1} parent=11 // pred_check_branch
        %222 = sbr.rel (%p220) target = $region24
      $region23: #{tpu_custom_call.1} parent=11 // pred_region
        _
      $region24: #{tpu_custom_call.1} parent=11 // pred_fallthru
        _
      // Predicated region
      $region25: #{tpu_custom_call.1} parent=11 // pred_check
        %p223 = pneg %p171
      $region26: #{tpu_custom_call.1} parent=11 // pred_check_branch
        %225 = sbr.rel (%p223) target = $region28
      $region27: #{tpu_custom_call.1} parent=11 // pred_region
        _
      $region28: #{tpu_custom_call.1} parent=11 // pred_fallthru
        _
    $region12: #{tpu_custom_call.1} parent=5 // pred_fallthru
      _
    %p226 = scmp.lt.s32.totalorder %s12, 8
    // Predicated region
    $region29: #{tpu_custom_call.1} parent=5 // pred_check
      %p227 = pneg %p226
    $region30: #{tpu_custom_call.1} parent=5 // pred_check_branch
      %229 = sbr.rel (%p227) target = $region32
    $region31: #{tpu_custom_call.1} parent=5 // pred_region
      // Predicated region
      $region33: #{tpu_custom_call.1} parent=31 // pred_check
        %p230 = pneg %p53
      $region34: #{tpu_custom_call.1} parent=31 // pred_check_branch
        %232 = sbr.rel (%p230) target = $region36
      $region35: #{tpu_custom_call.1} parent=31 // pred_region
        %s233 = smul.u32 16, %s20
        %p234 = scmp.lt.s32.totalorder %s19, 1
        %s235 = scalar_select %p234, %s19, 1
        %p236 = scmp.lt.s32.totalorder %s233, 31
        %s237 = scalar_select %p236, %s233, 31
        %s238 = smul.addr %s235, 32
        %s239 = sadd.s32 %s237, %s238
        %s240 = smul.addr %s239, 4
        %s241 = scalar_lea.vmem %s0, %s240
        %s242 = smul.u32 16, %s20
      $region36: #{tpu_custom_call.1} parent=31 // pred_fallthru
        _
      // Predicated region
      $region37: #{tpu_custom_call.1} parent=31 // pred_check
        %p243 = pneg %p81
      $region38: #{tpu_custom_call.1} parent=31 // pred_check_branch
        %245 = sbr.rel (%p243) target = $region40
      $region39: #{tpu_custom_call.1} parent=31 // pred_region
        %s246 = smul.u32 16, %s21
        %p247 = scmp.lt.s32.totalorder %s19, 1
        %s248 = scalar_select %p247, %s19, 1
        %p249 = scmp.lt.s32.totalorder %s246, 31
        %s250 = scalar_select %p249, %s246, 31
        %s251 = smul.addr %s248, 32
        %s252 = sadd.s32 %s250, %s251
        %s253 = smul.addr %s252, 4
        %s254 = scalar_lea.vmem %s1, %s253
        %s255 = smul.u32 16, %s21
      $region40: #{tpu_custom_call.1} parent=31 // pred_fallthru
        _
    $region32: #{tpu_custom_call.1} parent=5 // pred_fallthru
      _
    %p256 = scmp.le.s32.totalorder 1, %s12
    %p257 = scmp.lt.s32.totalorder %s12, 9
    %p258 = pnand %p256, %p257
    %p259 = pneg %p258
    // Predicated region
    $region41: #{tpu_custom_call.1} parent=5 // pred_check
      _
    $region42: #{tpu_custom_call.1} parent=5 // pred_check_branch
      %261 = sbr.rel (%p258) target = $region44
    $region43: #{tpu_custom_call.1} parent=5 // pred_region
      %s262 = ssub.s32 %s12, 1
      %s263 = smul.u32 16, %s23
      %p264 = scmp.lt.s32.totalorder %s22, 1
      %s265 = scalar_select %p264, %s22, 1
      %p266 = scmp.lt.s32.totalorder %s263, 31
      %s267 = scalar_select %p266, %s263, 31
      %s268 = smul.addr %s265, 32
      %s269 = sadd.s32 %s267, %s268
      %s270 = smul.addr %s269, 4
      %s271 = scalar_lea.vmem %s0, %s270
      %p272 = pneg %p59
      %p273 = pneg %p56
      %s274 = smul.u32 16, %s24
      %p275 = scmp.lt.s32.totalorder %s22, 1
      %s276 = scalar_select %p275, %s22, 1
      %p277 = scmp.lt.s32.totalorder %s274, 31
      %s278 = scalar_select %p277, %s274, 31
      %s279 = smul.addr %s276, 32
      %s280 = sadd.s32 %s278, %s279
      %s281 = smul.addr %s280, 4
      %s282 = scalar_lea.vmem %s1, %s281
      %p283 = pneg %p87
      %p284 = pneg %p84
      %p285 = pneg %p108
      %p286 = pneg %p105
      %p287 = pneg %p129
      %p288 = pneg %p126
      %p289 = pneg %p150
      %p290 = pneg %p147
      %p291 = pneg %p171
      %p292 = pneg %p168
      %p293 = pneg %p199
      %p294 = pneg %p196
      %s295 = smul.u32 16, %s23
      %p296 = scmp.lt.s32.totalorder %s22, 1
      %s297 = scalar_select %p296, %s22, 1
      %p298 = scmp.lt.s32.totalorder %s295, 31
      %s299 = scalar_select %p298, %s295, 31
      %s300 = smul.addr %s297, 32
      %s301 = sadd.s32 %s299, %s300
      %s302 = smul.addr %s301, 8
      %s303 = scalar_lea.vmem %s6, %s302
      %s304 = smul.u32 16, %s23
      %p305 = scmp.lt.s32.totalorder %s22, 1
      %s306 = scalar_select %p305, %s22, 1
      %p307 = scmp.lt.s32.totalorder %s304, 31
      %s308 = scalar_select %p307, %s304, 31
      %s309 = smul.addr %s306, 32
      %s310 = sadd.s32 %s308, %s309
      %s311 = smul.addr %s310, 4
      %s312 = scalar_lea.vmem %s0, %s311
      %s313 = smul.u32 16, %s23
      %s314 = smul.u32 16, %s24
      %p315 = scmp.lt.s32.totalorder %s22, 1
      %s316 = scalar_select %p315, %s22, 1
      %p317 = scmp.lt.s32.totalorder %s314, 31
      %s318 = scalar_select %p317, %s314, 31
      %s319 = smul.addr %s316, 32
      %s320 = sadd.s32 %s318, %s319
      %s321 = smul.addr %s320, 4
      %s322 = scalar_lea.vmem %s1, %s321
      %s323 = smul.u32 16, %s24
      %s324 = smul.u32 16, %s23
      %p325 = scmp.lt.s32.totalorder %s22, 1
      %s326 = scalar_select %p325, %s22, 1
      %p327 = scmp.lt.s32.totalorder %s324, 31
      %s328 = scalar_select %p327, %s324, 31
      %s329 = smul.addr %s326, 32
      %s330 = sadd.s32 %s328, %s329
      %s331 = smul.addr %s330, 8
      %s332 = scalar_lea.vmem %s6, %s331
      %s333 = smul.u32 16, %s23
      %p335 = scmp.eq.s32.totalorder %s24, 0
      // Predicated region
      $region45: #{tpu_custom_call.1} parent=43 // pred_check
        %p336 = pneg %p335
      $region46: #{tpu_custom_call.1} parent=43 // pred_check_branch
        %338 = sbr.rel (%p336) target = $region48
      $region47: #{tpu_custom_call.1} parent=43 // pred_region
        %v339 = vld [vmem:[%s312] sm:$0xf]
        %v340 = vld [vmem:[%s312 + $0x4] sm:$0xf]
        %v341 = vld [vmem:[%s312 + $0x8] sm:$0xf]
        %v342 = vld [vmem:[%s312 + $0xc] sm:$0xf]
        %v343 = vld [vmem:[%s312 + $0x10] sm:$0xf]
        %v344 = vld [vmem:[%s312 + $0x14] sm:$0xf]
        %v345 = vld [vmem:[%s312 + $0x18] sm:$0xf]
        %v346 = vld [vmem:[%s312 + $0x1c] sm:$0xf]
        %v347 = vld [vmem:[%s312 + $0x20] sm:$0xf]
        %v348 = vld [vmem:[%s312 + $0x24] sm:$0xf]
        %v349 = vld [vmem:[%s312 + $0x28] sm:$0xf]
        %v350 = vld [vmem:[%s312 + $0x2c] sm:$0xf]
        %v351 = vld [vmem:[%s312 + $0x30] sm:$0xf]
        %v352 = vld [vmem:[%s312 + $0x34] sm:$0xf]
        %v353 = vld [vmem:[%s312 + $0x38] sm:$0xf]
        %v354 = vld [vmem:[%s312 + $0x3c] sm:$0xf]
        %v355 = vld [vmem:[%s2] sm:$0x3]
        %v372 = vunpack.c.l.b16 %v339
        %v373 = vunpack.c.l.b16 %v340
        %v374 = vunpack.c.l.b16 %v341
        %v375 = vunpack.c.l.b16 %v342
        %v376 = vunpack.c.l.b16 %v343
        %v377 = vunpack.c.l.b16 %v344
        %v378 = vunpack.c.l.b16 %v345
        %v379 = vunpack.c.l.b16 %v346
        %v380 = vunpack.c.l.b16 %v347
        %v381 = vunpack.c.l.b16 %v348
        %v382 = vunpack.c.l.b16 %v349
        %v383 = vunpack.c.l.b16 %v350
        %v384 = vunpack.c.l.b16 %v351
        %v385 = vunpack.c.l.b16 %v352
        %v386 = vunpack.c.l.b16 %v353
        %v387 = vunpack.c.l.b16 %v354
        %v388 = vpack.c.b16 %v373, %v372
        %v389 = vpack.c.b16 %v375, %v374
        %v390 = vpack.c.b16 %v377, %v376
        %v391 = vpack.c.b16 %v379, %v378
        %v392 = vpack.c.b16 %v381, %v380
        %v393 = vpack.c.b16 %v383, %v382
        %v394 = vpack.c.b16 %v385, %v384
        %v395 = vpack.c.b16 %v387, %v386
        %vm396 = vcmask 31744
        %v398 = vsel %vm396, %v388, 0
        %v401 = vsel %vm396, %v389, 0
        %v404 = vsel %vm396, %v390, 0
        %v407 = vsel %vm396, %v391, 0
        %v410 = vsel %vm396, %v392, 0
        %v413 = vsel %vm396, %v393, 0
        %v416 = vsel %vm396, %v394, 0
        %v419 = vsel %vm396, %v395, 0
        %vm421 = vcmask 1041408
        %v423 = vsel %vm421, %v355, 0
        %425 = vmatprep.subr.bf16.mxu0 0
        %426 = vmatpush1.bf16.msra.mxu0 %v423
        %427 = vmatprep.subr.bf16.mxu0 0
        %428 = vmatpush1.bf16.msra.mxu0 0
        %429 = vmatprep.subr.bf16.mxu0 0
        %430 = vmatpush1.bf16.msra.mxu0 0
        %431 = vmatprep.subr.bf16.mxu0 0
        %432 = vmatpush1.bf16.msra.mxu0 0
        %433 = vmatprep.subr.bf16.mxu0 0
        %434 = vmatpush1.bf16.msra.mxu0 0
        %435 = vmatprep.subr.bf16.mxu0 0
        %436 = vmatpush1.bf16.msra.mxu0 0
        %437 = vmatprep.subr.bf16.mxu0 0
        %438 = vmatpush1.bf16.msra.mxu0 0
        %439 = vmatprep.subr.bf16.mxu0 0
        %440 = vmatpush1.bf16.msra.mxu0 0
        %441 = vmatprep.subr.bf16.mxu0 0
        %442 = vmatpush1.bf16.msra.mxu0 0
        %443 = vmatprep.subr.bf16.mxu0 0
        %444 = vmatpush1.bf16.msra.mxu0 0
        %445 = vmatprep.subr.bf16.mxu0 0
        %446 = vmatpush1.bf16.msra.mxu0 0
        %447 = vmatprep.subr.bf16.mxu0 0
        %448 = vmatpush1.bf16.msra.mxu0 0
        %449 = vmatprep.subr.bf16.mxu0 0
        %450 = vmatpush1.bf16.msra.mxu0 0
        %451 = vmatprep.subr.bf16.mxu0 0
        %452 = vmatpush1.bf16.msra.mxu0 0
        %453 = vmatprep.subr.bf16.mxu0 0
        %454 = vmatpush1.bf16.msra.mxu0 0
        %455 = vmatprep.subr.bf16.mxu0 0
        %456 = vmatpush1.bf16.msra.mxu0 0
        %457 = vmatprep.mubr.bf16.mxu0 0
        %458 = vmatmul.mubr.bf16.gmra.mrb[0].mxu0 %v398
        %v459 = vpop.f32.mrb[0].mxu0
        %v460 = vadd.f32 0.0, %v459
        %v461 = vpop.f32.mrb[0].mxu0
        %v462 = vpop.f32.mrb[0].mxu0
        %v463 = vadd.f32 0.0, %v462
        %v464 = vpop.f32.mrb[0].mxu0
        %465 = vmatprep.mubr.bf16.mxu0 0
        %466 = vmatmul.mubr.bf16.gmra.mrb[0].mxu0 %v401
        %v467 = vpop.f32.mrb[0].mxu0
        %v468 = vadd.f32 0.0, %v467
        %v469 = vpop.f32.mrb[0].mxu0
        %v470 = vpop.f32.mrb[0].mxu0
        %v471 = vadd.f32 0.0, %v470
        %v472 = vpop.f32.mrb[0].mxu0
        %473 = vmatprep.mubr.bf16.mxu0 0
        %474 = vmatmul.mubr.bf16.gmra.mrb[0].mxu0 %v404
        %v475 = vpop.f32.mrb[0].mxu0
        %v476 = vadd.f32 0.0, %v475
        %v477 = vpop.f32.mrb[0].mxu0
        %v478 = vpop.f32.mrb[0].mxu0
        %v479 = vadd.f32 0.0, %v478
        %v480 = vpop.f32.mrb[0].mxu0
        %481 = vmatprep.mubr.bf16.mxu0 0
        %482 = vmatmul.mubr.bf16.gmra.mrb[0].mxu0 %v407
        %v483 = vpop.f32.mrb[0].mxu0
        %v484 = vadd.f32 0.0, %v483
        %v485 = vpop.f32.mrb[0].mxu0
        %v486 = vpop.f32.mrb[0].mxu0
        %v487 = vadd.f32 0.0, %v486
        %v488 = vpop.f32.mrb[0].mxu0
        %489 = vmatprep.mubr.bf16.mxu0 0
        %490 = vmatmul.mubr.bf16.gmra.mrb[0].mxu0 %v410
        %v491 = vpop.f32.mrb[0].mxu0
        %v492 = vadd.f32 0.0, %v491
        %v493 = vpop.f32.mrb[0].mxu0
        %v494 = vpop.f32.mrb[0].mxu0
        %v495 = vadd.f32 0.0, %v494
        %v496 = vpop.f32.mrb[0].mxu0
        %497 = vmatprep.mubr.bf16.mxu0 0
        %498 = vmatmul.mubr.bf16.gmra.mrb[0].mxu0 %v413
        %v499 = vpop.f32.mrb[0].mxu0
        %v500 = vadd.f32 0.0, %v499
        %v501 = vpop.f32.mrb[0].mxu0
        %v502 = vpop.f32.mrb[0].mxu0
        %v503 = vadd.f32 0.0, %v502
        %v504 = vpop.f32.mrb[0].mxu0
        %505 = vmatprep.mubr.bf16.mxu0 0
        %506 = vmatmul.mubr.bf16.gmra.mrb[0].mxu0 %v416
        %v507 = vpop.f32.mrb[0].mxu0
        %v508 = vadd.f32 0.0, %v507
        %v509 = vpop.f32.mrb[0].mxu0
        %v510 = vpop.f32.mrb[0].mxu0
        %v511 = vadd.f32 0.0, %v510
        %v512 = vpop.f32.mrb[0].mxu0
        %513 = vmatprep.mubr.bf16.mxu0 0
        %514 = vmatmul.mubr.bf16.gmra.mrb[0].mxu0 %v419
        %v515 = vpop.f32.mrb[0].mxu0
        %v516 = vadd.f32 0.0, %v515
        %v517 = vpop.f32.mrb[0].mxu0
        %v518 = vpop.f32.mrb[0].mxu0
        %v519 = vadd.f32 0.0, %v518
        %v520 = vpop.f32.mrb[0].mxu0
        %521 = vdwg.mxu0
        %v522 = vpack.c.bf16 %v463, %v460
        %v523 = vpack.c.bf16 %v471, %v468
        %v524 = vpack.c.bf16 %v479, %v476
        %v525 = vpack.c.bf16 %v487, %v484
        %v526 = vpack.c.bf16 %v495, %v492
        %v527 = vpack.c.bf16 %v503, %v500
        %v528 = vpack.c.bf16 %v511, %v508
        %v529 = vpack.c.bf16 %v519, %v516
        %vm530 = vcmask 64512
        %531 = vst.msk [vmem:[#allocation2] sm:$0xff] %vm530, %v522
        %532 = vst.msk [vmem:[#allocation2 + $0x8] sm:$0xff] %vm530, %v523
        %533 = vst.msk [vmem:[#allocation2 + $0x10] sm:$0xff] %vm530, %v524
        %534 = vst.msk [vmem:[#allocation2 + $0x18] sm:$0xff] %vm530, %v525
        %535 = vst.msk [vmem:[#allocation2 + $0x20] sm:$0xff] %vm530, %v526
        %536 = vst.msk [vmem:[#allocation2 + $0x28] sm:$0xff] %vm530, %v527
        %537 = vst.msk [vmem:[#allocation2 + $0x30] sm:$0xff] %vm530, %v528
        %538 = vst.msk [vmem:[#allocation2 + $0x38] sm:$0xff] %vm530, %v529
        %vm539 = vcmask 7168
        %540 = vst.msk [vmem:[#allocation3] sm:$0xff] %vm539, -inf
        %541 = vst.msk [vmem:[#allocation3 + $0x8] sm:$0xff] %vm539, -inf
        %542 = vst.msk [vmem:[#allocation3 + $0x10] sm:$0xff] %vm539, -inf
        %543 = vst.msk [vmem:[#allocation3 + $0x18] sm:$0xff] %vm539, -inf
        %544 = vst.msk [vmem:[#allocation3 + $0x20] sm:$0xff] %vm539, -inf
        %545 = vst.msk [vmem:[#allocation3 + $0x28] sm:$0xff] %vm539, -inf
        %546 = vst.msk [vmem:[#allocation3 + $0x30] sm:$0xff] %vm539, -inf
        %547 = vst.msk [vmem:[#allocation3 + $0x38] sm:$0xff] %vm539, -inf
        %548 = vst.msk [vmem:[#allocation3 + $0x40] sm:$0xff] %vm539, -inf
        %549 = vst.msk [vmem:[#allocation3 + $0x48] sm:$0xff] %vm539, -inf
        %550 = vst.msk [vmem:[#allocation3 + $0x50] sm:$0xff] %vm539, -inf
        %551 = vst.msk [vmem:[#allocation3 + $0x58] sm:$0xff] %vm539, -inf
        %552 = vst.msk [vmem:[#allocation3 + $0x60] sm:$0xff] %vm539, -inf
        %553 = vst.msk [vmem:[#allocation3 + $0x68] sm:$0xff] %vm539, -inf
        %554 = vst.msk [vmem:[#allocation3 + $0x70] sm:$0xff] %vm539, -inf
        %555 = vst.msk [vmem:[#allocation3 + $0x78] sm:$0xff] %vm539, -inf
        %556 = vst.msk [vmem:[#allocation3 + $0x80] sm:$0xff] %vm539, -inf
        %557 = vst.msk [vmem:[#allocation3 + $0x88] sm:$0xff] %vm539, -inf
        %558 = vst.msk [vmem:[#allocation3 + $0x90] sm:$0xff] %vm539, -inf
        %559 = vst.msk [vmem:[#allocation3 + $0x98] sm:$0xff] %vm539, -inf
        %560 = vst.msk [vmem:[#allocation3 + $0xa0] sm:$0xff] %vm539, -inf
        %561 = vst.msk [vmem:[#allocation3 + $0xa8] sm:$0xff] %vm539, -inf
        %562 = vst.msk [vmem:[#allocation3 + $0xb0] sm:$0xff] %vm539, -inf
        %563 = vst.msk [vmem:[#allocation3 + $0xb8] sm:$0xff] %vm539, -inf
        %564 = vst.msk [vmem:[#allocation3 + $0xc0] sm:$0xff] %vm539, -inf
        %565 = vst.msk [vmem:[#allocation3 + $0xc8] sm:$0xff] %vm539, -inf
        %566 = vst.msk [vmem:[#allocation3 + $0xd0] sm:$0xff] %vm539, -inf
        %567 = vst.msk [vmem:[#allocation3 + $0xd8] sm:$0xff] %vm539, -inf
        %568 = vst.msk [vmem:[#allocation3 + $0xe0] sm:$0xff] %vm539, -inf
        %569 = vst.msk [vmem:[#allocation3 + $0xe8] sm:$0xff] %vm539, -inf
        %570 = vst.msk [vmem:[#allocation3 + $0xf0] sm:$0xff] %vm539, -inf
        %571 = vst.msk [vmem:[#allocation3 + $0xf8] sm:$0xff] %vm539, -inf
        %572 = vst.msk [vmem:[#allocation4] sm:$0xff] %vm539, 0.0
        %573 = vst.msk [vmem:[#allocation4 + $0x8] sm:$0xff] %vm539, 0.0
        %574 = vst.msk [vmem:[#allocation4 + $0x10] sm:$0xff] %vm539, 0.0
        %575 = vst.msk [vmem:[#allocation4 + $0x18] sm:$0xff] %vm539, 0.0
        %576 = vst.msk [vmem:[#allocation4 + $0x20] sm:$0xff] %vm539, 0.0
        %577 = vst.msk [vmem:[#allocation4 + $0x28] sm:$0xff] %vm539, 0.0
        %578 = vst.msk [vmem:[#allocation4 + $0x30] sm:$0xff] %vm539, 0.0
        %579 = vst.msk [vmem:[#allocation4 + $0x38] sm:$0xff] %vm539, 0.0
        %580 = vst.msk [vmem:[#allocation4 + $0x40] sm:$0xff] %vm539, 0.0
        %581 = vst.msk [vmem:[#allocation4 + $0x48] sm:$0xff] %vm539, 0.0
        %582 = vst.msk [vmem:[#allocation4 + $0x50] sm:$0xff] %vm539, 0.0
        %583 = vst.msk [vmem:[#allocation4 + $0x58] sm:$0xff] %vm539, 0.0
        %584 = vst.msk [vmem:[#allocation4 + $0x60] sm:$0xff] %vm539, 0.0
        %585 = vst.msk [vmem:[#allocation4 + $0x68] sm:$0xff] %vm539, 0.0
        %586 = vst.msk [vmem:[#allocation4 + $0x70] sm:$0xff] %vm539, 0.0
        %587 = vst.msk [vmem:[#allocation4 + $0x78] sm:$0xff] %vm539, 0.0
        %588 = vst.msk [vmem:[#allocation4 + $0x80] sm:$0xff] %vm539, 0.0
        %589 = vst.msk [vmem:[#allocation4 + $0x88] sm:$0xff] %vm539, 0.0
        %590 = vst.msk [vmem:[#allocation4 + $0x90] sm:$0xff] %vm539, 0.0
        %591 = vst.msk [vmem:[#allocation4 + $0x98] sm:$0xff] %vm539, 0.0
        %592 = vst.msk [vmem:[#allocation4 + $0xa0] sm:$0xff] %vm539, 0.0
        %593 = vst.msk [vmem:[#allocation4 + $0xa8] sm:$0xff] %vm539, 0.0
        %594 = vst.msk [vmem:[#allocation4 + $0xb0] sm:$0xff] %vm539, 0.0
        %595 = vst.msk [vmem:[#allocation4 + $0xb8] sm:$0xff] %vm539, 0.0
        %596 = vst.msk [vmem:[#allocation4 + $0xc0] sm:$0xff] %vm539, 0.0
        %597 = vst.msk [vmem:[#allocation4 + $0xc8] sm:$0xff] %vm539, 0.0
        %598 = vst.msk [vmem:[#allocation4 + $0xd0] sm:$0xff] %vm539, 0.0
        %599 = vst.msk [vmem:[#allocation4 + $0xd8] sm:$0xff] %vm539, 0.0
        %600 = vst.msk [vmem:[#allocation4 + $0xe0] sm:$0xff] %vm539, 0.0
        %601 = vst.msk [vmem:[#allocation4 + $0xe8] sm:$0xff] %vm539, 0.0
        %602 = vst.msk [vmem:[#allocation4 + $0xf0] sm:$0xff] %vm539, 0.0
        %603 = vst.msk [vmem:[#allocation4 + $0xf8] sm:$0xff] %vm539, 0.0
        %604 = vst.msk [vmem:[#allocation5] sm:$0xff] %vm396, 0.0
        %605 = vst.msk [vmem:[#allocation5 + $0x8] sm:$0xff] %vm396, 0.0
        %606 = vst.msk [vmem:[#allocation5 + $0x10] sm:$0xff] %vm396, 0.0
        %607 = vst.msk [vmem:[#allocation5 + $0x18] sm:$0xff] %vm396, 0.0
        %608 = vst.msk [vmem:[#allocation5 + $0x20] sm:$0xff] %vm396, 0.0
        %609 = vst.msk [vmem:[#allocation5 + $0x28] sm:$0xff] %vm396, 0.0
        %610 = vst.msk [vmem:[#allocation5 + $0x30] sm:$0xff] %vm396, 0.0
        %611 = vst.msk [vmem:[#allocation5 + $0x38] sm:$0xff] %vm396, 0.0
        %612 = vst.msk [vmem:[#allocation5 + $0x40] sm:$0xff] %vm396, 0.0
        %613 = vst.msk [vmem:[#allocation5 + $0x48] sm:$0xff] %vm396, 0.0
        %614 = vst.msk [vmem:[#allocation5 + $0x50] sm:$0xff] %vm396, 0.0
        %615 = vst.msk [vmem:[#allocation5 + $0x58] sm:$0xff] %vm396, 0.0
        %616 = vst.msk [vmem:[#allocation5 + $0x60] sm:$0xff] %vm396, 0.0
        %617 = vst.msk [vmem:[#allocation5 + $0x68] sm:$0xff] %vm396, 0.0
        %618 = vst.msk [vmem:[#allocation5 + $0x70] sm:$0xff] %vm396, 0.0
        %619 = vst.msk [vmem:[#allocation5 + $0x78] sm:$0xff] %vm396, 0.0
        %620 = vst.msk [vmem:[#allocation5 + $0x80] sm:$0xff] %vm396, 0.0
        %621 = vst.msk [vmem:[#allocation5 + $0x88] sm:$0xff] %vm396, 0.0
        %622 = vst.msk [vmem:[#allocation5 + $0x90] sm:$0xff] %vm396, 0.0
        %623 = vst.msk [vmem:[#allocation5 + $0x98] sm:$0xff] %vm396, 0.0
        %624 = vst.msk [vmem:[#allocation5 + $0xa0] sm:$0xff] %vm396, 0.0
        %625 = vst.msk [vmem:[#allocation5 + $0xa8] sm:$0xff] %vm396, 0.0
        %626 = vst.msk [vmem:[#allocation5 + $0xb0] sm:$0xff] %vm396, 0.0
        %627 = vst.msk [vmem:[#allocation5 + $0xb8] sm:$0xff] %vm396, 0.0
        %628 = vst.msk [vmem:[#allocation5 + $0xc0] sm:$0xff] %vm396, 0.0
        %629 = vst.msk [vmem:[#allocation5 + $0xc8] sm:$0xff] %vm396, 0.0
        %630 = vst.msk [vmem:[#allocation5 + $0xd0] sm:$0xff] %vm396, 0.0
        %631 = vst.msk [vmem:[#allocation5 + $0xd8] sm:$0xff] %vm396, 0.0
        %632 = vst.msk [vmem:[#allocation5 + $0xe0] sm:$0xff] %vm396, 0.0
        %633 = vst.msk [vmem:[#allocation5 + $0xe8] sm:$0xff] %vm396, 0.0
        %634 = vst.msk [vmem:[#allocation5 + $0xf0] sm:$0xff] %vm396, 0.0
        %635 = vst.msk [vmem:[#allocation5 + $0xf8] sm:$0xff] %vm396, 0.0
      $region48: #{tpu_custom_call.1} parent=43 // pred_fallthru
        _
      %v636 = vld [vmem:[%s322] sm:$0xf]
      %v637 = vld [vmem:[%s322 + $0x4] sm:$0xf]
      %v638 = vld [vmem:[%s322 + $0x8] sm:$0xf]
      %v639 = vld [vmem:[%s322 + $0xc] sm:$0xf]
      %v640 = vld [vmem:[%s322 + $0x10] sm:$0xf]
      %v641 = vld [vmem:[%s322 + $0x14] sm:$0xf]
      %v642 = vld [vmem:[%s322 + $0x18] sm:$0xf]
      %v643 = vld [vmem:[%s322 + $0x1c] sm:$0xf]
      %v644 = vld [vmem:[%s322 + $0x20] sm:$0xf]
      %v645 = vld [vmem:[%s322 + $0x24] sm:$0xf]
      %v646 = vld [vmem:[%s322 + $0x28] sm:$0xf]
      %v647 = vld [vmem:[%s322 + $0x2c] sm:$0xf]
      %v648 = vld [vmem:[%s322 + $0x30] sm:$0xf]
      %v649 = vld [vmem:[%s322 + $0x34] sm:$0xf]
      %v650 = vld [vmem:[%s322 + $0x38] sm:$0xf]
      %v651 = vld [vmem:[%s322 + $0x3c] sm:$0xf]
      %v652 = vld [vmem:[%s3] sm:$0x3]
      %v669 = vunpack.c.l.b16 %v636
      %v670 = vunpack.c.l.b16 %v637
      %v671 = vunpack.c.l.b16 %v638
      %v672 = vunpack.c.l.b16 %v639
      %v673 = vunpack.c.l.b16 %v640
      %v674 = vunpack.c.l.b16 %v641
      %v675 = vunpack.c.l.b16 %v642
      %v676 = vunpack.c.l.b16 %v643
      %v677 = vunpack.c.l.b16 %v644
      %v678 = vunpack.c.l.b16 %v645
      %v679 = vunpack.c.l.b16 %v646
      %v680 = vunpack.c.l.b16 %v647
      %v681 = vunpack.c.l.b16 %v648
      %v682 = vunpack.c.l.b16 %v649
      %v683 = vunpack.c.l.b16 %v650
      %v684 = vunpack.c.l.b16 %v651
      %v685 = vpack.c.b16 %v670, %v669
      %v686 = vpack.c.b16 %v672, %v671
      %v687 = vpack.c.b16 %v674, %v673
      %v688 = vpack.c.b16 %v676, %v675
      %v689 = vpack.c.b16 %v678, %v677
      %v690 = vpack.c.b16 %v680, %v679
      %v691 = vpack.c.b16 %v682, %v681
      %v692 = vpack.c.b16 %v684, %v683
      %vm693 = vcmask 31744
      %v695 = vsel %vm693, %v685, 0
      %v698 = vsel %vm693, %v686, 0
      %v701 = vsel %vm693, %v687, 0
      %v704 = vsel %vm693, %v688, 0
      %v707 = vsel %vm693, %v689, 0
      %v710 = vsel %vm693, %v690, 0
      %v713 = vsel %vm693, %v691, 0
      %v716 = vsel %vm693, %v692, 0
      %vm718 = vcmask 1041408
      %v720 = vsel %vm718, %v652, 0
      %722 = vmatprep.subr.bf16.mxu0 0
      %723 = vmatpush1.bf16.msra.mxu0 %v720
      %724 = vmatprep.subr.bf16.mxu0 0
      %725 = vmatpush1.bf16.msra.mxu0 0
      %726 = vmatprep.subr.bf16.mxu0 0
      %727 = vmatpush1.bf16.msra.mxu0 0
      %728 = vmatprep.subr.bf16.mxu0 0
      %729 = vmatpush1.bf16.msra.mxu0 0
      %730 = vmatprep.subr.bf16.mxu0 0
      %731 = vmatpush1.bf16.msra.mxu0 0
      %732 = vmatprep.subr.bf16.mxu0 0
      %733 = vmatpush1.bf16.msra.mxu0 0
      %734 = vmatprep.subr.bf16.mxu0 0
      %735 = vmatpush1.bf16.msra.mxu0 0
      %736 = vmatprep.subr.bf16.mxu0 0
      %737 = vmatpush1.bf16.msra.mxu0 0
      %738 = vmatprep.subr.bf16.mxu0 0
      %739 = vmatpush1.bf16.msra.mxu0 0
      %740 = vmatprep.subr.bf16.mxu0 0
      %741 = vmatpush1.bf16.msra.mxu0 0
      %742 = vmatprep.subr.bf16.mxu0 0
      %743 = vmatpush1.bf16.msra.mxu0 0
      %744 = vmatprep.subr.bf16.mxu0 0
      %745 = vmatpush1.bf16.msra.mxu0 0
      %746 = vmatprep.subr.bf16.mxu0 0
      %747 = vmatpush1.bf16.msra.mxu0 0
      %748 = vmatprep.subr.bf16.mxu0 0
      %749 = vmatpush1.bf16.msra.mxu0 0
      %750 = vmatprep.subr.bf16.mxu0 0
      %751 = vmatpush1.bf16.msra.mxu0 0
      %752 = vmatprep.subr.bf16.mxu0 0
      %753 = vmatpush1.bf16.msra.mxu0 0
      %754 = vmatprep.mubr.bf16.mxu0 0
      %755 = vmatmul.mubr.bf16.gmra.mrb[0].mxu0 %v695
      %v756 = vpop.f32.mrb[0].mxu0
      %v757 = vadd.f32 0.0, %v756
      %v758 = vpop.f32.mrb[0].mxu0
      %v759 = vpop.f32.mrb[0].mxu0
      %v760 = vadd.f32 0.0, %v759
      %v761 = vpop.f32.mrb[0].mxu0
      %762 = vmatprep.mubr.bf16.mxu0 0
      %763 = vmatmul.mubr.bf16.gmra.mrb[0].mxu0 %v698
      %v764 = vpop.f32.mrb[0].mxu0
      %v765 = vadd.f32 0.0, %v764
      %v766 = vpop.f32.mrb[0].mxu0
      %v767 = vpop.f32.mrb[0].mxu0
      %v768 = vadd.f32 0.0, %v767
      %v769 = vpop.f32.mrb[0].mxu0
      %770 = vmatprep.mubr.bf16.mxu0 0
      %771 = vmatmul.mubr.bf16.gmra.mrb[0].mxu0 %v701
      %v772 = vpop.f32.mrb[0].mxu0
      %v773 = vadd.f32 0.0, %v772
      %v774 = vpop.f32.mrb[0].mxu0
      %v775 = vpop.f32.mrb[0].mxu0
      %v776 = vadd.f32 0.0, %v775
      %v777 = vpop.f32.mrb[0].mxu0
      %778 = vmatprep.mubr.bf16.mxu0 0
      %779 = vmatmul.mubr.bf16.gmra.mrb[0].mxu0 %v704
      %v780 = vpop.f32.mrb[0].mxu0
      %v781 = vadd.f32 0.0, %v780
      %v782 = vpop.f32.mrb[0].mxu0
      %v783 = vpop.f32.mrb[0].mxu0
      %v784 = vadd.f32 0.0, %v783
      %v785 = vpop.f32.mrb[0].mxu0
      %786 = vmatprep.mubr.bf16.mxu0 0
      %787 = vmatmul.mubr.bf16.gmra.mrb[0].mxu0 %v707
      %v788 = vpop.f32.mrb[0].mxu0
      %v789 = vadd.f32 0.0, %v788
      %v790 = vpop.f32.mrb[0].mxu0
      %v791 = vpop.f32.mrb[0].mxu0
      %v792 = vadd.f32 0.0, %v791
      %v793 = vpop.f32.mrb[0].mxu0
      %794 = vmatprep.mubr.bf16.mxu0 0
      %795 = vmatmul.mubr.bf16.gmra.mrb[0].mxu0 %v710
      %v796 = vpop.f32.mrb[0].mxu0
      %v797 = vadd.f32 0.0, %v796
      %v798 = vpop.f32.mrb[0].mxu0
      %v799 = vpop.f32.mrb[0].mxu0
      %v800 = vadd.f32 0.0, %v799
      %v801 = vpop.f32.mrb[0].mxu0
      %802 = vmatprep.mubr.bf16.mxu0 0
      %803 = vmatmul.mubr.bf16.gmra.mrb[0].mxu0 %v713
      %v804 = vpop.f32.mrb[0].mxu0
      %v805 = vadd.f32 0.0, %v804
      %v806 = vpop.f32.mrb[0].mxu0
      %v807 = vpop.f32.mrb[0].mxu0
      %v808 = vadd.f32 0.0, %v807
      %v809 = vpop.f32.mrb[0].mxu0
      %810 = vmatprep.mubr.bf16.mxu0 0
      %811 = vmatmul.mubr.bf16.gmra.mrb[0].mxu0 %v716
      %v812 = vpop.f32.mrb[0].mxu0
      %v813 = vadd.f32 0.0, %v812
      %v814 = vpop.f32.mrb[0].mxu0
      %v815 = vpop.f32.mrb[0].mxu0
      %v816 = vadd.f32 0.0, %v815
      %v817 = vpop.f32.mrb[0].mxu0
      %818 = vdwg.mxu0
      %v819 = vpack.c.bf16 %v760, %v757
      %v820 = vpack.c.bf16 %v768, %v765
      %v821 = vpack.c.bf16 %v776, %v773
      %v822 = vpack.c.bf16 %v784, %v781
      %v823 = vpack.c.bf16 %v792, %v789
      %v824 = vpack.c.bf16 %v800, %v797
      %v825 = vpack.c.bf16 %v808, %v805
      %v826 = vpack.c.bf16 %v816, %v813
      %v827 = vld [vmem:[#allocation2] sm:$0xff]
      %v828 = vld [vmem:[#allocation2 + $0x8] sm:$0xff]
      %v829 = vld [vmem:[#allocation2 + $0x10] sm:$0xff]
      %v830 = vld [vmem:[#allocation2 + $0x18] sm:$0xff]
      %v831 = vld [vmem:[#allocation2 + $0x20] sm:$0xff]
      %v832 = vld [vmem:[#allocation2 + $0x28] sm:$0xff]
      %v833 = vld [vmem:[#allocation2 + $0x30] sm:$0xff]
      %v834 = vld [vmem:[#allocation2 + $0x38] sm:$0xff]
      %v836 = vsel %vm693, %v827, 0
      %v839 = vsel %vm693, %v828, 0
      %v842 = vsel %vm693, %v829, 0
      %v845 = vsel %vm693, %v830, 0
      %v848 = vsel %vm693, %v831, 0
      %v851 = vsel %vm693, %v832, 0
      %v854 = vsel %vm693, %v833, 0
      %v857 = vsel %vm693, %v834, 0
      %v860 = vsel %vm693, %v819, 0
      %v863 = vsel %vm693, %v820, 0
      %v866 = vsel %vm693, %v821, 0
      %v869 = vsel %vm693, %v822, 0
      %v872 = vsel %vm693, %v823, 0
      %v875 = vsel %vm693, %v824, 0
      %v878 = vsel %vm693, %v825, 0
      %v881 = vsel %vm693, %v826, 0
      %883 = vmatprep.subr.bf16.mxu0 0
      %884 = vmatpush1.bf16.xpose.msra.mxu0 %v860
      %885 = vmatprep.subr.bf16.mxu0 0
      %886 = vmatpush1.bf16.xpose.msra.mxu0 %v863
      %887 = vmatprep.subr.bf16.mxu0 0
      %888 = vmatpush1.bf16.xpose.msra.mxu0 %v866
      %889 = vmatprep.subr.bf16.mxu0 0
      %890 = vmatpush1.bf16.xpose.msra.mxu0 %v869
      %891 = vmatprep.subr.bf16.mxu0 0
      %892 = vmatpush1.bf16.xpose.msra.mxu0 %v872
      %893 = vmatprep.subr.bf16.mxu0 0
      %894 = vmatpush1.bf16.xpose.msra.mxu0 %v875
      %895 = vmatprep.subr.bf16.mxu0 0
      %896 = vmatpush1.bf16.xpose.msra.mxu0 %v878
      %897 = vmatprep.subr.bf16.mxu0 0
      %898 = vmatpush1.bf16.xpose.msra.mxu0 %v881
      %899 = vmatprep.subr.bf16.mxu0 0
      %900 = vmatpush1.bf16.xpose.msra.mxu0 0
      %901 = vmatprep.subr.bf16.mxu0 0
      %902 = vmatpush1.bf16.xpose.msra.mxu0 0
      %903 = vmatprep.subr.bf16.mxu0 0
      %904 = vmatpush1.bf16.xpose.msra.mxu0 0
      %905 = vmatprep.subr.bf16.mxu0 0
      %906 = vmatpush1.bf16.xpose.msra.mxu0 0
      %907 = vmatprep.subr.bf16.mxu0 0
      %908 = vmatpush1.bf16.xpose.msra.mxu0 0
      %909 = vmatprep.subr.bf16.mxu0 0
      %910 = vmatpush1.bf16.xpose.msra.mxu0 0
      %911 = vmatprep.subr.bf16.mxu0 0
      %912 = vmatpush1.bf16.xpose.msra.mxu0 0
      %913 = vmatprep.subr.bf16.mxu0 0
      %914 = vmatpush1.bf16.xpose.msra.mxu0 0
      %915 = vmatprep.mubr.bf16.mxu0 0
      %916 = vmatmul.mubr.bf16.gmra.mrb[0].mxu0 %v836
      %v917 = vpop.f32.mrb[0].mxu0
      %v918 = vadd.f32 0.0, %v917
      %v919 = vpop.f32.mrb[0].mxu0
      %v920 = vpop.f32.mrb[0].mxu0
      %v921 = vadd.f32 0.0, %v920
      %v922 = vpop.f32.mrb[0].mxu0
      %923 = vmatprep.mubr.bf16.mxu0 0
      %924 = vmatmul.mubr.bf16.gmra.mrb[0].mxu0 %v839
      %v925 = vpop.f32.mrb[0].mxu0
      %v926 = vadd.f32 0.0, %v925
      %v927 = vpop.f32.mrb[0].mxu0
      %v928 = vpop.f32.mrb[0].mxu0
      %v929 = vadd.f32 0.0, %v928
      %v930 = vpop.f32.mrb[0].mxu0
      %931 = vmatprep.mubr.bf16.mxu0 0
      %932 = vmatmul.mubr.bf16.gmra.mrb[0].mxu0 %v842
      %v933 = vpop.f32.mrb[0].mxu0
      %v934 = vadd.f32 0.0, %v933
      %v935 = vpop.f32.mrb[0].mxu0
      %v936 = vpop.f32.mrb[0].mxu0
      %v937 = vadd.f32 0.0, %v936
      %v938 = vpop.f32.mrb[0].mxu0
      %939 = vmatprep.mubr.bf16.mxu0 0
      %940 = vmatmul.mubr.bf16.gmra.mrb[0].mxu0 %v845
      %v941 = vpop.f32.mrb[0].mxu0
      %v942 = vadd.f32 0.0, %v941
      %v943 = vpop.f32.mrb[0].mxu0
      %v944 = vpop.f32.mrb[0].mxu0
      %v945 = vadd.f32 0.0, %v944
      %v946 = vpop.f32.mrb[0].mxu0
      %947 = vmatprep.mubr.bf16.mxu0 0
      %948 = vmatmul.mubr.bf16.gmra.mrb[0].mxu0 %v848
      %v949 = vpop.f32.mrb[0].mxu0
      %v950 = vadd.f32 0.0, %v949
      %v951 = vpop.f32.mrb[0].mxu0
      %v952 = vpop.f32.mrb[0].mxu0
      %v953 = vadd.f32 0.0, %v952
      %v954 = vpop.f32.mrb[0].mxu0
      %955 = vmatprep.mubr.bf16.mxu0 0
      %956 = vmatmul.mubr.bf16.gmra.mrb[0].mxu0 %v851
      %v957 = vpop.f32.mrb[0].mxu0
      %v958 = vadd.f32 0.0, %v957
      %v959 = vpop.f32.mrb[0].mxu0
      %v960 = vpop.f32.mrb[0].mxu0
      %v961 = vadd.f32 0.0, %v960
      %v962 = vpop.f32.mrb[0].mxu0
      %963 = vmatprep.mubr.bf16.mxu0 0
      %964 = vmatmul.mubr.bf16.gmra.mrb[0].mxu0 %v854
      %v965 = vpop.f32.mrb[0].mxu0
      %v966 = vadd.f32 0.0, %v965
      %v967 = vpop.f32.mrb[0].mxu0
      %v968 = vpop.f32.mrb[0].mxu0
      %v969 = vadd.f32 0.0, %v968
      %v970 = vpop.f32.mrb[0].mxu0
      %971 = vmatprep.mubr.bf16.mxu0 0
      %972 = vmatmul.mubr.bf16.gmra.mrb[0].mxu0 %v857
      %v973 = vpop.f32.mrb[0].mxu0
      %v974 = vadd.f32 0.0, %v973
      %v975 = vpop.f32.mrb[0].mxu0
      %v976 = vpop.f32.mrb[0].mxu0
      %v977 = vadd.f32 0.0, %v976
      %v978 = vpop.f32.mrb[0].mxu0
      %979 = vdwg.mxu0
      %v980 = vld [vmem:[#allocation3] sm:$0xff]
      %v981 = vld [vmem:[#allocation3 + $0x8] sm:$0xff]
      %v982 = vld [vmem:[#allocation3 + $0x10] sm:$0xff]
      %v983 = vld [vmem:[#allocation3 + $0x18] sm:$0xff]
      %v984 = vld [vmem:[#allocation3 + $0x20] sm:$0xff]
      %v985 = vld [vmem:[#allocation3 + $0x28] sm:$0xff]
      %v986 = vld [vmem:[#allocation3 + $0x30] sm:$0xff]
      %v987 = vld [vmem:[#allocation3 + $0x38] sm:$0xff]
      %v988 = vld [vmem:[#allocation3 + $0x40] sm:$0xff]
      %v989 = vld [vmem:[#allocation3 + $0x48] sm:$0xff]
      %v990 = vld [vmem:[#allocation3 + $0x50] sm:$0xff]
      %v991 = vld [vmem:[#allocation3 + $0x58] sm:$0xff]
      %v992 = vld [vmem:[#allocation3 + $0x60] sm:$0xff]
      %v993 = vld [vmem:[#allocation3 + $0x68] sm:$0xff]
      %v994 = vld [vmem:[#allocation3 + $0x70] sm:$0xff]
      %v995 = vld [vmem:[#allocation3 + $0x78] sm:$0xff]
      %996 = vmax.xlane.f32.xlu0 %v918
      %v997 = vpop.xlane.xlu0 %996
      %998 = vmax.xlane.f32.xlu0 %v921
      %v999 = vpop.xlane.xlu0 %998
      %1000 = vmax.xlane.f32.xlu0 %v926
      %v1001 = vpop.xlane.xlu0 %1000
      %1002 = vmax.xlane.f32.xlu0 %v929
      %v1003 = vpop.xlane.xlu0 %1002
      %1004 = vmax.xlane.f32.xlu0 %v934
      %v1005 = vpop.xlane.xlu0 %1004
      %1006 = vmax.xlane.f32.xlu0 %v937
      %v1007 = vpop.xlane.xlu0 %1006
      %1008 = vmax.xlane.f32.xlu0 %v942
      %v1009 = vpop.xlane.xlu0 %1008
      %1010 = vmax.xlane.f32.xlu0 %v945
      %v1011 = vpop.xlane.xlu0 %1010
      %1012 = vmax.xlane.f32.xlu0 %v950
      %v1013 = vpop.xlane.xlu0 %1012
      %1014 = vmax.xlane.f32.xlu0 %v953
      %v1015 = vpop.xlane.xlu0 %1014
      %1016 = vmax.xlane.f32.xlu0 %v958
      %v1017 = vpop.xlane.xlu0 %1016
      %1018 = vmax.xlane.f32.xlu0 %v961
      %v1019 = vpop.xlane.xlu0 %1018
      %1020 = vmax.xlane.f32.xlu0 %v966
      %v1021 = vpop.xlane.xlu0 %1020
      %1022 = vmax.xlane.f32.xlu0 %v969
      %v1023 = vpop.xlane.xlu0 %1022
      %1024 = vmax.xlane.f32.xlu0 %v974
      %v1025 = vpop.xlane.xlu0 %1024
      %1026 = vmax.xlane.f32.xlu0 %v977
      %v1027 = vpop.xlane.xlu0 %1026
      %v1028 = vmax.f32 %v980, %v997
      %v1029 = vmax.f32 %v981, %v999
      %v1030 = vmax.f32 %v982, %v1001
      %v1031 = vmax.f32 %v983, %v1003
      %v1032 = vmax.f32 %v984, %v1005
      %v1033 = vmax.f32 %v985, %v1007
      %v1034 = vmax.f32 %v986, %v1009
      %v1035 = vmax.f32 %v987, %v1011
      %v1036 = vmax.f32 %v988, %v1013
      %v1037 = vmax.f32 %v989, %v1015
      %v1038 = vmax.f32 %v990, %v1017
      %v1039 = vmax.f32 %v991, %v1019
      %v1040 = vmax.f32 %v992, %v1021
      %v1041 = vmax.f32 %v993, %v1023
      %v1042 = vmax.f32 %v994, %v1025
      %v1043 = vmax.f32 %v995, %v1027
      %v1044 = vsub.f32 %v980, %v1028
      %v1045 = vsub.f32 %v981, %v1029
      %v1046 = vsub.f32 %v982, %v1030
      %v1047 = vsub.f32 %v983, %v1031
      %v1048 = vsub.f32 %v984, %v1032
      %v1049 = vsub.f32 %v985, %v1033
      %v1050 = vsub.f32 %v986, %v1034
      %v1051 = vsub.f32 %v987, %v1035
      %v1052 = vsub.f32 %v988, %v1036
      %v1053 = vsub.f32 %v989, %v1037
      %v1054 = vsub.f32 %v990, %v1038
      %v1055 = vsub.f32 %v991, %v1039
      %v1056 = vsub.f32 %v992, %v1040
      %v1057 = vsub.f32 %v993, %v1041
      %v1058 = vsub.f32 %v994, %v1042
      %v1059 = vsub.f32 %v995, %v1043
      %v1060 = vmul.f32 %v1044, 1.442695
      %v1061 = vpow.pop %v1060
      %v1062 = vmul.f32 %v1045, 1.442695
      %v1063 = vpow.pop %v1062
      %v1064 = vmul.f32 %v1046, 1.442695
      %v1065 = vpow.pop %v1064
      %v1066 = vmul.f32 %v1047, 1.442695
      %v1067 = vpow.pop %v1066
      %v1068 = vmul.f32 %v1048, 1.442695
      %v1069 = vpow.pop %v1068
      %v1070 = vmul.f32 %v1049, 1.442695
      %v1071 = vpow.pop %v1070
      %v1072 = vmul.f32 %v1050, 1.442695
      %v1073 = vpow.pop %v1072
      %v1074 = vmul.f32 %v1051, 1.442695
      %v1075 = vpow.pop %v1074
      %v1076 = vmul.f32 %v1052, 1.442695
      %v1077 = vpow.pop %v1076
      %v1078 = vmul.f32 %v1053, 1.442695
      %v1079 = vpow.pop %v1078
      %v1080 = vmul.f32 %v1054, 1.442695
      %v1081 = vpow.pop %v1080
      %v1082 = vmul.f32 %v1055, 1.442695
      %v1083 = vpow.pop %v1082
      %v1084 = vmul.f32 %v1056, 1.442695
      %v1085 = vpow.pop %v1084
      %v1086 = vmul.f32 %v1057, 1.442695
      %v1087 = vpow.pop %v1086
      %v1088 = vmul.f32 %v1058, 1.442695
      %v1089 = vpow.pop %v1088
      %v1090 = vmul.f32 %v1059, 1.442695
      %v1091 = vpow.pop %v1090
      %1093 = vset.pattern.permute.xlu0 0
      %1094 = vperm.xlu0 %1093, %v1028
      %v1095 = vpop.permute.xlu0 %1094
      %1098 = vset.pattern.permute.xlu0 0
      %1099 = vperm.xlu0 %1098, %v1029
      %v1100 = vpop.permute.xlu0 %1099
      %1103 = vset.pattern.permute.xlu0 0
      %1104 = vperm.xlu0 %1103, %v1030
      %v1105 = vpop.permute.xlu0 %1104
      %1108 = vset.pattern.permute.xlu0 0
      %1109 = vperm.xlu0 %1108, %v1031
      %v1110 = vpop.permute.xlu0 %1109
      %1113 = vset.pattern.permute.xlu0 0
      %1114 = vperm.xlu0 %1113, %v1032
      %v1115 = vpop.permute.xlu0 %1114
      %1118 = vset.pattern.permute.xlu0 0
      %1119 = vperm.xlu0 %1118, %v1033
      %v1120 = vpop.permute.xlu0 %1119
      %1123 = vset.pattern.permute.xlu0 0
      %1124 = vperm.xlu0 %1123, %v1034
      %v1125 = vpop.permute.xlu0 %1124
      %1128 = vset.pattern.permute.xlu0 0
      %1129 = vperm.xlu0 %1128, %v1035
      %v1130 = vpop.permute.xlu0 %1129
      %1133 = vset.pattern.permute.xlu0 0
      %1134 = vperm.xlu0 %1133, %v1036
      %v1135 = vpop.permute.xlu0 %1134
      %1138 = vset.pattern.permute.xlu0 0
      %1139 = vperm.xlu0 %1138, %v1037
      %v1140 = vpop.permute.xlu0 %1139
      %1143 = vset.pattern.permute.xlu0 0
      %1144 = vperm.xlu0 %1143, %v1038
      %v1145 = vpop.permute.xlu0 %1144
      %1148 = vset.pattern.permute.xlu0 0
      %1149 = vperm.xlu0 %1148, %v1039
      %v1150 = vpop.permute.xlu0 %1149
      %1153 = vset.pattern.permute.xlu0 0
      %1154 = vperm.xlu0 %1153, %v1040
      %v1155 = vpop.permute.xlu0 %1154
      %1158 = vset.pattern.permute.xlu0 0
      %1159 = vperm.xlu0 %1158, %v1041
      %v1160 = vpop.permute.xlu0 %1159
      %1163 = vset.pattern.permute.xlu0 0
      %1164 = vperm.xlu0 %1163, %v1042
      %v1165 = vpop.permute.xlu0 %1164
      %1168 = vset.pattern.permute.xlu0 0
      %1169 = vperm.xlu0 %1168, %v1043
      %v1170 = vpop.permute.xlu0 %1169
      %v1172 = vsub.f32 %v918, %v1095
      %v1173 = vsub.f32 %v921, %v1100
      %v1174 = vsub.f32 %v926, %v1105
      %v1175 = vsub.f32 %v929, %v1110
      %v1176 = vsub.f32 %v934, %v1115
      %v1177 = vsub.f32 %v937, %v1120
      %v1178 = vsub.f32 %v942, %v1125
      %v1179 = vsub.f32 %v945, %v1130
      %v1180 = vsub.f32 %v950, %v1135
      %v1181 = vsub.f32 %v953, %v1140
      %v1182 = vsub.f32 %v958, %v1145
      %v1183 = vsub.f32 %v961, %v1150
      %v1184 = vsub.f32 %v966, %v1155
      %v1185 = vsub.f32 %v969, %v1160
      %v1186 = vsub.f32 %v974, %v1165
      %v1187 = vsub.f32 %v977, %v1170
      %v1188 = vmul.f32 %v1172, 1.442695
      %v1189 = vpow.pop %v1188
      %v1190 = vmul.f32 %v1173, 1.442695
      %v1191 = vpow.pop %v1190
      %v1192 = vmul.f32 %v1174, 1.442695
      %v1193 = vpow.pop %v1192
      %v1194 = vmul.f32 %v1175, 1.442695
      %v1195 = vpow.pop %v1194
      %v1196 = vmul.f32 %v1176, 1.442695
      %v1197 = vpow.pop %v1196
      %v1198 = vmul.f32 %v1177, 1.442695
      %v1199 = vpow.pop %v1198
      %v1200 = vmul.f32 %v1178, 1.442695
      %v1201 = vpow.pop %v1200
      %v1202 = vmul.f32 %v1179, 1.442695
      %v1203 = vpow.pop %v1202
      %v1204 = vmul.f32 %v1180, 1.442695
      %v1205 = vpow.pop %v1204
      %v1206 = vmul.f32 %v1181, 1.442695
      %v1207 = vpow.pop %v1206
      %v1208 = vmul.f32 %v1182, 1.442695
      %v1209 = vpow.pop %v1208
      %v1210 = vmul.f32 %v1183, 1.442695
      %v1211 = vpow.pop %v1210
      %v1212 = vmul.f32 %v1184, 1.442695
      %v1213 = vpow.pop %v1212
      %v1214 = vmul.f32 %v1185, 1.442695
      %v1215 = vpow.pop %v1214
      %v1216 = vmul.f32 %v1186, 1.442695
      %v1217 = vpow.pop %v1216
      %v1218 = vmul.f32 %v1187, 1.442695
      %v1219 = vpow.pop %v1218
      %v1220 = vld [vmem:[#allocation4] sm:$0xff]
      %v1221 = vld [vmem:[#allocation4 + $0x8] sm:$0xff]
      %v1222 = vld [vmem:[#allocation4 + $0x10] sm:$0xff]
      %v1223 = vld [vmem:[#allocation4 + $0x18] sm:$0xff]
      %v1224 = vld [vmem:[#allocation4 + $0x20] sm:$0xff]
      %v1225 = vld [vmem:[#allocation4 + $0x28] sm:$0xff]
      %v1226 = vld [vmem:[#allocation4 + $0x30] sm:$0xff]
      %v1227 = vld [vmem:[#allocation4 + $0x38] sm:$0xff]
      %v1228 = vld [vmem:[#allocation4 + $0x40] sm:$0xff]
      %v1229 = vld [vmem:[#allocation4 + $0x48] sm:$0xff]
      %v1230 = vld [vmem:[#allocation4 + $0x50] sm:$0xff]
      %v1231 = vld [vmem:[#allocation4 + $0x58] sm:$0xff]
      %v1232 = vld [vmem:[#allocation4 + $0x60] sm:$0xff]
      %v1233 = vld [vmem:[#allocation4 + $0x68] sm:$0xff]
      %v1234 = vld [vmem:[#allocation4 + $0x70] sm:$0xff]
      %v1235 = vld [vmem:[#allocation4 + $0x78] sm:$0xff]
      %v1236 = vmul.f32 %v1061, %v1220
      %v1237 = vmul.f32 %v1063, %v1221
      %v1238 = vmul.f32 %v1065, %v1222
      %v1239 = vmul.f32 %v1067, %v1223
      %v1240 = vmul.f32 %v1069, %v1224
      %v1241 = vmul.f32 %v1071, %v1225
      %v1242 = vmul.f32 %v1073, %v1226
      %v1243 = vmul.f32 %v1075, %v1227
      %v1244 = vmul.f32 %v1077, %v1228
      %v1245 = vmul.f32 %v1079, %v1229
      %v1246 = vmul.f32 %v1081, %v1230
      %v1247 = vmul.f32 %v1083, %v1231
      %v1248 = vmul.f32 %v1085, %v1232
      %v1249 = vmul.f32 %v1087, %v1233
      %v1250 = vmul.f32 %v1089, %v1234
      %v1251 = vmul.f32 %v1091, %v1235
      %1252 = vadd.xlane.f32.xlu0 %v1189
      %v1253 = vpop.xlane.xlu0 %1252
      %1254 = vadd.xlane.f32.xlu0 %v1191
      %v1255 = vpop.xlane.xlu0 %1254
      %1256 = vadd.xlane.f32.xlu0 %v1193
      %v1257 = vpop.xlane.xlu0 %1256
      %1258 = vadd.xlane.f32.xlu0 %v1195
      %v1259 = vpop.xlane.xlu0 %1258
      %1260 = vadd.xlane.f32.xlu0 %v1197
      %v1261 = vpop.xlane.xlu0 %1260
      %1262 = vadd.xlane.f32.xlu0 %v1199
      %v1263 = vpop.xlane.xlu0 %1262
      %1264 = vadd.xlane.f32.xlu0 %v1201
      %v1265 = vpop.xlane.xlu0 %1264
      %1266 = vadd.xlane.f32.xlu0 %v1203
      %v1267 = vpop.xlane.xlu0 %1266
      %1268 = vadd.xlane.f32.xlu0 %v1205
      %v1269 = vpop.xlane.xlu0 %1268
      %1270 = vadd.xlane.f32.xlu0 %v1207
      %v1271 = vpop.xlane.xlu0 %1270
      %1272 = vadd.xlane.f32.xlu0 %v1209
      %v1273 = vpop.xlane.xlu0 %1272
      %1274 = vadd.xlane.f32.xlu0 %v1211
      %v1275 = vpop.xlane.xlu0 %1274
      %1276 = vadd.xlane.f32.xlu0 %v1213
      %v1277 = vpop.xlane.xlu0 %1276
      %1278 = vadd.xlane.f32.xlu0 %v1215
      %v1279 = vpop.xlane.xlu0 %1278
      %1280 = vadd.xlane.f32.xlu0 %v1217
      %v1281 = vpop.xlane.xlu0 %1280
      %1282 = vadd.xlane.f32.xlu0 %v1219
      %v1283 = vpop.xlane.xlu0 %1282
      %v1284 = vadd.f32 %v1236, %v1253
      %v1285 = vadd.f32 %v1237, %v1255
      %v1286 = vadd.f32 %v1238, %v1257
      %v1287 = vadd.f32 %v1239, %v1259
      %v1288 = vadd.f32 %v1240, %v1261
      %v1289 = vadd.f32 %v1241, %v1263
      %v1290 = vadd.f32 %v1242, %v1265
      %v1291 = vadd.f32 %v1243, %v1267
      %v1292 = vadd.f32 %v1244, %v1269
      %v1293 = vadd.f32 %v1245, %v1271
      %v1294 = vadd.f32 %v1246, %v1273
      %v1295 = vadd.f32 %v1247, %v1275
      %v1296 = vadd.f32 %v1248, %v1277
      %v1297 = vadd.f32 %v1249, %v1279
      %v1298 = vadd.f32 %v1250, %v1281
      %v1299 = vadd.f32 %v1251, %v1283
      %vm1300 = vcmask 7168
      %1301 = vst.msk [vmem:[#allocation4] sm:$0xff] %vm1300, %v1284
      %1302 = vst.msk [vmem:[#allocation4 + $0x8] sm:$0xff] %vm1300, %v1285
      %1303 = vst.msk [vmem:[#allocation4 + $0x10] sm:$0xff] %vm1300, %v1286
      %1304 = vst.msk [vmem:[#allocation4 + $0x18] sm:$0xff] %vm1300, %v1287
      %1305 = vst.msk [vmem:[#allocation4 + $0x20] sm:$0xff] %vm1300, %v1288
      %1306 = vst.msk [vmem:[#allocation4 + $0x28] sm:$0xff] %vm1300, %v1289
      %1307 = vst.msk [vmem:[#allocation4 + $0x30] sm:$0xff] %vm1300, %v1290
      %1308 = vst.msk [vmem:[#allocation4 + $0x38] sm:$0xff] %vm1300, %v1291
      %1309 = vst.msk [vmem:[#allocation4 + $0x40] sm:$0xff] %vm1300, %v1292
      %1310 = vst.msk [vmem:[#allocation4 + $0x48] sm:$0xff] %vm1300, %v1293
      %1311 = vst.msk [vmem:[#allocation4 + $0x50] sm:$0xff] %vm1300, %v1294
      %1312 = vst.msk [vmem:[#allocation4 + $0x58] sm:$0xff] %vm1300, %v1295
      %1313 = vst.msk [vmem:[#allocation4 + $0x60] sm:$0xff] %vm1300, %v1296
      %1314 = vst.msk [vmem:[#allocation4 + $0x68] sm:$0xff] %vm1300, %v1297
      %1315 = vst.msk [vmem:[#allocation4 + $0x70] sm:$0xff] %vm1300, %v1298
      %1316 = vst.msk [vmem:[#allocation4 + $0x78] sm:$0xff] %vm1300, %v1299
      %v1317 = vld [vmem:[#allocation5] sm:$0xff]
      %v1318 = vld [vmem:[#allocation5 + $0x8] sm:$0xff]
      %v1319 = vld [vmem:[#allocation5 + $0x10] sm:$0xff]
      %v1320 = vld [vmem:[#allocation5 + $0x18] sm:$0xff]
      %v1321 = vld [vmem:[#allocation5 + $0x20] sm:$0xff]
      %v1322 = vld [vmem:[#allocation5 + $0x28] sm:$0xff]
      %v1323 = vld [vmem:[#allocation5 + $0x30] sm:$0xff]
      %v1324 = vld [vmem:[#allocation5 + $0x38] sm:$0xff]
      %v1325 = vld [vmem:[#allocation5 + $0x40] sm:$0xff]
      %v1326 = vld [vmem:[#allocation5 + $0x48] sm:$0xff]
      %v1327 = vld [vmem:[#allocation5 + $0x50] sm:$0xff]
      %v1328 = vld [vmem:[#allocation5 + $0x58] sm:$0xff]
      %v1329 = vld [vmem:[#allocation5 + $0x60] sm:$0xff]
      %v1330 = vld [vmem:[#allocation5 + $0x68] sm:$0xff]
      %v1331 = vld [vmem:[#allocation5 + $0x70] sm:$0xff]
      %v1332 = vld [vmem:[#allocation5 + $0x78] sm:$0xff]
      %1334 = vset.pattern.permute.xlu0 0
      %1335 = vperm.xlu0 %1334, %v1061
      %v1336 = vpop.permute.xlu0 %1335
      %1339 = vset.pattern.permute.xlu0 0
      %1340 = vperm.xlu0 %1339, %v1063
      %v1341 = vpop.permute.xlu0 %1340
      %1344 = vset.pattern.permute.xlu0 0
      %1345 = vperm.xlu0 %1344, %v1065
      %v1346 = vpop.permute.xlu0 %1345
      %1349 = vset.pattern.permute.xlu0 0
      %1350 = vperm.xlu0 %1349, %v1067
      %v1351 = vpop.permute.xlu0 %1350
      %1354 = vset.pattern.permute.xlu0 0
      %1355 = vperm.xlu0 %1354, %v1069
      %v1356 = vpop.permute.xlu0 %1355
      %1359 = vset.pattern.permute.xlu0 0
      %1360 = vperm.xlu0 %1359, %v1071
      %v1361 = vpop.permute.xlu0 %1360
      %1364 = vset.pattern.permute.xlu0 0
      %1365 = vperm.xlu0 %1364, %v1073
      %v1366 = vpop.permute.xlu0 %1365
      %1369 = vset.pattern.permute.xlu0 0
      %1370 = vperm.xlu0 %1369, %v1075
      %v1371 = vpop.permute.xlu0 %1370
      %1374 = vset.pattern.permute.xlu0 0
      %1375 = vperm.xlu0 %1374, %v1077
      %v1376 = vpop.permute.xlu0 %1375
      %1379 = vset.pattern.permute.xlu0 0
      %1380 = vperm.xlu0 %1379, %v1079
      %v1381 = vpop.permute.xlu0 %1380
      %1384 = vset.pattern.permute.xlu0 0
      %1385 = vperm.xlu0 %1384, %v1081
      %v1386 = vpop.permute.xlu0 %1385
      %1389 = vset.pattern.permute.xlu0 0
      %1390 = vperm.xlu0 %1389, %v1083
      %v1391 = vpop.permute.xlu0 %1390
      %1394 = vset.pattern.permute.xlu0 0
      %1395 = vperm.xlu0 %1394, %v1085
      %v1396 = vpop.permute.xlu0 %1395
      %1399 = vset.pattern.permute.xlu0 0
      %1400 = vperm.xlu0 %1399, %v1087
      %v1401 = vpop.permute.xlu0 %1400
      %1404 = vset.pattern.permute.xlu0 0
      %1405 = vperm.xlu0 %1404, %v1089
      %v1406 = vpop.permute.xlu0 %1405
      %1409 = vset.pattern.permute.xlu0 0
      %1410 = vperm.xlu0 %1409, %v1091
      %v1411 = vpop.permute.xlu0 %1410
      %v1413 = vmul.f32 %v1336, %v1317
      %v1414 = vmul.f32 %v1341, %v1318
      %v1415 = vmul.f32 %v1346, %v1319
      %v1416 = vmul.f32 %v1351, %v1320
      %v1417 = vmul.f32 %v1356, %v1321
      %v1418 = vmul.f32 %v1361, %v1322
      %v1419 = vmul.f32 %v1366, %v1323
      %v1420 = vmul.f32 %v1371, %v1324
      %v1421 = vmul.f32 %v1376, %v1325
      %v1422 = vmul.f32 %v1381, %v1326
      %v1423 = vmul.f32 %v1386, %v1327
      %v1424 = vmul.f32 %v1391, %v1328
      %v1425 = vmul.f32 %v1396, %v1329
      %v1426 = vmul.f32 %v1401, %v1330
      %v1427 = vmul.f32 %v1406, %v1331
      %v1428 = vmul.f32 %v1411, %v1332
      %v1429 = vpack.c.bf16 %v1191, %v1189
      %v1430 = vpack.c.bf16 %v1195, %v1193
      %v1431 = vpack.c.bf16 %v1199, %v1197
      %v1432 = vpack.c.bf16 %v1203, %v1201
      %v1433 = vpack.c.bf16 %v1207, %v1205
      %v1434 = vpack.c.bf16 %v1211, %v1209
      %v1435 = vpack.c.bf16 %v1215, %v1213
      %v1436 = vpack.c.bf16 %v1219, %v1217
      %1445 = vrot.lane.b32.xlu0 %v819, 120
      %v1446 = vpop.permute.xlu0 %1445
      %1447 = vrot.lane.b32.xlu0 %v820, 120
      %v1448 = vpop.permute.xlu0 %1447
      %1449 = vrot.lane.b32.xlu0 %v821, 120
      %v1450 = vpop.permute.xlu0 %1449
      %1451 = vrot.lane.b32.xlu0 %v822, 120
      %v1452 = vpop.permute.xlu0 %1451
      %1453 = vrot.lane.b32.xlu0 %v823, 120
      %v1454 = vpop.permute.xlu0 %1453
      %1455 = vrot.lane.b32.xlu0 %v824, 120
      %v1456 = vpop.permute.xlu0 %1455
      %1457 = vrot.lane.b32.xlu0 %v825, 120
      %v1458 = vpop.permute.xlu0 %1457
      %1459 = vrot.lane.b32.xlu0 %v826, 120
      %v1460 = vpop.permute.xlu0 %1459
      %1469 = vmatprep.subr.bf16.mxu0 0
      %1470 = vmatpush1.bf16.msra.mxu0 %v1446
      %1471 = vmatprep.subr.bf16.mxu0 0
      %1472 = vmatpush1.bf16.msra.mxu0 %v1448
      %1473 = vmatprep.subr.bf16.mxu0 0
      %1474 = vmatpush1.bf16.msra.mxu0 %v1450
      %1475 = vmatprep.subr.bf16.mxu0 0
      %1476 = vmatpush1.bf16.msra.mxu0 %v1452
      %1477 = vmatprep.subr.bf16.mxu0 0
      %1478 = vmatpush1.bf16.msra.mxu0 %v1454
      %1479 = vmatprep.subr.bf16.mxu0 0
      %1480 = vmatpush1.bf16.msra.mxu0 %v1456
      %1481 = vmatprep.subr.bf16.mxu0 0
      %1482 = vmatpush1.bf16.msra.mxu0 %v1458
      %1483 = vmatprep.subr.bf16.mxu0 0
      %1484 = vmatpush1.bf16.msra.mxu0 %v1460
      %1485 = vmatprep.subr.bf16.mxu0 0
      %1486 = vmatpush1.bf16.msra.mxu0 0
      %1487 = vmatprep.subr.bf16.mxu0 0
      %1488 = vmatpush1.bf16.msra.mxu0 0
      %1489 = vmatprep.subr.bf16.mxu0 0
      %1490 = vmatpush1.bf16.msra.mxu0 0
      %1491 = vmatprep.subr.bf16.mxu0 0
      %1492 = vmatpush1.bf16.msra.mxu0 0
      %1493 = vmatprep.subr.bf16.mxu0 0
      %1494 = vmatpush1.bf16.msra.mxu0 0
      %1495 = vmatprep.subr.bf16.mxu0 0
      %1496 = vmatpush1.bf16.msra.mxu0 0
      %1497 = vmatprep.subr.bf16.mxu0 0
      %1498 = vmatpush1.bf16.msra.mxu0 0
      %1499 = vmatprep.subr.bf16.mxu0 0
      %1500 = vmatpush1.bf16.msra.mxu0 0
      %1501 = vmatprep.mubr.bf16.mxu0 0
      %1502 = vmatmul.mubr.bf16.gmra.mrb[0].mxu0 %v1429
      %v1503 = vpop.f32.mrb[0].mxu0
      %v1504 = vadd.f32 0.0, %v1503
      %v1505 = vpop.f32.mrb[0].mxu0
      %v1506 = vpop.f32.mrb[0].mxu0
      %v1507 = vadd.f32 0.0, %v1506
      %v1508 = vpop.f32.mrb[0].mxu0
      %1509 = vmatprep.mubr.bf16.mxu0 0
      %1510 = vmatmul.mubr.bf16.gmra.mrb[0].mxu0 %v1430
      %v1511 = vpop.f32.mrb[0].mxu0
      %v1512 = vadd.f32 0.0, %v1511
      %v1513 = vpop.f32.mrb[0].mxu0
      %v1514 = vpop.f32.mrb[0].mxu0
      %v1515 = vadd.f32 0.0, %v1514
      %v1516 = vpop.f32.mrb[0].mxu0
      %1517 = vmatprep.mubr.bf16.mxu0 0
      %1518 = vmatmul.mubr.bf16.gmra.mrb[0].mxu0 %v1431
      %v1519 = vpop.f32.mrb[0].mxu0
      %v1520 = vadd.f32 0.0, %v1519
      %v1521 = vpop.f32.mrb[0].mxu0
      %v1522 = vpop.f32.mrb[0].mxu0
      %v1523 = vadd.f32 0.0, %v1522
      %v1524 = vpop.f32.mrb[0].mxu0
      %1525 = vmatprep.mubr.bf16.mxu0 0
      %1526 = vmatmul.mubr.bf16.gmra.mrb[0].mxu0 %v1432
      %v1527 = vpop.f32.mrb[0].mxu0
      %v1528 = vadd.f32 0.0, %v1527
      %v1529 = vpop.f32.mrb[0].mxu0
      %v1530 = vpop.f32.mrb[0].mxu0
      %v1531 = vadd.f32 0.0, %v1530
      %v1532 = vpop.f32.mrb[0].mxu0
      %1533 = vmatprep.mubr.bf16.mxu0 0
      %1534 = vmatmul.mubr.bf16.gmra.mrb[0].mxu0 %v1433
      %v1535 = vpop.f32.mrb[0].mxu0
      %v1536 = vadd.f32 0.0, %v1535
      %v1537 = vpop.f32.mrb[0].mxu0
      %v1538 = vpop.f32.mrb[0].mxu0
      %v1539 = vadd.f32 0.0, %v1538
      %v1540 = vpop.f32.mrb[0].mxu0
      %1541 = vmatprep.mubr.bf16.mxu0 0
      %1542 = vmatmul.mubr.bf16.gmra.mrb[0].mxu0 %v1434
      %v1543 = vpop.f32.mrb[0].mxu0
      %v1544 = vadd.f32 0.0, %v1543
      %v1545 = vpop.f32.mrb[0].mxu0
      %v1546 = vpop.f32.mrb[0].mxu0
      %v1547 = vadd.f32 0.0, %v1546
      %v1548 = vpop.f32.mrb[0].mxu0
      %1549 = vmatprep.mubr.bf16.mxu0 0
      %1550 = vmatmul.mubr.bf16.gmra.mrb[0].mxu0 %v1435
      %v1551 = vpop.f32.mrb[0].mxu0
      %v1552 = vadd.f32 0.0, %v1551
      %v1553 = vpop.f32.mrb[0].mxu0
      %v1554 = vpop.f32.mrb[0].mxu0
      %v1555 = vadd.f32 0.0, %v1554
      %v1556 = vpop.f32.mrb[0].mxu0
      %1557 = vmatprep.mubr.bf16.mxu0 0
      %1558 = vmatmul.mubr.bf16.gmra.mrb[0].mxu0 %v1436
      %v1559 = vpop.f32.mrb[0].mxu0
      %v1560 = vadd.f32 0.0, %v1559
      %v1561 = vpop.f32.mrb[0].mxu0
      %v1562 = vpop.f32.mrb[0].mxu0
      %v1563 = vadd.f32 0.0, %v1562
      %v1564 = vpop.f32.mrb[0].mxu0
      %1565 = vdwg.mxu0
      %v1566 = vadd.f32 %v1413, %v1504
      %v1567 = vadd.f32 %v1414, %v1507
      %v1568 = vadd.f32 %v1415, %v1512
      %v1569 = vadd.f32 %v1416, %v1515
      %v1570 = vadd.f32 %v1417, %v1520
      %v1571 = vadd.f32 %v1418, %v1523
      %v1572 = vadd.f32 %v1419, %v1528
      %v1573 = vadd.f32 %v1420, %v1531
      %v1574 = vadd.f32 %v1421, %v1536
      %v1575 = vadd.f32 %v1422, %v1539
      %v1576 = vadd.f32 %v1423, %v1544
      %v1577 = vadd.f32 %v1424, %v1547
      %v1578 = vadd.f32 %v1425, %v1552
      %v1579 = vadd.f32 %v1426, %v1555
      %v1580 = vadd.f32 %v1427, %v1560
      %v1581 = vadd.f32 %v1428, %v1563
      %1582 = vst.msk [vmem:[#allocation5] sm:$0xff] %vm693, %v1566
      %1583 = vst.msk [vmem:[#allocation5 + $0x8] sm:$0xff] %vm693, %v1567
      %1584 = vst.msk [vmem:[#allocation5 + $0x10] sm:$0xff] %vm693, %v1568
      %1585 = vst.msk [vmem:[#allocation5 + $0x18] sm:$0xff] %vm693, %v1569
      %1586 = vst.msk [vmem:[#allocation5 + $0x20] sm:$0xff] %vm693, %v1570
      %1587 = vst.msk [vmem:[#allocation5 + $0x28] sm:$0xff] %vm693, %v1571
      %1588 = vst.msk [vmem:[#allocation5 + $0x30] sm:$0xff] %vm693, %v1572
      %1589 = vst.msk [vmem:[#allocation5 + $0x38] sm:$0xff] %vm693, %v1573
      %1590 = vst.msk [vmem:[#allocation5 + $0x40] sm:$0xff] %vm693, %v1574
      %1591 = vst.msk [vmem:[#allocation5 + $0x48] sm:$0xff] %vm693, %v1575
      %1592 = vst.msk [vmem:[#allocation5 + $0x50] sm:$0xff] %vm693, %v1576
      %1593 = vst.msk [vmem:[#allocation5 + $0x58] sm:$0xff] %vm693, %v1577
      %1594 = vst.msk [vmem:[#allocation5 + $0x60] sm:$0xff] %vm693, %v1578
      %1595 = vst.msk [vmem:[#allocation5 + $0x68] sm:$0xff] %vm693, %v1579
      %1596 = vst.msk [vmem:[#allocation5 + $0x70] sm:$0xff] %vm693, %v1580
      %1597 = vst.msk [vmem:[#allocation5 + $0x78] sm:$0xff] %vm693, %v1581
      %1598 = vst.msk [vmem:[#allocation3] sm:$0xff] %vm1300, %v1028
      %1599 = vst.msk [vmem:[#allocation3 + $0x8] sm:$0xff] %vm1300, %v1029
      %1600 = vst.msk [vmem:[#allocation3 + $0x10] sm:$0xff] %vm1300, %v1030
      %1601 = vst.msk [vmem:[#allocation3 + $0x18] sm:$0xff] %vm1300, %v1031
      %1602 = vst.msk [vmem:[#allocation3 + $0x20] sm:$0xff] %vm1300, %v1032
      %1603 = vst.msk [vmem:[#allocation3 + $0x28] sm:$0xff] %vm1300, %v1033
      %1604 = vst.msk [vmem:[#allocation3 + $0x30] sm:$0xff] %vm1300, %v1034
      %1605 = vst.msk [vmem:[#allocation3 + $0x38] sm:$0xff] %vm1300, %v1035
      %1606 = vst.msk [vmem:[#allocation3 + $0x40] sm:$0xff] %vm1300, %v1036
      %1607 = vst.msk [vmem:[#allocation3 + $0x48] sm:$0xff] %vm1300, %v1037
      %1608 = vst.msk [vmem:[#allocation3 + $0x50] sm:$0xff] %vm1300, %v1038
      %1609 = vst.msk [vmem:[#allocation3 + $0x58] sm:$0xff] %vm1300, %v1039
      %1610 = vst.msk [vmem:[#allocation3 + $0x60] sm:$0xff] %vm1300, %v1040
      %1611 = vst.msk [vmem:[#allocation3 + $0x68] sm:$0xff] %vm1300, %v1041
      %1612 = vst.msk [vmem:[#allocation3 + $0x70] sm:$0xff] %vm1300, %v1042
      %1613 = vst.msk [vmem:[#allocation3 + $0x78] sm:$0xff] %vm1300, %v1043
      %1622 = vrot.lane.b32.xlu0 %v827, 124
      %v1623 = vpop.permute.xlu0 %1622
      %1624 = vrot.lane.b32.xlu0 %v828, 124
      %v1625 = vpop.permute.xlu0 %1624
      %1626 = vrot.lane.b32.xlu0 %v829, 124
      %v1627 = vpop.permute.xlu0 %1626
      %1628 = vrot.lane.b32.xlu0 %v830, 124
      %v1629 = vpop.permute.xlu0 %1628
      %1630 = vrot.lane.b32.xlu0 %v831, 124
      %v1631 = vpop.permute.xlu0 %1630
      %1632 = vrot.lane.b32.xlu0 %v832, 124
      %v1633 = vpop.permute.xlu0 %1632
      %1634 = vrot.lane.b32.xlu0 %v833, 124
      %v1635 = vpop.permute.xlu0 %1634
      %1636 = vrot.lane.b32.xlu0 %v834, 124
      %v1637 = vpop.permute.xlu0 %1636
      %1638 = vrot.lane.b32.xlu0 %v819, 124
      %v1639 = vpop.permute.xlu0 %1638
      %1640 = vrot.lane.b32.xlu0 %v820, 124
      %v1641 = vpop.permute.xlu0 %1640
      %1642 = vrot.lane.b32.xlu0 %v821, 124
      %v1643 = vpop.permute.xlu0 %1642
      %1644 = vrot.lane.b32.xlu0 %v822, 124
      %v1645 = vpop.permute.xlu0 %1644
      %1646 = vrot.lane.b32.xlu0 %v823, 124
      %v1647 = vpop.permute.xlu0 %1646
      %1648 = vrot.lane.b32.xlu0 %v824, 124
      %v1649 = vpop.permute.xlu0 %1648
      %1650 = vrot.lane.b32.xlu0 %v825, 124
      %v1651 = vpop.permute.xlu0 %1650
      %1652 = vrot.lane.b32.xlu0 %v826, 124
      %v1653 = vpop.permute.xlu0 %1652
      %v1655 = vsel %vm693, %v1623, 0
      %v1658 = vsel %vm693, %v1625, 0
      %v1661 = vsel %vm693, %v1627, 0
      %v1664 = vsel %vm693, %v1629, 0
      %v1667 = vsel %vm693, %v1631, 0
      %v1670 = vsel %vm693, %v1633, 0
      %v1673 = vsel %vm693, %v1635, 0
      %v1676 = vsel %vm693, %v1637, 0
      %v1679 = vsel %vm693, %v1639, 0
      %v1682 = vsel %vm693, %v1641, 0
      %v1685 = vsel %vm693, %v1643, 0
      %v1688 = vsel %vm693, %v1645, 0
      %v1691 = vsel %vm693, %v1647, 0
      %v1694 = vsel %vm693, %v1649, 0
      %v1697 = vsel %vm693, %v1651, 0
      %v1700 = vsel %vm693, %v1653, 0
      %1702 = vmatprep.subr.bf16.mxu0 0
      %1703 = vmatpush1.bf16.xpose.msra.mxu0 %v1679
      %1704 = vmatprep.subr.bf16.mxu0 0
      %1705 = vmatpush1.bf16.xpose.msra.mxu0 %v1682
      %1706 = vmatprep.subr.bf16.mxu0 0
      %1707 = vmatpush1.bf16.xpose.msra.mxu0 %v1685
      %1708 = vmatprep.subr.bf16.mxu0 0
      %1709 = vmatpush1.bf16.xpose.msra.mxu0 %v1688
      %1710 = vmatprep.subr.bf16.mxu0 0
      %1711 = vmatpush1.bf16.xpose.msra.mxu0 %v1691
      %1712 = vmatprep.subr.bf16.mxu0 0
      %1713 = vmatpush1.bf16.xpose.msra.mxu0 %v1694
      %1714 = vmatprep.subr.bf16.mxu0 0
      %1715 = vmatpush1.bf16.xpose.msra.mxu0 %v1697
      %1716 = vmatprep.subr.bf16.mxu0 0
      %1717 = vmatpush1.bf16.xpose.msra.mxu0 %v1700
      %1718 = vmatprep.subr.bf16.mxu0 0
      %1719 = vmatpush1.bf16.xpose.msra.mxu0 0
      %1720 = vmatprep.subr.bf16.mxu0 0
      %1721 = vmatpush1.bf16.xpose.msra.mxu0 0
      %1722 = vmatprep.subr.bf16.mxu0 0
      %1723 = vmatpush1.bf16.xpose.msra.mxu0 0
      %1724 = vmatprep.subr.bf16.mxu0 0
      %1725 = vmatpush1.bf16.xpose.msra.mxu0 0
      %1726 = vmatprep.subr.bf16.mxu0 0
      %1727 = vmatpush1.bf16.xpose.msra.mxu0 0
      %1728 = vmatprep.subr.bf16.mxu0 0
      %1729 = vmatpush1.bf16.xpose.msra.mxu0 0
      %1730 = vmatprep.subr.bf16.mxu0 0
      %1731 = vmatpush1.bf16.xpose.msra.mxu0 0
      %1732 = vmatprep.subr.bf16.mxu0 0
      %1733 = vmatpush1.bf16.xpose.msra.mxu0 0
      %1734 = vmatprep.mubr.bf16.mxu0 0
      %1735 = vmatmul.mubr.bf16.gmra.mrb[0].mxu0 %v1655
      %v1736 = vpop.f32.mrb[0].mxu0
      %v1737 = vadd.f32 0.0, %v1736
      %v1738 = vpop.f32.mrb[0].mxu0
      %v1739 = vpop.f32.mrb[0].mxu0
      %v1740 = vadd.f32 0.0, %v1739
      %v1741 = vpop.f32.mrb[0].mxu0
      %1742 = vmatprep.mubr.bf16.mxu0 0
      %1743 = vmatmul.mubr.bf16.gmra.mrb[0].mxu0 %v1658
      %v1744 = vpop.f32.mrb[0].mxu0
      %v1745 = vadd.f32 0.0, %v1744
      %v1746 = vpop.f32.mrb[0].mxu0
      %v1747 = vpop.f32.mrb[0].mxu0
      %v1748 = vadd.f32 0.0, %v1747
      %v1749 = vpop.f32.mrb[0].mxu0
      %1750 = vmatprep.mubr.bf16.mxu0 0
      %1751 = vmatmul.mubr.bf16.gmra.mrb[0].mxu0 %v1661
      %v1752 = vpop.f32.mrb[0].mxu0
      %v1753 = vadd.f32 0.0, %v1752
      %v1754 = vpop.f32.mrb[0].mxu0
      %v1755 = vpop.f32.mrb[0].mxu0
      %v1756 = vadd.f32 0.0, %v1755
      %v1757 = vpop.f32.mrb[0].mxu0
      %1758 = vmatprep.mubr.bf16.mxu0 0
      %1759 = vmatmul.mubr.bf16.gmra.mrb[0].mxu0 %v1664
      %v1760 = vpop.f32.mrb[0].mxu0
      %v1761 = vadd.f32 0.0, %v1760
      %v1762 = vpop.f32.mrb[0].mxu0
      %v1763 = vpop.f32.mrb[0].mxu0
      %v1764 = vadd.f32 0.0, %v1763
      %v1765 = vpop.f32.mrb[0].mxu0
      %1766 = vmatprep.mubr.bf16.mxu0 0
      %1767 = vmatmul.mubr.bf16.gmra.mrb[0].mxu0 %v1667
      %v1768 = vpop.f32.mrb[0].mxu0
      %v1769 = vadd.f32 0.0, %v1768
      %v1770 = vpop.f32.mrb[0].mxu0
      %v1771 = vpop.f32.mrb[0].mxu0
      %v1772 = vadd.f32 0.0, %v1771
      %v1773 = vpop.f32.mrb[0].mxu0
      %1774 = vmatprep.mubr.bf16.mxu0 0
      %1775 = vmatmul.mubr.bf16.gmra.mrb[0].mxu0 %v1670
      %v1776 = vpop.f32.mrb[0].mxu0
      %v1777 = vadd.f32 0.0, %v1776
      %v1778 = vpop.f32.mrb[0].mxu0
      %v1779 = vpop.f32.mrb[0].mxu0
      %v1780 = vadd.f32 0.0, %v1779
      %v1781 = vpop.f32.mrb[0].mxu0
      %1782 = vmatprep.mubr.bf16.mxu0 0
      %1783 = vmatmul.mubr.bf16.gmra.mrb[0].mxu0 %v1673
      %v1784 = vpop.f32.mrb[0].mxu0
      %v1785 = vadd.f32 0.0, %v1784
      %v1786 = vpop.f32.mrb[0].mxu0
      %v1787 = vpop.f32.mrb[0].mxu0
      %v1788 = vadd.f32 0.0, %v1787
      %v1789 = vpop.f32.mrb[0].mxu0
      %1790 = vmatprep.mubr.bf16.mxu0 0
      %1791 = vmatmul.mubr.bf16.gmra.mrb[0].mxu0 %v1676
      %v1792 = vpop.f32.mrb[0].mxu0
      %v1793 = vadd.f32 0.0, %v1792
      %v1794 = vpop.f32.mrb[0].mxu0
      %v1795 = vpop.f32.mrb[0].mxu0
      %v1796 = vadd.f32 0.0, %v1795
      %v1797 = vpop.f32.mrb[0].mxu0
      %1798 = vdwg.mxu0
      %s1799 = scalar_lea.vmem [#allocation3], 128
      %v1800 = vld [vmem:[%s1799] sm:$0xff]
      %v1801 = vld [vmem:[%s1799 + $0x8] sm:$0xff]
      %v1802 = vld [vmem:[%s1799 + $0x10] sm:$0xff]
      %v1803 = vld [vmem:[%s1799 + $0x18] sm:$0xff]
      %v1804 = vld [vmem:[%s1799 + $0x20] sm:$0xff]
      %v1805 = vld [vmem:[%s1799 + $0x28] sm:$0xff]
      %v1806 = vld [vmem:[%s1799 + $0x30] sm:$0xff]
      %v1807 = vld [vmem:[%s1799 + $0x38] sm:$0xff]
      %v1808 = vld [vmem:[%s1799 + $0x40] sm:$0xff]
      %v1809 = vld [vmem:[%s1799 + $0x48] sm:$0xff]
      %v1810 = vld [vmem:[%s1799 + $0x50] sm:$0xff]
      %v1811 = vld [vmem:[%s1799 + $0x58] sm:$0xff]
      %v1812 = vld [vmem:[%s1799 + $0x60] sm:$0xff]
      %v1813 = vld [vmem:[%s1799 + $0x68] sm:$0xff]
      %v1814 = vld [vmem:[%s1799 + $0x70] sm:$0xff]
      %v1815 = vld [vmem:[%s1799 + $0x78] sm:$0xff]
      %1816 = vmax.xlane.f32.xlu0 %v1737
      %v1817 = vpop.xlane.xlu0 %1816
      %1818 = vmax.xlane.f32.xlu0 %v1740
      %v1819 = vpop.xlane.xlu0 %1818
      %1820 = vmax.xlane.f32.xlu0 %v1745
      %v1821 = vpop.xlane.xlu0 %1820
      %1822 = vmax.xlane.f32.xlu0 %v1748
      %v1823 = vpop.xlane.xlu0 %1822
      %1824 = vmax.xlane.f32.xlu0 %v1753
      %v1825 = vpop.xlane.xlu0 %1824
      %1826 = vmax.xlane.f32.xlu0 %v1756
      %v1827 = vpop.xlane.xlu0 %1826
      %1828 = vmax.xlane.f32.xlu0 %v1761
      %v1829 = vpop.xlane.xlu0 %1828
      %1830 = vmax.xlane.f32.xlu0 %v1764
      %v1831 = vpop.xlane.xlu0 %1830
      %1832 = vmax.xlane.f32.xlu0 %v1769
      %v1833 = vpop.xlane.xlu0 %1832
      %1834 = vmax.xlane.f32.xlu0 %v1772
      %v1835 = vpop.xlane.xlu0 %1834
      %1836 = vmax.xlane.f32.xlu0 %v1777
      %v1837 = vpop.xlane.xlu0 %1836
      %1838 = vmax.xlane.f32.xlu0 %v1780
      %v1839 = vpop.xlane.xlu0 %1838
      %1840 = vmax.xlane.f32.xlu0 %v1785
      %v1841 = vpop.xlane.xlu0 %1840
      %1842 = vmax.xlane.f32.xlu0 %v1788
      %v1843 = vpop.xlane.xlu0 %1842
      %1844 = vmax.xlane.f32.xlu0 %v1793
      %v1845 = vpop.xlane.xlu0 %1844
      %1846 = vmax.xlane.f32.xlu0 %v1796
      %v1847 = vpop.xlane.xlu0 %1846
      %v1848 = vmax.f32 %v1800, %v1817
      %v1849 = vmax.f32 %v1801, %v1819
      %v1850 = vmax.f32 %v1802, %v1821
      %v1851 = vmax.f32 %v1803, %v1823
      %v1852 = vmax.f32 %v1804, %v1825
      %v1853 = vmax.f32 %v1805, %v1827
      %v1854 = vmax.f32 %v1806, %v1829
      %v1855 = vmax.f32 %v1807, %v1831
      %v1856 = vmax.f32 %v1808, %v1833
      %v1857 = vmax.f32 %v1809, %v1835
      %v1858 = vmax.f32 %v1810, %v1837
      %v1859 = vmax.f32 %v1811, %v1839
      %v1860 = vmax.f32 %v1812, %v1841
      %v1861 = vmax.f32 %v1813, %v1843
      %v1862 = vmax.f32 %v1814, %v1845
      %v1863 = vmax.f32 %v1815, %v1847
      %v1864 = vsub.f32 %v1800, %v1848
      %v1865 = vsub.f32 %v1801, %v1849
      %v1866 = vsub.f32 %v1802, %v1850
      %v1867 = vsub.f32 %v1803, %v1851
      %v1868 = vsub.f32 %v1804, %v1852
      %v1869 = vsub.f32 %v1805, %v1853
      %v1870 = vsub.f32 %v1806, %v1854
      %v1871 = vsub.f32 %v1807, %v1855
      %v1872 = vsub.f32 %v1808, %v1856
      %v1873 = vsub.f32 %v1809, %v1857
      %v1874 = vsub.f32 %v1810, %v1858
      %v1875 = vsub.f32 %v1811, %v1859
      %v1876 = vsub.f32 %v1812, %v1860
      %v1877 = vsub.f32 %v1813, %v1861
      %v1878 = vsub.f32 %v1814, %v1862
      %v1879 = vsub.f32 %v1815, %v1863
      %v1880 = vmul.f32 %v1864, 1.442695
      %v1881 = vpow.pop %v1880
      %v1882 = vmul.f32 %v1865, 1.442695
      %v1883 = vpow.pop %v1882
      %v1884 = vmul.f32 %v1866, 1.442695
      %v1885 = vpow.pop %v1884
      %v1886 = vmul.f32 %v1867, 1.442695
      %v1887 = vpow.pop %v1886
      %v1888 = vmul.f32 %v1868, 1.442695
      %v1889 = vpow.pop %v1888
      %v1890 = vmul.f32 %v1869, 1.442695
      %v1891 = vpow.pop %v1890
      %v1892 = vmul.f32 %v1870, 1.442695
      %v1893 = vpow.pop %v1892
      %v1894 = vmul.f32 %v1871, 1.442695
      %v1895 = vpow.pop %v1894
      %v1896 = vmul.f32 %v1872, 1.442695
      %v1897 = vpow.pop %v1896
      %v1898 = vmul.f32 %v1873, 1.442695
      %v1899 = vpow.pop %v1898
      %v1900 = vmul.f32 %v1874, 1.442695
      %v1901 = vpow.pop %v1900
      %v1902 = vmul.f32 %v1875, 1.442695
      %v1903 = vpow.pop %v1902
      %v1904 = vmul.f32 %v1876, 1.442695
      %v1905 = vpow.pop %v1904
      %v1906 = vmul.f32 %v1877, 1.442695
      %v1907 = vpow.pop %v1906
      %v1908 = vmul.f32 %v1878, 1.442695
      %v1909 = vpow.pop %v1908
      %v1910 = vmul.f32 %v1879, 1.442695
      %v1911 = vpow.pop %v1910
      %1913 = vset.pattern.permute.xlu0 0
      %1914 = vperm.xlu0 %1913, %v1848
      %v1915 = vpop.permute.xlu0 %1914
      %1918 = vset.pattern.permute.xlu0 0
      %1919 = vperm.xlu0 %1918, %v1849
      %v1920 = vpop.permute.xlu0 %1919
      %1923 = vset.pattern.permute.xlu0 0
      %1924 = vperm.xlu0 %1923, %v1850
      %v1925 = vpop.permute.xlu0 %1924
      %1928 = vset.pattern.permute.xlu0 0
      %1929 = vperm.xlu0 %1928, %v1851
      %v1930 = vpop.permute.xlu0 %1929
      %1933 = vset.pattern.permute.xlu0 0
      %1934 = vperm.xlu0 %1933, %v1852
      %v1935 = vpop.permute.xlu0 %1934
      %1938 = vset.pattern.permute.xlu0 0
      %1939 = vperm.xlu0 %1938, %v1853
      %v1940 = vpop.permute.xlu0 %1939
      %1943 = vset.pattern.permute.xlu0 0
      %1944 = vperm.xlu0 %1943, %v1854
      %v1945 = vpop.permute.xlu0 %1944
      %1948 = vset.pattern.permute.xlu0 0
      %1949 = vperm.xlu0 %1948, %v1855
      %v1950 = vpop.permute.xlu0 %1949
      %1953 = vset.pattern.permute.xlu0 0
      %1954 = vperm.xlu0 %1953, %v1856
      %v1955 = vpop.permute.xlu0 %1954
      %1958 = vset.pattern.permute.xlu0 0
      %1959 = vperm.xlu0 %1958, %v1857
      %v1960 = vpop.permute.xlu0 %1959
      %1963 = vset.pattern.permute.xlu0 0
      %1964 = vperm.xlu0 %1963, %v1858
      %v1965 = vpop.permute.xlu0 %1964
      %1968 = vset.pattern.permute.xlu0 0
      %1969 = vperm.xlu0 %1968, %v1859
      %v1970 = vpop.permute.xlu0 %1969
      %1973 = vset.pattern.permute.xlu0 0
      %1974 = vperm.xlu0 %1973, %v1860
      %v1975 = vpop.permute.xlu0 %1974
      %1978 = vset.pattern.permute.xlu0 0
      %1979 = vperm.xlu0 %1978, %v1861
      %v1980 = vpop.permute.xlu0 %1979
      %1983 = vset.pattern.permute.xlu0 0
      %1984 = vperm.xlu0 %1983, %v1862
      %v1985 = vpop.permute.xlu0 %1984
      %1988 = vset.pattern.permute.xlu0 0
      %1989 = vperm.xlu0 %1988, %v1863
      %v1990 = vpop.permute.xlu0 %1989
      %v1992 = vsub.f32 %v1737, %v1915
      %v1993 = vsub.f32 %v1740, %v1920
      %v1994 = vsub.f32 %v1745, %v1925
      %v1995 = vsub.f32 %v1748, %v1930
      %v1996 = vsub.f32 %v1753, %v1935
      %v1997 = vsub.f32 %v1756, %v1940
      %v1998 = vsub.f32 %v1761, %v1945
      %v1999 = vsub.f32 %v1764, %v1950
      %v2000 = vsub.f32 %v1769, %v1955
      %v2001 = vsub.f32 %v1772, %v1960
      %v2002 = vsub.f32 %v1777, %v1965
      %v2003 = vsub.f32 %v1780, %v1970
      %v2004 = vsub.f32 %v1785, %v1975
      %v2005 = vsub.f32 %v1788, %v1980
      %v2006 = vsub.f32 %v1793, %v1985
      %v2007 = vsub.f32 %v1796, %v1990
      %v2008 = vmul.f32 %v1992, 1.442695
      %v2009 = vpow.pop %v2008
      %v2010 = vmul.f32 %v1993, 1.442695
      %v2011 = vpow.pop %v2010
      %v2012 = vmul.f32 %v1994, 1.442695
      %v2013 = vpow.pop %v2012
      %v2014 = vmul.f32 %v1995, 1.442695
      %v2015 = vpow.pop %v2014
      %v2016 = vmul.f32 %v1996, 1.442695
      %v2017 = vpow.pop %v2016
      %v2018 = vmul.f32 %v1997, 1.442695
      %v2019 = vpow.pop %v2018
      %v2020 = vmul.f32 %v1998, 1.442695
      %v2021 = vpow.pop %v2020
      %v2022 = vmul.f32 %v1999, 1.442695
      %v2023 = vpow.pop %v2022
      %v2024 = vmul.f32 %v2000, 1.442695
      %v2025 = vpow.pop %v2024
      %v2026 = vmul.f32 %v2001, 1.442695
      %v2027 = vpow.pop %v2026
      %v2028 = vmul.f32 %v2002, 1.442695
      %v2029 = vpow.pop %v2028
      %v2030 = vmul.f32 %v2003, 1.442695
      %v2031 = vpow.pop %v2030
      %v2032 = vmul.f32 %v2004, 1.442695
      %v2033 = vpow.pop %v2032
      %v2034 = vmul.f32 %v2005, 1.442695
      %v2035 = vpow.pop %v2034
      %v2036 = vmul.f32 %v2006, 1.442695
      %v2037 = vpow.pop %v2036
      %v2038 = vmul.f32 %v2007, 1.442695
      %v2039 = vpow.pop %v2038
      %s2040 = scalar_lea.vmem [#allocation4], 128
      %v2041 = vld [vmem:[%s2040] sm:$0xff]
      %v2042 = vld [vmem:[%s2040 + $0x8] sm:$0xff]
      %v2043 = vld [vmem:[%s2040 + $0x10] sm:$0xff]
      %v2044 = vld [vmem:[%s2040 + $0x18] sm:$0xff]
      %v2045 = vld [vmem:[%s2040 + $0x20] sm:$0xff]
      %v2046 = vld [vmem:[%s2040 + $0x28] sm:$0xff]
      %v2047 = vld [vmem:[%s2040 + $0x30] sm:$0xff]
      %v2048 = vld [vmem:[%s2040 + $0x38] sm:$0xff]
      %v2049 = vld [vmem:[%s2040 + $0x40] sm:$0xff]
      %v2050 = vld [vmem:[%s2040 + $0x48] sm:$0xff]
      %v2051 = vld [vmem:[%s2040 + $0x50] sm:$0xff]
      %v2052 = vld [vmem:[%s2040 + $0x58] sm:$0xff]
      %v2053 = vld [vmem:[%s2040 + $0x60] sm:$0xff]
      %v2054 = vld [vmem:[%s2040 + $0x68] sm:$0xff]
      %v2055 = vld [vmem:[%s2040 + $0x70] sm:$0xff]
      %v2056 = vld [vmem:[%s2040 + $0x78] sm:$0xff]
      %v2057 = vmul.f32 %v1881, %v2041
      %v2058 = vmul.f32 %v1883, %v2042
      %v2059 = vmul.f32 %v1885, %v2043
      %v2060 = vmul.f32 %v1887, %v2044
      %v2061 = vmul.f32 %v1889, %v2045
      %v2062 = vmul.f32 %v1891, %v2046
      %v2063 = vmul.f32 %v1893, %v2047
      %v2064 = vmul.f32 %v1895, %v2048
      %v2065 = vmul.f32 %v1897, %v2049
      %v2066 = vmul.f32 %v1899, %v2050
      %v2067 = vmul.f32 %v1901, %v2051
      %v2068 = vmul.f32 %v1903, %v2052
      %v2069 = vmul.f32 %v1905, %v2053
      %v2070 = vmul.f32 %v1907, %v2054
      %v2071 = vmul.f32 %v1909, %v2055
      %v2072 = vmul.f32 %v1911, %v2056
      %2073 = vadd.xlane.f32.xlu0 %v2009
      %v2074 = vpop.xlane.xlu0 %2073
      %2075 = vadd.xlane.f32.xlu0 %v2011
      %v2076 = vpop.xlane.xlu0 %2075
      %2077 = vadd.xlane.f32.xlu0 %v2013
      %v2078 = vpop.xlane.xlu0 %2077
      %2079 = vadd.xlane.f32.xlu0 %v2015
      %v2080 = vpop.xlane.xlu0 %2079
      %2081 = vadd.xlane.f32.xlu0 %v2017
      %v2082 = vpop.xlane.xlu0 %2081
      %2083 = vadd.xlane.f32.xlu0 %v2019
      %v2084 = vpop.xlane.xlu0 %2083
      %2085 = vadd.xlane.f32.xlu0 %v2021
      %v2086 = vpop.xlane.xlu0 %2085
      %2087 = vadd.xlane.f32.xlu0 %v2023
      %v2088 = vpop.xlane.xlu0 %2087
      %2089 = vadd.xlane.f32.xlu0 %v2025
      %v2090 = vpop.xlane.xlu0 %2089
      %2091 = vadd.xlane.f32.xlu0 %v2027
      %v2092 = vpop.xlane.xlu0 %2091
      %2093 = vadd.xlane.f32.xlu0 %v2029
      %v2094 = vpop.xlane.xlu0 %2093
      %2095 = vadd.xlane.f32.xlu0 %v2031
      %v2096 = vpop.xlane.xlu0 %2095
      %2097 = vadd.xlane.f32.xlu0 %v2033
      %v2098 = vpop.xlane.xlu0 %2097
      %2099 = vadd.xlane.f32.xlu0 %v2035
      %v2100 = vpop.xlane.xlu0 %2099
      %2101 = vadd.xlane.f32.xlu0 %v2037
      %v2102 = vpop.xlane.xlu0 %2101
      %2103 = vadd.xlane.f32.xlu0 %v2039
      %v2104 = vpop.xlane.xlu0 %2103
      %v2105 = vadd.f32 %v2057, %v2074
      %v2106 = vadd.f32 %v2058, %v2076
      %v2107 = vadd.f32 %v2059, %v2078
      %v2108 = vadd.f32 %v2060, %v2080
      %v2109 = vadd.f32 %v2061, %v2082
      %v2110 = vadd.f32 %v2062, %v2084
      %v2111 = vadd.f32 %v2063, %v2086
      %v2112 = vadd.f32 %v2064, %v2088
      %v2113 = vadd.f32 %v2065, %v2090
      %v2114 = vadd.f32 %v2066, %v2092
      %v2115 = vadd.f32 %v2067, %v2094
      %v2116 = vadd.f32 %v2068, %v2096
      %v2117 = vadd.f32 %v2069, %v2098
      %v2118 = vadd.f32 %v2070, %v2100
      %v2119 = vadd.f32 %v2071, %v2102
      %v2120 = vadd.f32 %v2072, %v2104
      %2121 = vst.msk [vmem:[%s2040] sm:$0xff] %vm1300, %v2105
      %2122 = vst.msk [vmem:[%s2040 + $0x8] sm:$0xff] %vm1300, %v2106
      %2123 = vst.msk [vmem:[%s2040 + $0x10] sm:$0xff] %vm1300, %v2107
      %2124 = vst.msk [vmem:[%s2040 + $0x18] sm:$0xff] %vm1300, %v2108
      %2125 = vst.msk [vmem:[%s2040 + $0x20] sm:$0xff] %vm1300, %v2109
      %2126 = vst.msk [vmem:[%s2040 + $0x28] sm:$0xff] %vm1300, %v2110
      %2127 = vst.msk [vmem:[%s2040 + $0x30] sm:$0xff] %vm1300, %v2111
      %2128 = vst.msk [vmem:[%s2040 + $0x38] sm:$0xff] %vm1300, %v2112
      %2129 = vst.msk [vmem:[%s2040 + $0x40] sm:$0xff] %vm1300, %v2113
      %2130 = vst.msk [vmem:[%s2040 + $0x48] sm:$0xff] %vm1300, %v2114
      %2131 = vst.msk [vmem:[%s2040 + $0x50] sm:$0xff] %vm1300, %v2115
      %2132 = vst.msk [vmem:[%s2040 + $0x58] sm:$0xff] %vm1300, %v2116
      %2133 = vst.msk [vmem:[%s2040 + $0x60] sm:$0xff] %vm1300, %v2117
      %2134 = vst.msk [vmem:[%s2040 + $0x68] sm:$0xff] %vm1300, %v2118
      %2135 = vst.msk [vmem:[%s2040 + $0x70] sm:$0xff] %vm1300, %v2119
      %2136 = vst.msk [vmem:[%s2040 + $0x78] sm:$0xff] %vm1300, %v2120
      %s2137 = scalar_lea.vmem [#allocation5], 128
      %v2138 = vld [vmem:[%s2137] sm:$0xff]
      %v2139 = vld [vmem:[%s2137 + $0x8] sm:$0xff]
      %v2140 = vld [vmem:[%s2137 + $0x10] sm:$0xff]
      %v2141 = vld [vmem:[%s2137 + $0x18] sm:$0xff]
      %v2142 = vld [vmem:[%s2137 + $0x20] sm:$0xff]
      %v2143 = vld [vmem:[%s2137 + $0x28] sm:$0xff]
      %v2144 = vld [vmem:[%s2137 + $0x30] sm:$0xff]
      %v2145 = vld [vmem:[%s2137 + $0x38] sm:$0xff]
      %v2146 = vld [vmem:[%s2137 + $0x40] sm:$0xff]
      %v2147 = vld [vmem:[%s2137 + $0x48] sm:$0xff]
      %v2148 = vld [vmem:[%s2137 + $0x50] sm:$0xff]
      %v2149 = vld [vmem:[%s2137 + $0x58] sm:$0xff]
      %v2150 = vld [vmem:[%s2137 + $0x60] sm:$0xff]
      %v2151 = vld [vmem:[%s2137 + $0x68] sm:$0xff]
      %v2152 = vld [vmem:[%s2137 + $0x70] sm:$0xff]
      %v2153 = vld [vmem:[%s2137 + $0x78] sm:$0xff]
      %2155 = vset.pattern.permute.xlu0 0
      %2156 = vperm.xlu0 %2155, %v1881
      %v2157 = vpop.permute.xlu0 %2156
      %2160 = vset.pattern.permute.xlu0 0
      %2161 = vperm.xlu0 %2160, %v1883
      %v2162 = vpop.permute.xlu0 %2161
      %2165 = vset.pattern.permute.xlu0 0
      %2166 = vperm.xlu0 %2165, %v1885
      %v2167 = vpop.permute.xlu0 %2166
      %2170 = vset.pattern.permute.xlu0 0
      %2171 = vperm.xlu0 %2170, %v1887
      %v2172 = vpop.permute.xlu0 %2171
      %2175 = vset.pattern.permute.xlu0 0
      %2176 = vperm.xlu0 %2175, %v1889
      %v2177 = vpop.permute.xlu0 %2176
      %2180 = vset.pattern.permute.xlu0 0
      %2181 = vperm.xlu0 %2180, %v1891
      %v2182 = vpop.permute.xlu0 %2181
      %2185 = vset.pattern.permute.xlu0 0
      %2186 = vperm.xlu0 %2185, %v1893
      %v2187 = vpop.permute.xlu0 %2186
      %2190 = vset.pattern.permute.xlu0 0
      %2191 = vperm.xlu0 %2190, %v1895
      %v2192 = vpop.permute.xlu0 %2191
      %2195 = vset.pattern.permute.xlu0 0
      %2196 = vperm.xlu0 %2195, %v1897
      %v2197 = vpop.permute.xlu0 %2196
      %2200 = vset.pattern.permute.xlu0 0
      %2201 = vperm.xlu0 %2200, %v1899
      %v2202 = vpop.permute.xlu0 %2201
      %2205 = vset.pattern.permute.xlu0 0
      %2206 = vperm.xlu0 %2205, %v1901
      %v2207 = vpop.permute.xlu0 %2206
      %2210 = vset.pattern.permute.xlu0 0
      %2211 = vperm.xlu0 %2210, %v1903
      %v2212 = vpop.permute.xlu0 %2211
      %2215 = vset.pattern.permute.xlu0 0
      %2216 = vperm.xlu0 %2215, %v1905
      %v2217 = vpop.permute.xlu0 %2216
      %2220 = vset.pattern.permute.xlu0 0
      %2221 = vperm.xlu0 %2220, %v1907
      %v2222 = vpop.permute.xlu0 %2221
      %2225 = vset.pattern.permute.xlu0 0
      %2226 = vperm.xlu0 %2225, %v1909
      %v2227 = vpop.permute.xlu0 %2226
      %2230 = vset.pattern.permute.xlu0 0
      %2231 = vperm.xlu0 %2230, %v1911
      %v2232 = vpop.permute.xlu0 %2231
      %v2234 = vmul.f32 %v2157, %v2138
      %v2235 = vmul.f32 %v2162, %v2139
      %v2236 = vmul.f32 %v2167, %v2140
      %v2237 = vmul.f32 %v2172, %v2141
      %v2238 = vmul.f32 %v2177, %v2142
      %v2239 = vmul.f32 %v2182, %v2143
      %v2240 = vmul.f32 %v2187, %v2144
      %v2241 = vmul.f32 %v2192, %v2145
      %v2242 = vmul.f32 %v2197, %v2146
      %v2243 = vmul.f32 %v2202, %v2147
      %v2244 = vmul.f32 %v2207, %v2148
      %v2245 = vmul.f32 %v2212, %v2149
      %v2246 = vmul.f32 %v2217, %v2150
      %v2247 = vmul.f32 %v2222, %v2151
      %v2248 = vmul.f32 %v2227, %v2152
      %v2249 = vmul.f32 %v2232, %v2153
      %v2250 = vpack.c.bf16 %v2011, %v2009
      %v2251 = vpack.c.bf16 %v2015, %v2013
      %v2252 = vpack.c.bf16 %v2019, %v2017
      %v2253 = vpack.c.bf16 %v2023, %v2021
      %v2254 = vpack.c.bf16 %v2027, %v2025
      %v2255 = vpack.c.bf16 %v2031, %v2029
      %v2256 = vpack.c.bf16 %v2035, %v2033
      %v2257 = vpack.c.bf16 %v2039, %v2037
      %2258 = vrot.lane.b32.xlu0 %v819, 116
      %v2259 = vpop.permute.xlu0 %2258
      %2260 = vrot.lane.b32.xlu0 %v820, 116
      %v2261 = vpop.permute.xlu0 %2260
      %2262 = vrot.lane.b32.xlu0 %v821, 116
      %v2263 = vpop.permute.xlu0 %2262
      %2264 = vrot.lane.b32.xlu0 %v822, 116
      %v2265 = vpop.permute.xlu0 %2264
      %2266 = vrot.lane.b32.xlu0 %v823, 116
      %v2267 = vpop.permute.xlu0 %2266
      %2268 = vrot.lane.b32.xlu0 %v824, 116
      %v2269 = vpop.permute.xlu0 %2268
      %2270 = vrot.lane.b32.xlu0 %v825, 116
      %v2271 = vpop.permute.xlu0 %2270
      %2272 = vrot.lane.b32.xlu0 %v826, 116
      %v2273 = vpop.permute.xlu0 %2272
      %2282 = vmatprep.subr.bf16.mxu0 0
      %2283 = vmatpush1.bf16.msra.mxu0 %v2259
      %2284 = vmatprep.subr.bf16.mxu0 0
      %2285 = vmatpush1.bf16.msra.mxu0 %v2261
      %2286 = vmatprep.subr.bf16.mxu0 0
      %2287 = vmatpush1.bf16.msra.mxu0 %v2263
      %2288 = vmatprep.subr.bf16.mxu0 0
      %2289 = vmatpush1.bf16.msra.mxu0 %v2265
      %2290 = vmatprep.subr.bf16.mxu0 0
      %2291 = vmatpush1.bf16.msra.mxu0 %v2267
      %2292 = vmatprep.subr.bf16.mxu0 0
      %2293 = vmatpush1.bf16.msra.mxu0 %v2269
      %2294 = vmatprep.subr.bf16.mxu0 0
      %2295 = vmatpush1.bf16.msra.mxu0 %v2271
      %2296 = vmatprep.subr.bf16.mxu0 0
      %2297 = vmatpush1.bf16.msra.mxu0 %v2273
      %2298 = vmatprep.subr.bf16.mxu0 0
      %2299 = vmatpush1.bf16.msra.mxu0 0
      %2300 = vmatprep.subr.bf16.mxu0 0
      %2301 = vmatpush1.bf16.msra.mxu0 0
      %2302 = vmatprep.subr.bf16.mxu0 0
      %2303 = vmatpush1.bf16.msra.mxu0 0
      %2304 = vmatprep.subr.bf16.mxu0 0
      %2305 = vmatpush1.bf16.msra.mxu0 0
      %2306 = vmatprep.subr.bf16.mxu0 0
      %2307 = vmatpush1.bf16.msra.mxu0 0
      %2308 = vmatprep.subr.bf16.mxu0 0
      %2309 = vmatpush1.bf16.msra.mxu0 0
      %2310 = vmatprep.subr.bf16.mxu0 0
      %2311 = vmatpush1.bf16.msra.mxu0 0
      %2312 = vmatprep.subr.bf16.mxu0 0
      %2313 = vmatpush1.bf16.msra.mxu0 0
      %2314 = vmatprep.mubr.bf16.mxu0 0
      %2315 = vmatmul.mubr.bf16.gmra.mrb[0].mxu0 %v2250
      %v2316 = vpop.f32.mrb[0].mxu0
      %v2317 = vadd.f32 0.0, %v2316
      %v2318 = vpop.f32.mrb[0].mxu0
      %v2319 = vpop.f32.mrb[0].mxu0
      %v2320 = vadd.f32 0.0, %v2319
      %v2321 = vpop.f32.mrb[0].mxu0
      %2322 = vmatprep.mubr.bf16.mxu0 0
      %2323 = vmatmul.mubr.bf16.gmra.mrb[0].mxu0 %v2251
      %v2324 = vpop.f32.mrb[0].mxu0
      %v2325 = vadd.f32 0.0, %v2324
      %v2326 = vpop.f32.mrb[0].mxu0
      %v2327 = vpop.f32.mrb[0].mxu0
      %v2328 = vadd.f32 0.0, %v2327
      %v2329 = vpop.f32.mrb[0].mxu0
      %2330 = vmatprep.mubr.bf16.mxu0 0
      %2331 = vmatmul.mubr.bf16.gmra.mrb[0].mxu0 %v2252
      %v2332 = vpop.f32.mrb[0].mxu0
      %v2333 = vadd.f32 0.0, %v2332
      %v2334 = vpop.f32.mrb[0].mxu0
      %v2335 = vpop.f32.mrb[0].mxu0
      %v2336 = vadd.f32 0.0, %v2335
      %v2337 = vpop.f32.mrb[0].mxu0
      %2338 = vmatprep.mubr.bf16.mxu0 0
      %2339 = vmatmul.mubr.bf16.gmra.mrb[0].mxu0 %v2253
      %v2340 = vpop.f32.mrb[0].mxu0
      %v2341 = vadd.f32 0.0, %v2340
      %v2342 = vpop.f32.mrb[0].mxu0
      %v2343 = vpop.f32.mrb[0].mxu0
      %v2344 = vadd.f32 0.0, %v2343
      %v2345 = vpop.f32.mrb[0].mxu0
      %2346 = vmatprep.mubr.bf16.mxu0 0
      %2347 = vmatmul.mubr.bf16.gmra.mrb[0].mxu0 %v2254
      %v2348 = vpop.f32.mrb[0].mxu0
      %v2349 = vadd.f32 0.0, %v2348
      %v2350 = vpop.f32.mrb[0].mxu0
      %v2351 = vpop.f32.mrb[0].mxu0
      %v2352 = vadd.f32 0.0, %v2351
      %v2353 = vpop.f32.mrb[0].mxu0
      %2354 = vmatprep.mubr.bf16.mxu0 0
      %2355 = vmatmul.mubr.bf16.gmra.mrb[0].mxu0 %v2255
      %v2356 = vpop.f32.mrb[0].mxu0
      %v2357 = vadd.f32 0.0, %v2356
      %v2358 = vpop.f32.mrb[0].mxu0
      %v2359 = vpop.f32.mrb[0].mxu0
      %v2360 = vadd.f32 0.0, %v2359
      %v2361 = vpop.f32.mrb[0].mxu0
      %2362 = vmatprep.mubr.bf16.mxu0 0
      %2363 = vmatmul.mubr.bf16.gmra.mrb[0].mxu0 %v2256
      %v2364 = vpop.f32.mrb[0].mxu0
      %v2365 = vadd.f32 0.0, %v2364
      %v2366 = vpop.f32.mrb[0].mxu0
      %v2367 = vpop.f32.mrb[0].mxu0
      %v2368 = vadd.f32 0.0, %v2367
      %v2369 = vpop.f32.mrb[0].mxu0
      %2370 = vmatprep.mubr.bf16.mxu0 0
      %2371 = vmatmul.mubr.bf16.gmra.mrb[0].mxu0 %v2257
      %v2372 = vpop.f32.mrb[0].mxu0
      %v2373 = vadd.f32 0.0, %v2372
      %v2374 = vpop.f32.mrb[0].mxu0
      %v2375 = vpop.f32.mrb[0].mxu0
      %v2376 = vadd.f32 0.0, %v2375
      %v2377 = vpop.f32.mrb[0].mxu0
      %2378 = vdwg.mxu0
      %v2379 = vadd.f32 %v2234, %v2317
      %v2380 = vadd.f32 %v2235, %v2320
      %v2381 = vadd.f32 %v2236, %v2325
      %v2382 = vadd.f32 %v2237, %v2328
      %v2383 = vadd.f32 %v2238, %v2333
      %v2384 = vadd.f32 %v2239, %v2336
      %v2385 = vadd.f32 %v2240, %v2341
      %v2386 = vadd.f32 %v2241, %v2344
      %v2387 = vadd.f32 %v2242, %v2349
      %v2388 = vadd.f32 %v2243, %v2352
      %v2389 = vadd.f32 %v2244, %v2357
      %v2390 = vadd.f32 %v2245, %v2360
      %v2391 = vadd.f32 %v2246, %v2365
      %v2392 = vadd.f32 %v2247, %v2368
      %v2393 = vadd.f32 %v2248, %v2373
      %v2394 = vadd.f32 %v2249, %v2376
      %2395 = vst.msk [vmem:[%s2137] sm:$0xff] %vm693, %v2379
      %2396 = vst.msk [vmem:[%s2137 + $0x8] sm:$0xff] %vm693, %v2380
      %2397 = vst.msk [vmem:[%s2137 + $0x10] sm:$0xff] %vm693, %v2381
      %2398 = vst.msk [vmem:[%s2137 + $0x18] sm:$0xff] %vm693, %v2382
      %2399 = vst.msk [vmem:[%s2137 + $0x20] sm:$0xff] %vm693, %v2383
      %2400 = vst.msk [vmem:[%s2137 + $0x28] sm:$0xff] %vm693, %v2384
      %2401 = vst.msk [vmem:[%s2137 + $0x30] sm:$0xff] %vm693, %v2385
      %2402 = vst.msk [vmem:[%s2137 + $0x38] sm:$0xff] %vm693, %v2386
      %2403 = vst.msk [vmem:[%s2137 + $0x40] sm:$0xff] %vm693, %v2387
      %2404 = vst.msk [vmem:[%s2137 + $0x48] sm:$0xff] %vm693, %v2388
      %2405 = vst.msk [vmem:[%s2137 + $0x50] sm:$0xff] %vm693, %v2389
      %2406 = vst.msk [vmem:[%s2137 + $0x58] sm:$0xff] %vm693, %v2390
      %2407 = vst.msk [vmem:[%s2137 + $0x60] sm:$0xff] %vm693, %v2391
      %2408 = vst.msk [vmem:[%s2137 + $0x68] sm:$0xff] %vm693, %v2392
      %2409 = vst.msk [vmem:[%s2137 + $0x70] sm:$0xff] %vm693, %v2393
      %2410 = vst.msk [vmem:[%s2137 + $0x78] sm:$0xff] %vm693, %v2394
      %2411 = vst.msk [vmem:[%s1799] sm:$0xff] %vm1300, %v1848
      %2412 = vst.msk [vmem:[%s1799 + $0x8] sm:$0xff] %vm1300, %v1849
      %2413 = vst.msk [vmem:[%s1799 + $0x10] sm:$0xff] %vm1300, %v1850
      %2414 = vst.msk [vmem:[%s1799 + $0x18] sm:$0xff] %vm1300, %v1851
      %2415 = vst.msk [vmem:[%s1799 + $0x20] sm:$0xff] %vm1300, %v1852
      %2416 = vst.msk [vmem:[%s1799 + $0x28] sm:$0xff] %vm1300, %v1853
      %2417 = vst.msk [vmem:[%s1799 + $0x30] sm:$0xff] %vm1300, %v1854
      %2418 = vst.msk [vmem:[%s1799 + $0x38] sm:$0xff] %vm1300, %v1855
      %2419 = vst.msk [vmem:[%s1799 + $0x40] sm:$0xff] %vm1300, %v1856
      %2420 = vst.msk [vmem:[%s1799 + $0x48] sm:$0xff] %vm1300, %v1857
      %2421 = vst.msk [vmem:[%s1799 + $0x50] sm:$0xff] %vm1300, %v1858
      %2422 = vst.msk [vmem:[%s1799 + $0x58] sm:$0xff] %vm1300, %v1859
      %2423 = vst.msk [vmem:[%s1799 + $0x60] sm:$0xff] %vm1300, %v1860
      %2424 = vst.msk [vmem:[%s1799 + $0x68] sm:$0xff] %vm1300, %v1861
      %2425 = vst.msk [vmem:[%s1799 + $0x70] sm:$0xff] %vm1300, %v1862
      %2426 = vst.msk [vmem:[%s1799 + $0x78] sm:$0xff] %vm1300, %v1863
      %p2427 = scmp.eq.s32.totalorder %s24, 1
      // Predicated region
      $region49: #{tpu_custom_call.1} parent=43 // pred_check
        %p2428 = pneg %p2427
      $region50: #{tpu_custom_call.1} parent=43 // pred_check_branch
        %2430 = sbr.rel (%p2428) target = $region52
      $region51: #{tpu_custom_call.1} parent=43 // pred_region
        %v2431 = vld [vmem:[#allocation4] sm:$0xff]
        %v2432 = vld [vmem:[#allocation4 + $0x8] sm:$0xff]
        %v2433 = vld [vmem:[#allocation4 + $0x10] sm:$0xff]
        %v2434 = vld [vmem:[#allocation4 + $0x18] sm:$0xff]
        %v2435 = vld [vmem:[#allocation4 + $0x20] sm:$0xff]
        %v2436 = vld [vmem:[#allocation4 + $0x28] sm:$0xff]
        %v2437 = vld [vmem:[#allocation4 + $0x30] sm:$0xff]
        %v2438 = vld [vmem:[#allocation4 + $0x38] sm:$0xff]
        %v2439 = vld [vmem:[#allocation4 + $0x40] sm:$0xff]
        %v2440 = vld [vmem:[#allocation4 + $0x48] sm:$0xff]
        %v2441 = vld [vmem:[#allocation4 + $0x50] sm:$0xff]
        %v2442 = vld [vmem:[#allocation4 + $0x58] sm:$0xff]
        %v2443 = vld [vmem:[#allocation4 + $0x60] sm:$0xff]
        %v2444 = vld [vmem:[#allocation4 + $0x68] sm:$0xff]
        %v2445 = vld [vmem:[#allocation4 + $0x70] sm:$0xff]
        %v2446 = vld [vmem:[#allocation4 + $0x78] sm:$0xff]
        %v2447 = vrcp.pop %v2431
        %v2448 = vrcp.pop %v2432
        %v2449 = vrcp.pop %v2433
        %v2450 = vrcp.pop %v2434
        %v2451 = vrcp.pop %v2435
        %v2452 = vrcp.pop %v2436
        %v2453 = vrcp.pop %v2437
        %v2454 = vrcp.pop %v2438
        %v2455 = vrcp.pop %v2439
        %v2456 = vrcp.pop %v2440
        %v2457 = vrcp.pop %v2441
        %v2458 = vrcp.pop %v2442
        %v2459 = vrcp.pop %v2443
        %v2460 = vrcp.pop %v2444
        %v2461 = vrcp.pop %v2445
        %v2462 = vrcp.pop %v2446
        %v2463 = vld [vmem:[#allocation5] sm:$0xff]
        %v2464 = vld [vmem:[#allocation5 + $0x8] sm:$0xff]
        %v2465 = vld [vmem:[#allocation5 + $0x10] sm:$0xff]
        %v2466 = vld [vmem:[#allocation5 + $0x18] sm:$0xff]
        %v2467 = vld [vmem:[#allocation5 + $0x20] sm:$0xff]
        %v2468 = vld [vmem:[#allocation5 + $0x28] sm:$0xff]
        %v2469 = vld [vmem:[#allocation5 + $0x30] sm:$0xff]
        %v2470 = vld [vmem:[#allocation5 + $0x38] sm:$0xff]
        %v2471 = vld [vmem:[#allocation5 + $0x40] sm:$0xff]
        %v2472 = vld [vmem:[#allocation5 + $0x48] sm:$0xff]
        %v2473 = vld [vmem:[#allocation5 + $0x50] sm:$0xff]
        %v2474 = vld [vmem:[#allocation5 + $0x58] sm:$0xff]
        %v2475 = vld [vmem:[#allocation5 + $0x60] sm:$0xff]
        %v2476 = vld [vmem:[#allocation5 + $0x68] sm:$0xff]
        %v2477 = vld [vmem:[#allocation5 + $0x70] sm:$0xff]
        %v2478 = vld [vmem:[#allocation5 + $0x78] sm:$0xff]
        %2480 = vset.pattern.permute.xlu0 0
        %2481 = vperm.xlu0 %2480, %v2447
        %v2482 = vpop.permute.xlu0 %2481
        %2485 = vset.pattern.permute.xlu0 0
        %2486 = vperm.xlu0 %2485, %v2448
        %v2487 = vpop.permute.xlu0 %2486
        %2490 = vset.pattern.permute.xlu0 0
        %2491 = vperm.xlu0 %2490, %v2449
        %v2492 = vpop.permute.xlu0 %2491
        %2495 = vset.pattern.permute.xlu0 0
        %2496 = vperm.xlu0 %2495, %v2450
        %v2497 = vpop.permute.xlu0 %2496
        %2500 = vset.pattern.permute.xlu0 0
        %2501 = vperm.xlu0 %2500, %v2451
        %v2502 = vpop.permute.xlu0 %2501
        %2505 = vset.pattern.permute.xlu0 0
        %2506 = vperm.xlu0 %2505, %v2452
        %v2507 = vpop.permute.xlu0 %2506
        %2510 = vset.pattern.permute.xlu0 0
        %2511 = vperm.xlu0 %2510, %v2453
        %v2512 = vpop.permute.xlu0 %2511
        %2515 = vset.pattern.permute.xlu0 0
        %2516 = vperm.xlu0 %2515, %v2454
        %v2517 = vpop.permute.xlu0 %2516
        %2520 = vset.pattern.permute.xlu0 0
        %2521 = vperm.xlu0 %2520, %v2455
        %v2522 = vpop.permute.xlu0 %2521
        %2525 = vset.pattern.permute.xlu0 0
        %2526 = vperm.xlu0 %2525, %v2456
        %v2527 = vpop.permute.xlu0 %2526
        %2530 = vset.pattern.permute.xlu0 0
        %2531 = vperm.xlu0 %2530, %v2457
        %v2532 = vpop.permute.xlu0 %2531
        %2535 = vset.pattern.permute.xlu0 0
        %2536 = vperm.xlu0 %2535, %v2458
        %v2537 = vpop.permute.xlu0 %2536
        %2540 = vset.pattern.permute.xlu0 0
        %2541 = vperm.xlu0 %2540, %v2459
        %v2542 = vpop.permute.xlu0 %2541
        %2545 = vset.pattern.permute.xlu0 0
        %2546 = vperm.xlu0 %2545, %v2460
        %v2547 = vpop.permute.xlu0 %2546
        %2550 = vset.pattern.permute.xlu0 0
        %2551 = vperm.xlu0 %2550, %v2461
        %v2552 = vpop.permute.xlu0 %2551
        %2555 = vset.pattern.permute.xlu0 0
        %2556 = vperm.xlu0 %2555, %v2462
        %v2557 = vpop.permute.xlu0 %2556
        %v2559 = vmul.f32 %v2463, %v2482
        %v2560 = vmul.f32 %v2464, %v2487
        %v2561 = vmul.f32 %v2465, %v2492
        %v2562 = vmul.f32 %v2466, %v2497
        %v2563 = vmul.f32 %v2467, %v2502
        %v2564 = vmul.f32 %v2468, %v2507
        %v2565 = vmul.f32 %v2469, %v2512
        %v2566 = vmul.f32 %v2470, %v2517
        %v2567 = vmul.f32 %v2471, %v2522
        %v2568 = vmul.f32 %v2472, %v2527
        %v2569 = vmul.f32 %v2473, %v2532
        %v2570 = vmul.f32 %v2474, %v2537
        %v2571 = vmul.f32 %v2475, %v2542
        %v2572 = vmul.f32 %v2476, %v2547
        %v2573 = vmul.f32 %v2477, %v2552
        %v2574 = vmul.f32 %v2478, %v2557
        %v2575 = vpack.c.bf16 %v2560, %v2559
        %v2576 = vpack.c.bf16 %v2562, %v2561
        %v2577 = vpack.c.bf16 %v2564, %v2563
        %v2578 = vpack.c.bf16 %v2566, %v2565
        %v2579 = vpack.c.bf16 %v2568, %v2567
        %v2580 = vpack.c.bf16 %v2570, %v2569
        %v2581 = vpack.c.bf16 %v2572, %v2571
        %v2582 = vpack.c.bf16 %v2574, %v2573
        %v2583 = vld [vmem:[%s4] sm:$0x3]
        %v2584 = vld [vmem:[%s2040] sm:$0xff]
        %v2585 = vld [vmem:[%s2040 + $0x8] sm:$0xff]
        %v2586 = vld [vmem:[%s2040 + $0x10] sm:$0xff]
        %v2587 = vld [vmem:[%s2040 + $0x18] sm:$0xff]
        %v2588 = vld [vmem:[%s2040 + $0x20] sm:$0xff]
        %v2589 = vld [vmem:[%s2040 + $0x28] sm:$0xff]
        %v2590 = vld [vmem:[%s2040 + $0x30] sm:$0xff]
        %v2591 = vld [vmem:[%s2040 + $0x38] sm:$0xff]
        %v2592 = vld [vmem:[%s2040 + $0x40] sm:$0xff]
        %v2593 = vld [vmem:[%s2040 + $0x48] sm:$0xff]
        %v2594 = vld [vmem:[%s2040 + $0x50] sm:$0xff]
        %v2595 = vld [vmem:[%s2040 + $0x58] sm:$0xff]
        %v2596 = vld [vmem:[%s2040 + $0x60] sm:$0xff]
        %v2597 = vld [vmem:[%s2040 + $0x68] sm:$0xff]
        %v2598 = vld [vmem:[%s2040 + $0x70] sm:$0xff]
        %v2599 = vld [vmem:[%s2040 + $0x78] sm:$0xff]
        %v2600 = vrcp.pop %v2584
        %v2601 = vrcp.pop %v2585
        %v2602 = vrcp.pop %v2586
        %v2603 = vrcp.pop %v2587
        %v2604 = vrcp.pop %v2588
        %v2605 = vrcp.pop %v2589
        %v2606 = vrcp.pop %v2590
        %v2607 = vrcp.pop %v2591
        %v2608 = vrcp.pop %v2592
        %v2609 = vrcp.pop %v2593
        %v2610 = vrcp.pop %v2594
        %v2611 = vrcp.pop %v2595
        %v2612 = vrcp.pop %v2596
        %v2613 = vrcp.pop %v2597
        %v2614 = vrcp.pop %v2598
        %v2615 = vrcp.pop %v2599
        %v2616 = vld [vmem:[%s2137] sm:$0xff]
        %v2617 = vld [vmem:[%s2137 + $0x8] sm:$0xff]
        %v2618 = vld [vmem:[%s2137 + $0x10] sm:$0xff]
        %v2619 = vld [vmem:[%s2137 + $0x18] sm:$0xff]
        %v2620 = vld [vmem:[%s2137 + $0x20] sm:$0xff]
        %v2621 = vld [vmem:[%s2137 + $0x28] sm:$0xff]
        %v2622 = vld [vmem:[%s2137 + $0x30] sm:$0xff]
        %v2623 = vld [vmem:[%s2137 + $0x38] sm:$0xff]
        %v2624 = vld [vmem:[%s2137 + $0x40] sm:$0xff]
        %v2625 = vld [vmem:[%s2137 + $0x48] sm:$0xff]
        %v2626 = vld [vmem:[%s2137 + $0x50] sm:$0xff]
        %v2627 = vld [vmem:[%s2137 + $0x58] sm:$0xff]
        %v2628 = vld [vmem:[%s2137 + $0x60] sm:$0xff]
        %v2629 = vld [vmem:[%s2137 + $0x68] sm:$0xff]
        %v2630 = vld [vmem:[%s2137 + $0x70] sm:$0xff]
        %v2631 = vld [vmem:[%s2137 + $0x78] sm:$0xff]
        %2633 = vset.pattern.permute.xlu0 0
        %2634 = vperm.xlu0 %2633, %v2600
        %v2635 = vpop.permute.xlu0 %2634
        %2638 = vset.pattern.permute.xlu0 0
        %2639 = vperm.xlu0 %2638, %v2601
        %v2640 = vpop.permute.xlu0 %2639
        %2643 = vset.pattern.permute.xlu0 0
        %2644 = vperm.xlu0 %2643, %v2602
        %v2645 = vpop.permute.xlu0 %2644
        %2648 = vset.pattern.permute.xlu0 0
        %2649 = vperm.xlu0 %2648, %v2603
        %v2650 = vpop.permute.xlu0 %2649
        %2653 = vset.pattern.permute.xlu0 0
        %2654 = vperm.xlu0 %2653, %v2604
        %v2655 = vpop.permute.xlu0 %2654
        %2658 = vset.pattern.permute.xlu0 0
        %2659 = vperm.xlu0 %2658, %v2605
        %v2660 = vpop.permute.xlu0 %2659
        %2663 = vset.pattern.permute.xlu0 0
        %2664 = vperm.xlu0 %2663, %v2606
        %v2665 = vpop.permute.xlu0 %2664
        %2668 = vset.pattern.permute.xlu0 0
        %2669 = vperm.xlu0 %2668, %v2607
        %v2670 = vpop.permute.xlu0 %2669
        %2673 = vset.pattern.permute.xlu0 0
        %2674 = vperm.xlu0 %2673, %v2608
        %v2675 = vpop.permute.xlu0 %2674
        %2678 = vset.pattern.permute.xlu0 0
        %2679 = vperm.xlu0 %2678, %v2609
        %v2680 = vpop.permute.xlu0 %2679
        %2683 = vset.pattern.permute.xlu0 0
        %2684 = vperm.xlu0 %2683, %v2610
        %v2685 = vpop.permute.xlu0 %2684
        %2688 = vset.pattern.permute.xlu0 0
        %2689 = vperm.xlu0 %2688, %v2611
        %v2690 = vpop.permute.xlu0 %2689
        %2693 = vset.pattern.permute.xlu0 0
        %2694 = vperm.xlu0 %2693, %v2612
        %v2695 = vpop.permute.xlu0 %2694
        %2698 = vset.pattern.permute.xlu0 0
        %2699 = vperm.xlu0 %2698, %v2613
        %v2700 = vpop.permute.xlu0 %2699
        %2703 = vset.pattern.permute.xlu0 0
        %2704 = vperm.xlu0 %2703, %v2614
        %v2705 = vpop.permute.xlu0 %2704
        %2708 = vset.pattern.permute.xlu0 0
        %2709 = vperm.xlu0 %2708, %v2615
        %v2710 = vpop.permute.xlu0 %2709
        %v2712 = vmul.f32 %v2616, %v2635
        %v2713 = vmul.f32 %v2617, %v2640
        %v2714 = vmul.f32 %v2618, %v2645
        %v2715 = vmul.f32 %v2619, %v2650
        %v2716 = vmul.f32 %v2620, %v2655
        %v2717 = vmul.f32 %v2621, %v2660
        %v2718 = vmul.f32 %v2622, %v2665
        %v2719 = vmul.f32 %v2623, %v2670
        %v2720 = vmul.f32 %v2624, %v2675
        %v2721 = vmul.f32 %v2625, %v2680
        %v2722 = vmul.f32 %v2626, %v2685
        %v2723 = vmul.f32 %v2627, %v2690
        %v2724 = vmul.f32 %v2628, %v2695
        %v2725 = vmul.f32 %v2629, %v2700
        %v2726 = vmul.f32 %v2630, %v2705
        %v2727 = vmul.f32 %v2631, %v2710
        %v2728 = vpack.c.bf16 %v2713, %v2712
        %v2729 = vpack.c.bf16 %v2715, %v2714
        %v2730 = vpack.c.bf16 %v2717, %v2716
        %v2731 = vpack.c.bf16 %v2719, %v2718
        %v2732 = vpack.c.bf16 %v2721, %v2720
        %v2733 = vpack.c.bf16 %v2723, %v2722
        %v2734 = vpack.c.bf16 %v2725, %v2724
        %v2735 = vpack.c.bf16 %v2727, %v2726
        %s2736 = scalar_lea.vmem %s4, 2
        %v2737 = vld [vmem:[%s2736] sm:$0x3]
        %v2739 = vsel %vm693, %v2728, 0
        %v2742 = vsel %vm693, %v2729, 0
        %v2745 = vsel %vm693, %v2730, 0
        %v2748 = vsel %vm693, %v2731, 0
        %v2751 = vsel %vm693, %v2732, 0
        %v2754 = vsel %vm693, %v2733, 0
        %v2757 = vsel %vm693, %v2734, 0
        %v2760 = vsel %vm693, %v2735, 0
        %v2763 = vsel %vm718, %v2737, 0
        %2765 = vmatprep.subr.bf16.mxu0 0
        %2766 = vmatpush1.bf16.msra.mxu0 %v2763
        %2767 = vmatprep.subr.bf16.mxu0 0
        %2768 = vmatpush1.bf16.msra.mxu0 0
        %2769 = vmatprep.subr.bf16.mxu0 0
        %2770 = vmatpush1.bf16.msra.mxu0 0
        %2771 = vmatprep.subr.bf16.mxu0 0
        %2772 = vmatpush1.bf16.msra.mxu0 0
        %2773 = vmatprep.subr.bf16.mxu0 0
        %2774 = vmatpush1.bf16.msra.mxu0 0
        %2775 = vmatprep.subr.bf16.mxu0 0
        %2776 = vmatpush1.bf16.msra.mxu0 0
        %2777 = vmatprep.subr.bf16.mxu0 0
        %2778 = vmatpush1.bf16.msra.mxu0 0
        %2779 = vmatprep.subr.bf16.mxu0 0
        %2780 = vmatpush1.bf16.msra.mxu0 0
        %2781 = vmatprep.subr.bf16.mxu0 0
        %2782 = vmatpush1.bf16.msra.mxu0 0
        %2783 = vmatprep.subr.bf16.mxu0 0
        %2784 = vmatpush1.bf16.msra.mxu0 0
        %2785 = vmatprep.subr.bf16.mxu0 0
        %2786 = vmatpush1.bf16.msra.mxu0 0
        %2787 = vmatprep.subr.bf16.mxu0 0
        %2788 = vmatpush1.bf16.msra.mxu0 0
        %2789 = vmatprep.subr.bf16.mxu0 0
        %2790 = vmatpush1.bf16.msra.mxu0 0
        %2791 = vmatprep.subr.bf16.mxu0 0
        %2792 = vmatpush1.bf16.msra.mxu0 0
        %2793 = vmatprep.subr.bf16.mxu0 0
        %2794 = vmatpush1.bf16.msra.mxu0 0
        %2795 = vmatprep.subr.bf16.mxu0 0
        %2796 = vmatpush1.bf16.msra.mxu0 0
        %2797 = vmatprep.mubr.bf16.mxu0 0
        %2798 = vmatmul.mubr.bf16.gmra.mrb[0].mxu0 %v2739
        %v2799 = vpop.f32.mrb[0].mxu0
        %v2800 = vadd.f32 0.0, %v2799
        %v2801 = vpop.f32.mrb[0].mxu0
        %v2802 = vpop.f32.mrb[0].mxu0
        %v2803 = vadd.f32 0.0, %v2802
        %v2804 = vpop.f32.mrb[0].mxu0
        %2805 = vmatprep.mubr.bf16.mxu0 0
        %2806 = vmatmul.mubr.bf16.gmra.mrb[0].mxu0 %v2742
        %v2807 = vpop.f32.mrb[0].mxu0
        %v2808 = vadd.f32 0.0, %v2807
        %v2809 = vpop.f32.mrb[0].mxu0
        %v2810 = vpop.f32.mrb[0].mxu0
        %v2811 = vadd.f32 0.0, %v2810
        %v2812 = vpop.f32.mrb[0].mxu0
        %2813 = vmatprep.mubr.bf16.mxu0 0
        %2814 = vmatmul.mubr.bf16.gmra.mrb[0].mxu0 %v2745
        %v2815 = vpop.f32.mrb[0].mxu0
        %v2816 = vadd.f32 0.0, %v2815
        %v2817 = vpop.f32.mrb[0].mxu0
        %v2818 = vpop.f32.mrb[0].mxu0
        %v2819 = vadd.f32 0.0, %v2818
        %v2820 = vpop.f32.mrb[0].mxu0
        %2821 = vmatprep.mubr.bf16.mxu0 0
        %2822 = vmatmul.mubr.bf16.gmra.mrb[0].mxu0 %v2748
        %v2823 = vpop.f32.mrb[0].mxu0
        %v2824 = vadd.f32 0.0, %v2823
        %v2825 = vpop.f32.mrb[0].mxu0
        %v2826 = vpop.f32.mrb[0].mxu0
        %v2827 = vadd.f32 0.0, %v2826
        %v2828 = vpop.f32.mrb[0].mxu0
        %2829 = vmatprep.mubr.bf16.mxu0 0
        %2830 = vmatmul.mubr.bf16.gmra.mrb[0].mxu0 %v2751
        %v2831 = vpop.f32.mrb[0].mxu0
        %v2832 = vadd.f32 0.0, %v2831
        %v2833 = vpop.f32.mrb[0].mxu0
        %v2834 = vpop.f32.mrb[0].mxu0
        %v2835 = vadd.f32 0.0, %v2834
        %v2836 = vpop.f32.mrb[0].mxu0
        %2837 = vmatprep.mubr.bf16.mxu0 0
        %2838 = vmatmul.mubr.bf16.gmra.mrb[0].mxu0 %v2754
        %v2839 = vpop.f32.mrb[0].mxu0
        %v2840 = vadd.f32 0.0, %v2839
        %v2841 = vpop.f32.mrb[0].mxu0
        %v2842 = vpop.f32.mrb[0].mxu0
        %v2843 = vadd.f32 0.0, %v2842
        %v2844 = vpop.f32.mrb[0].mxu0
        %2845 = vmatprep.mubr.bf16.mxu0 0
        %2846 = vmatmul.mubr.bf16.gmra.mrb[0].mxu0 %v2757
        %v2847 = vpop.f32.mrb[0].mxu0
        %v2848 = vadd.f32 0.0, %v2847
        %v2849 = vpop.f32.mrb[0].mxu0
        %v2850 = vpop.f32.mrb[0].mxu0
        %v2851 = vadd.f32 0.0, %v2850
        %v2852 = vpop.f32.mrb[0].mxu0
        %2853 = vmatprep.mubr.bf16.mxu0 0
        %2854 = vmatmul.mubr.bf16.gmra.mrb[0].mxu0 %v2760
        %v2855 = vpop.f32.mrb[0].mxu0
        %v2856 = vadd.f32 0.0, %v2855
        %v2857 = vpop.f32.mrb[0].mxu0
        %v2858 = vpop.f32.mrb[0].mxu0
        %v2859 = vadd.f32 0.0, %v2858
        %v2860 = vpop.f32.mrb[0].mxu0
        %2861 = vdwg.mxu0
        %v2863 = vsel %vm693, %v2575, 0
        %v2866 = vsel %vm693, %v2576, 0
        %v2869 = vsel %vm693, %v2577, 0
        %v2872 = vsel %vm693, %v2578, 0
        %v2875 = vsel %vm693, %v2579, 0
        %v2878 = vsel %vm693, %v2580, 0
        %v2881 = vsel %vm693, %v2581, 0
        %v2884 = vsel %vm693, %v2582, 0
        %v2887 = vsel %vm718, %v2583, 0
        %2889 = vmatprep.subr.bf16.mxu0 0
        %2890 = vmatpush1.bf16.msra.mxu0 %v2887
        %2891 = vmatprep.subr.bf16.mxu0 0
        %2892 = vmatpush1.bf16.msra.mxu0 0
        %2893 = vmatprep.subr.bf16.mxu0 0
        %2894 = vmatpush1.bf16.msra.mxu0 0
        %2895 = vmatprep.subr.bf16.mxu0 0
        %2896 = vmatpush1.bf16.msra.mxu0 0
        %2897 = vmatprep.subr.bf16.mxu0 0
        %2898 = vmatpush1.bf16.msra.mxu0 0
        %2899 = vmatprep.subr.bf16.mxu0 0
        %2900 = vmatpush1.bf16.msra.mxu0 0
        %2901 = vmatprep.subr.bf16.mxu0 0
        %2902 = vmatpush1.bf16.msra.mxu0 0
        %2903 = vmatprep.subr.bf16.mxu0 0
        %2904 = vmatpush1.bf16.msra.mxu0 0
        %2905 = vmatprep.subr.bf16.mxu0 0
        %2906 = vmatpush1.bf16.msra.mxu0 0
        %2907 = vmatprep.subr.bf16.mxu0 0
        %2908 = vmatpush1.bf16.msra.mxu0 0
        %2909 = vmatprep.subr.bf16.mxu0 0
        %2910 = vmatpush1.bf16.msra.mxu0 0
        %2911 = vmatprep.subr.bf16.mxu0 0
        %2912 = vmatpush1.bf16.msra.mxu0 0
        %2913 = vmatprep.subr.bf16.mxu0 0
        %2914 = vmatpush1.bf16.msra.mxu0 0
        %2915 = vmatprep.subr.bf16.mxu0 0
        %2916 = vmatpush1.bf16.msra.mxu0 0
        %2917 = vmatprep.subr.bf16.mxu0 0
        %2918 = vmatpush1.bf16.msra.mxu0 0
        %2919 = vmatprep.subr.bf16.mxu0 0
        %2920 = vmatpush1.bf16.msra.mxu0 0
        %2921 = vmatprep.mubr.bf16.mxu0 0
        %2922 = vmatmul.mubr.bf16.gmra.mrb[0].mxu0 %v2863
        %v2923 = vpop.f32.mrb[0].mxu0
        %v2924 = vadd.f32 %v2800, %v2923
        %v2925 = vpop.f32.mrb[0].mxu0
        %v2926 = vpop.f32.mrb[0].mxu0
        %v2927 = vadd.f32 %v2803, %v2926
        %v2928 = vpop.f32.mrb[0].mxu0
        %2929 = vmatprep.mubr.bf16.mxu0 0
        %2930 = vmatmul.mubr.bf16.gmra.mrb[0].mxu0 %v2866
        %v2931 = vpop.f32.mrb[0].mxu0
        %v2932 = vadd.f32 %v2808, %v2931
        %v2933 = vpop.f32.mrb[0].mxu0
        %v2934 = vpop.f32.mrb[0].mxu0
        %v2935 = vadd.f32 %v2811, %v2934
        %v2936 = vpop.f32.mrb[0].mxu0
        %2937 = vmatprep.mubr.bf16.mxu0 0
        %2938 = vmatmul.mubr.bf16.gmra.mrb[0].mxu0 %v2869
        %v2939 = vpop.f32.mrb[0].mxu0
        %v2940 = vadd.f32 %v2816, %v2939
        %v2941 = vpop.f32.mrb[0].mxu0
        %v2942 = vpop.f32.mrb[0].mxu0
        %v2943 = vadd.f32 %v2819, %v2942
        %v2944 = vpop.f32.mrb[0].mxu0
        %2945 = vmatprep.mubr.bf16.mxu0 0
        %2946 = vmatmul.mubr.bf16.gmra.mrb[0].mxu0 %v2872
        %v2947 = vpop.f32.mrb[0].mxu0
        %v2948 = vadd.f32 %v2824, %v2947
        %v2949 = vpop.f32.mrb[0].mxu0
        %v2950 = vpop.f32.mrb[0].mxu0
        %v2951 = vadd.f32 %v2827, %v2950
        %v2952 = vpop.f32.mrb[0].mxu0
        %2953 = vmatprep.mubr.bf16.mxu0 0
        %2954 = vmatmul.mubr.bf16.gmra.mrb[0].mxu0 %v2875
        %v2955 = vpop.f32.mrb[0].mxu0
        %v2956 = vadd.f32 %v2832, %v2955
        %v2957 = vpop.f32.mrb[0].mxu0
        %v2958 = vpop.f32.mrb[0].mxu0
        %v2959 = vadd.f32 %v2835, %v2958
        %v2960 = vpop.f32.mrb[0].mxu0
        %2961 = vmatprep.mubr.bf16.mxu0 0
        %2962 = vmatmul.mubr.bf16.gmra.mrb[0].mxu0 %v2878
        %v2963 = vpop.f32.mrb[0].mxu0
        %v2964 = vadd.f32 %v2840, %v2963
        %v2965 = vpop.f32.mrb[0].mxu0
        %v2966 = vpop.f32.mrb[0].mxu0
        %v2967 = vadd.f32 %v2843, %v2966
        %v2968 = vpop.f32.mrb[0].mxu0
        %2969 = vmatprep.mubr.bf16.mxu0 0
        %2970 = vmatmul.mubr.bf16.gmra.mrb[0].mxu0 %v2881
        %v2971 = vpop.f32.mrb[0].mxu0
        %v2972 = vadd.f32 %v2848, %v2971
        %v2973 = vpop.f32.mrb[0].mxu0
        %v2974 = vpop.f32.mrb[0].mxu0
        %v2975 = vadd.f32 %v2851, %v2974
        %v2976 = vpop.f32.mrb[0].mxu0
        %2977 = vmatprep.mubr.bf16.mxu0 0
        %2978 = vmatmul.mubr.bf16.gmra.mrb[0].mxu0 %v2884
        %v2979 = vpop.f32.mrb[0].mxu0
        %v2980 = vadd.f32 %v2856, %v2979
        %v2981 = vpop.f32.mrb[0].mxu0
        %v2982 = vpop.f32.mrb[0].mxu0
        %v2983 = vadd.f32 %v2859, %v2982
        %v2984 = vpop.f32.mrb[0].mxu0
        %2985 = vdwg.mxu0
        %v2986 = vld [vmem:[%s5] sm:$0x1]
        %v2988 = vlaneseq
        %v2989 = vshrl.u32 %v2988, 7
        %v2990 = vsub.s32 0, %v2989
        %v2991 = vrot.slane %v2986, %v2990
        %v2993 = vadd.f32 %v2924, %v2991
        %v2994 = vadd.f32 %v2927, %v2991
        %v2995 = vadd.f32 %v2932, %v2991
        %v2996 = vadd.f32 %v2935, %v2991
        %v2997 = vadd.f32 %v2940, %v2991
        %v2998 = vadd.f32 %v2943, %v2991
        %v2999 = vadd.f32 %v2948, %v2991
        %v3000 = vadd.f32 %v2951, %v2991
        %v3001 = vadd.f32 %v2956, %v2991
        %v3002 = vadd.f32 %v2959, %v2991
        %v3003 = vadd.f32 %v2964, %v2991
        %v3004 = vadd.f32 %v2967, %v2991
        %v3005 = vadd.f32 %v2972, %v2991
        %v3006 = vadd.f32 %v2975, %v2991
        %v3007 = vadd.f32 %v2980, %v2991
        %v3008 = vadd.f32 %v2983, %v2991
        %3009 = vst.msk [vmem:[%s332] sm:$0xff] %vm693, %v2993
        %3010 = vst.msk [vmem:[%s332 + $0x8] sm:$0xff] %vm693, %v2994
        %3011 = vst.msk [vmem:[%s332 + $0x10] sm:$0xff] %vm693, %v2995
        %3012 = vst.msk [vmem:[%s332 + $0x18] sm:$0xff] %vm693, %v2996
        %3013 = vst.msk [vmem:[%s332 + $0x20] sm:$0xff] %vm693, %v2997
        %3014 = vst.msk [vmem:[%s332 + $0x28] sm:$0xff] %vm693, %v2998
        %3015 = vst.msk [vmem:[%s332 + $0x30] sm:$0xff] %vm693, %v2999
        %3016 = vst.msk [vmem:[%s332 + $0x38] sm:$0xff] %vm693, %v3000
        %3017 = vst.msk [vmem:[%s332 + $0x40] sm:$0xff] %vm693, %v3001
        %3018 = vst.msk [vmem:[%s332 + $0x48] sm:$0xff] %vm693, %v3002
        %3019 = vst.msk [vmem:[%s332 + $0x50] sm:$0xff] %vm693, %v3003
        %3020 = vst.msk [vmem:[%s332 + $0x58] sm:$0xff] %vm693, %v3004
        %3021 = vst.msk [vmem:[%s332 + $0x60] sm:$0xff] %vm693, %v3005
        %3022 = vst.msk [vmem:[%s332 + $0x68] sm:$0xff] %vm693, %v3006
        %3023 = vst.msk [vmem:[%s332 + $0x70] sm:$0xff] %vm693, %v3007
        %3024 = vst.msk [vmem:[%s332 + $0x78] sm:$0xff] %vm693, %v3008
      $region52: #{tpu_custom_call.1} parent=43 // pred_fallthru
        _
      %s3025 = smul.u32 16, %s23
      %p3026 = scmp.lt.s32.totalorder %s22, 1
      %s3027 = scalar_select %p3026, %s22, 1
      %p3028 = scmp.lt.s32.totalorder %s3025, 31
      %s3029 = scalar_select %p3028, %s3025, 31
      %s3030 = smul.addr %s3027, 32
      %s3031 = sadd.s32 %s3029, %s3030
      %s3032 = smul.addr %s3031, 8
      %s3033 = scalar_lea.vmem %s6, %s3032
      // Predicated region
      $region53: #{tpu_custom_call.1} parent=43 // pred_check
        %p3034 = pneg %p196
      $region54: #{tpu_custom_call.1} parent=43 // pred_check_branch
        %3036 = sbr.rel (%p3034) target = $region56
      $region55: #{tpu_custom_call.1} parent=43 // pred_region
        %s3037 = smul.u32 16, %s23
      $region56: #{tpu_custom_call.1} parent=43 // pred_fallthru
        _
    $region44: #{tpu_custom_call.1} parent=5 // pred_fallthru
      _
    %p3038 = scmp.le.s32.totalorder 2, %s12
    // Predicated region
    $region57: #{tpu_custom_call.1} parent=5 // pred_check
      %p3039 = pneg %p3038
    $region58: #{tpu_custom_call.1} parent=5 // pred_check_branch
      %3041 = sbr.rel (%p3039) target = $region60
    $region59: #{tpu_custom_call.1} parent=5 // pred_region
      %s3042 = ssub.s32 %s12, 2
      // Predicated region
      $region61: #{tpu_custom_call.1} parent=59 // pred_check
        %p3043 = pneg %p202
      $region62: #{tpu_custom_call.1} parent=59 // pred_check_branch
        %3045 = sbr.rel (%p3043) target = $region64
      $region63: #{tpu_custom_call.1} parent=59 // pred_region
        %s3046 = smul.u32 16, %s26
        %p3047 = scmp.lt.s32.totalorder %s25, 1
        %s3048 = scalar_select %p3047, %s25, 1
        %p3049 = scmp.lt.s32.totalorder %s3046, 31
        %s3050 = scalar_select %p3049, %s3046, 31
        %s3051 = smul.addr %s3048, 32
        %s3052 = sadd.s32 %s3050, %s3051
        %s3053 = smul.addr %s3052, 8
        %s3054 = scalar_lea.vmem %s6, %s3053
      $region64: #{tpu_custom_call.1} parent=59 // pred_fallthru
        _
    $region60: #{tpu_custom_call.1} parent=5 // pred_fallthru
      _
  $region6: #{tpu_custom_call.1} parent=0 // loop_footer
    %s16 = sadd.s32 1, %s12
  $region7: #{tpu_custom_call.1} parent=0 // loop_footer_branch
    %11 = sbr.rel target = $region3
  $region8: #{tpu_custom_call.1} parent=0 // loop_exit
    _

</llo_original>
